<compile_context>
chip_gen: v7x
topology: tpu7x:2x2x1
jax: 0.10.0
libtpu: 0.0.40
codegen_flags: <defaults>
</compile_context>

<pallas_src>
import jax
import jax.numpy as jnp
from jax.experimental import pallas as pl
from jax.experimental.pallas import tpu as pltpu

LEAK = 0.2
BN_EPS = 0.8  # nn.BatchNorm1d(out_feat, 0.8) -> eps = 0.8


def _leaky_relu(x):
    return jnp.where(x > 0, x, LEAK * x)


def _side_layout(dims):
    """Offsets of the packed side-parameter array.

    Layout: b1 | b2 g2 be2 | b3 g3 be3 | b4 g4 be4 | b5
    Every chunk width is a multiple of 128 except possibly the last (b5),
    so all static slices are lane-aligned.
    """
    offs = {}
    o = 0

    def take(name, n):
        nonlocal o
        offs[name] = (o, n)
        o += n

    take("b1", dims[1])
    for li, d in zip((2, 3, 4), dims[2:5]):
        take(f"b{li}", d)
        take(f"g{li}", d)
        take(f"be{li}", d)
    take("b5", dims[5])
    return offs, o


def _build_kernel(dims):
    offs, _ = _side_layout(dims)

    def kernel(z_ref, w1_ref, w2_ref, w3_ref, w4_ref, w5_ref, side_ref, out_ref):
        def side(name):
            off, n = offs[name]
            return side_ref[:, off:off + n]            # (1, n) f32, static slice

        def linear(h, w_ref, bname):
            # bf16 x bf16 MXU matmul with f32 accumulation, f32 bias add.
            y = jnp.dot(h.astype(jnp.bfloat16), w_ref[...],
                        preferred_element_type=jnp.float32)
            return y + side(bname)

        def batchnorm(y, li):
            # Training-mode BatchNorm1d with batch (biased) statistics.
            # E[y^2] - mu^2 form: the two reductions are independent.
            inv_b = jnp.float32(1.0 / y.shape[0])
            s1 = jnp.sum(y, axis=0, keepdims=True)
            s2 = jnp.sum(y * y, axis=0, keepdims=True)
            mu = s1 * inv_b
            var = s2 * inv_b - mu * mu
            scale = side(f"g{li}") * jax.lax.rsqrt(var + BN_EPS)
            shift = side(f"be{li}") - mu * scale
            return y * scale + shift                   # single fused scale/shift

        h = z_ref[...].astype(jnp.float32)

        # block(latent, 128, normalize=False)
        h = _leaky_relu(linear(h, w1_ref, "b1"))
        # block(128, 256)
        h = _leaky_relu(batchnorm(linear(h, w2_ref, "b2"), 2))
        # block(256, 512)
        h = _leaky_relu(batchnorm(linear(h, w3_ref, "b3"), 3))
        # block(512, 1024)
        h = _leaky_relu(batchnorm(linear(h, w4_ref, "b4"), 4))
        # Linear(1024, C*H*W) + Tanh
        out_ref[...] = jnp.tanh(linear(h, w5_ref, "b5"))

    return kernel


def make_params(key, latent_dim, img_dim):
    """Deterministic init (PyTorch-shape-compatible, weights stored (in,out) bf16)."""
    dims = [latent_dim, 128, 256, 512, 1024, img_dim]
    offs, total = _side_layout(dims)

    params = {}
    side = jnp.zeros((1, total), jnp.float32)

    for li in range(5):
        fan_in, fan_out = dims[li], dims[li + 1]
        key, kw, kb = jax.random.split(key, 3)
        bound = 1.0 / jnp.sqrt(jnp.float32(fan_in))
        w = jax.random.uniform(kw, (fan_in, fan_out), jnp.float32, -bound, bound)
        b = jax.random.uniform(kb, (1, fan_out), jnp.float32, -bound, bound)
        params[f"w{li + 1}"] = w.astype(jnp.bfloat16)      # bf16 weights in HBM
        off, n = offs[f"b{li + 1}"]
        side = side.at[:, off:off + n].set(b)

    # BatchNorm affine params (PyTorch default init: weight=1, bias=0)
    for li, d in zip((2, 3, 4), (256, 512, 1024)):
        goff, gn = offs[f"g{li}"]
        side = side.at[:, goff:goff + gn].set(jnp.ones((1, d), jnp.float32))
        # beta stays 0 (already zero-initialized)

    params["side"] = side
    params["dims"] = dims
    return params


def generator_forward(z, params, img_shape):
    B = z.shape[0]
    C, H, W = img_shape
    img_dim = C * H * W
    dims = params["dims"]
    assert dims[0] == z.shape[1] and dims[5] == img_dim

    kernel = _build_kernel(dims)

    args = (
        z,
        params["w1"], params["w2"], params["w3"], params["w4"], params["w5"],
        params["side"],
    )

    # Size the VMEM limit from the actual footprint (weights + packed side
    # params + z + output), with headroom for activations / compiler scratch.
    in_bytes = sum(int(a.size) * a.dtype.itemsize for a in args)
    out_bytes = B * img_dim * 4
    need = in_bytes + out_bytes
    # Full-batch-in-VMEM path must fit a single v7x TensorCore (64 MiB).
    assert need + (8 << 20) <= (64 << 20), (
        "Generator full-batch path exceeds per-core VMEM; tile the batch "
        "(requires a two-pass BatchNorm stats/normalize split).")
    vmem_limit = int(min(max(2 * need + (4 << 20), 16 << 20), 64 << 20))

    vmem_spec = pl.BlockSpec(memory_space=pltpu.MemorySpace.VMEM)
    flat = pl.pallas_call(
        kernel,
        out_shape=jax.ShapeDtypeStruct((B, img_dim), jnp.float32),
        in_specs=[vmem_spec] * len(args),
        out_specs=vmem_spec,
        compiler_params=pltpu.CompilerParams(vmem_limit_bytes=vmem_limit),
    )(*args)

    return flat.reshape(B, C, H, W)


if __name__ == "__main__":
    # Small shapes consistent with the module's forward.
    batch = 8
    latent_dim = 32
    channels, img_size = 1, 16
    img_shape = (channels, img_size, img_size)

    key = jax.random.PRNGKey(0)
    key, kz = jax.random.split(key)
    z = jax.random.normal(kz, (batch, latent_dim), jnp.float32)

    params = make_params(key, latent_dim, channels * img_size * img_size)

    img = generator_forward(z, params, img_shape)
    jax.block_until_ready(img)

    assert img.shape == (batch, channels, img_size, img_size)
    assert img.dtype == jnp.float32
    assert bool(jnp.all(jnp.isfinite(img)))
    print("KERNEL_OK")
</pallas_src>

<mosaic_0001>
module attributes {stable_mosaic.version = 11 : i64} {
  func.func @kernel(%arg0: memref<8x32xf32, #tpu.memory_space<vmem>>, %arg1: memref<32x128xbf16, #tpu.memory_space<vmem>>, %arg2: memref<128x256xbf16, #tpu.memory_space<vmem>>, %arg3: memref<256x512xbf16, #tpu.memory_space<vmem>>, %arg4: memref<512x1024xbf16, #tpu.memory_space<vmem>>, %arg5: memref<1024x256xbf16, #tpu.memory_space<vmem>>, %arg6: memref<1x5760xf32, #tpu.memory_space<vmem>>, %arg7: memref<8x256xf32, #tpu.memory_space<vmem>>) attributes {dimension_semantics = [], scalar_prefetch = 0 : i64, scratch_operands = 0 : i64, tpu.core_type = #tpu.core_type<tc>} {
    %c0 = arith.constant 0 : index
    %c0_0 = arith.constant 0 : index
    %0 = vector.load %arg0[%c0, %c0_0] : memref<8x32xf32, #tpu.memory_space<vmem>>, vector<8x32xf32>
    %1 = arith.truncf %0 : vector<8x32xf32> to vector<8x32xbf16>
    %c0_1 = arith.constant 0 : index
    %c0_2 = arith.constant 0 : index
    %2 = vector.load %arg1[%c0_1, %c0_2] : memref<32x128xbf16, #tpu.memory_space<vmem>>, vector<32x128xbf16>
    %cst = arith.constant dense<0.000000e+00> : vector<8x128xf32>
    %3 = tpu.matmul %1, %2, %cst {dimension_numbers = #tpu.dot_dimension_numbers<[1], [0], [0], [1], [0, 0, 1, 1], [], []>} : vector<8x32xbf16>, vector<32x128xbf16>, vector<8x128xf32> -> vector<8x128xf32>
    %c0_3 = arith.constant 0 : index
    %c0_4 = arith.constant 0 : index
    %4 = vector.load %arg6[%c0_3, %c0_4] : memref<1x5760xf32, #tpu.memory_space<vmem>>, vector<1x128xf32>
    %5 = vector.broadcast %4 : vector<1x128xf32> to vector<8x128xf32>
    %6 = arith.addf %3, %5 : vector<8x128xf32>
    %cst_5 = arith.constant 0.000000e+00 : f32
    %7 = vector.broadcast %cst_5 : f32 to vector<8x128xf32>
    %8 = arith.cmpf ogt, %6, %7 : vector<8x128xf32>
    %cst_6 = arith.constant 2.000000e-01 : f32
    %9 = vector.broadcast %cst_6 : f32 to vector<8x128xf32>
    %10 = arith.mulf %9, %6 : vector<8x128xf32>
    %11 = arith.select %8, %6, %10 : vector<8x128xi1>, vector<8x128xf32>
    %12 = arith.truncf %11 : vector<8x128xf32> to vector<8x128xbf16>
    %c0_7 = arith.constant 0 : index
    %c0_8 = arith.constant 0 : index
    %13 = vector.load %arg2[%c0_7, %c0_8] : memref<128x256xbf16, #tpu.memory_space<vmem>>, vector<128x256xbf16>
    %cst_9 = arith.constant dense<0.000000e+00> : vector<8x256xf32>
    %14 = tpu.matmul %12, %13, %cst_9 {dimension_numbers = #tpu.dot_dimension_numbers<[1], [0], [0], [1], [0, 0, 1, 1], [], []>} : vector<8x128xbf16>, vector<128x256xbf16>, vector<8x256xf32> -> vector<8x256xf32>
    %c0_10 = arith.constant 0 : index
    %c128 = arith.constant 128 : index
    %15 = vector.load %arg6[%c0_10, %c128] : memref<1x5760xf32, #tpu.memory_space<vmem>>, vector<1x256xf32>
    %16 = vector.broadcast %15 : vector<1x256xf32> to vector<8x256xf32>
    %17 = arith.addf %14, %16 : vector<8x256xf32>
    %cst_11 = arith.constant dense<0.000000e+00> : vector<256xf32>
    %18 = vector.multi_reduction <add>, %17, %cst_11 [0] : vector<8x256xf32> to vector<256xf32>
    %19 = vector.shape_cast %18 : vector<256xf32> to vector<1x256xf32>
    %20 = arith.mulf %17, %17 : vector<8x256xf32>
    %cst_12 = arith.constant dense<0.000000e+00> : vector<256xf32>
    %21 = vector.multi_reduction <add>, %20, %cst_12 [0] : vector<8x256xf32> to vector<256xf32>
    %22 = vector.shape_cast %21 : vector<256xf32> to vector<1x256xf32>
    %cst_13 = arith.constant 1.250000e-01 : f32
    %23 = vector.broadcast %cst_13 : f32 to vector<1x256xf32>
    %24 = arith.mulf %19, %23 : vector<1x256xf32>
    %cst_14 = arith.constant 1.250000e-01 : f32
    %25 = vector.broadcast %cst_14 : f32 to vector<1x256xf32>
    %26 = arith.mulf %22, %25 : vector<1x256xf32>
    %27 = arith.mulf %24, %24 : vector<1x256xf32>
    %28 = arith.subf %26, %27 : vector<1x256xf32>
    %c0_15 = arith.constant 0 : index
    %c384 = arith.constant 384 : index
    %29 = vector.load %arg6[%c0_15, %c384] : memref<1x5760xf32, #tpu.memory_space<vmem>>, vector<1x256xf32>
    %cst_16 = arith.constant 8.000000e-01 : f32
    %30 = vector.broadcast %cst_16 : f32 to vector<1x256xf32>
    %31 = arith.addf %28, %30 : vector<1x256xf32>
    %32 = math.rsqrt %31 : vector<1x256xf32>
    %33 = arith.mulf %29, %32 : vector<1x256xf32>
    %c0_17 = arith.constant 0 : index
    %c640 = arith.constant 640 : index
    %34 = vector.load %arg6[%c0_17, %c640] : memref<1x5760xf32, #tpu.memory_space<vmem>>, vector<1x256xf32>
    %35 = arith.mulf %24, %33 : vector<1x256xf32>
    %36 = arith.subf %34, %35 : vector<1x256xf32>
    %37 = vector.broadcast %33 : vector<1x256xf32> to vector<8x256xf32>
    %38 = arith.mulf %17, %37 : vector<8x256xf32>
    %39 = vector.broadcast %36 : vector<1x256xf32> to vector<8x256xf32>
    %40 = arith.addf %38, %39 : vector<8x256xf32>
    %cst_18 = arith.constant 0.000000e+00 : f32
    %41 = vector.broadcast %cst_18 : f32 to vector<8x256xf32>
    %42 = arith.cmpf ogt, %40, %41 : vector<8x256xf32>
    %cst_19 = arith.constant 2.000000e-01 : f32
    %43 = vector.broadcast %cst_19 : f32 to vector<8x256xf32>
    %44 = arith.mulf %43, %40 : vector<8x256xf32>
    %45 = arith.select %42, %40, %44 : vector<8x256xi1>, vector<8x256xf32>
    %46 = arith.truncf %45 : vector<8x256xf32> to vector<8x256xbf16>
    %c0_20 = arith.constant 0 : index
    %c0_21 = arith.constant 0 : index
    %47 = vector.load %arg3[%c0_20, %c0_21] : memref<256x512xbf16, #tpu.memory_space<vmem>>, vector<256x512xbf16>
    %cst_22 = arith.constant dense<0.000000e+00> : vector<8x512xf32>
    %48 = tpu.matmul %46, %47, %cst_22 {dimension_numbers = #tpu.dot_dimension_numbers<[1], [0], [0], [1], [0, 0, 1, 1], [], []>} : vector<8x256xbf16>, vector<256x512xbf16>, vector<8x512xf32> -> vector<8x512xf32>
    %c0_23 = arith.constant 0 : index
    %c896 = arith.constant 896 : index
    %49 = vector.load %arg6[%c0_23, %c896] : memref<1x5760xf32, #tpu.memory_space<vmem>>, vector<1x512xf32>
    %50 = vector.broadcast %49 : vector<1x512xf32> to vector<8x512xf32>
    %51 = arith.addf %48, %50 : vector<8x512xf32>
    %cst_24 = arith.constant dense<0.000000e+00> : vector<512xf32>
    %52 = vector.multi_reduction <add>, %51, %cst_24 [0] : vector<8x512xf32> to vector<512xf32>
    %53 = vector.shape_cast %52 : vector<512xf32> to vector<1x512xf32>
    %54 = arith.mulf %51, %51 : vector<8x512xf32>
    %cst_25 = arith.constant dense<0.000000e+00> : vector<512xf32>
    %55 = vector.multi_reduction <add>, %54, %cst_25 [0] : vector<8x512xf32> to vector<512xf32>
    %56 = vector.shape_cast %55 : vector<512xf32> to vector<1x512xf32>
    %cst_26 = arith.constant 1.250000e-01 : f32
    %57 = vector.broadcast %cst_26 : f32 to vector<1x512xf32>
    %58 = arith.mulf %53, %57 : vector<1x512xf32>
    %cst_27 = arith.constant 1.250000e-01 : f32
    %59 = vector.broadcast %cst_27 : f32 to vector<1x512xf32>
    %60 = arith.mulf %56, %59 : vector<1x512xf32>
    %61 = arith.mulf %58, %58 : vector<1x512xf32>
    %62 = arith.subf %60, %61 : vector<1x512xf32>
    %c0_28 = arith.constant 0 : index
    %c1408 = arith.constant 1408 : index
    %63 = vector.load %arg6[%c0_28, %c1408] : memref<1x5760xf32, #tpu.memory_space<vmem>>, vector<1x512xf32>
    %cst_29 = arith.constant 8.000000e-01 : f32
    %64 = vector.broadcast %cst_29 : f32 to vector<1x512xf32>
    %65 = arith.addf %62, %64 : vector<1x512xf32>
    %66 = math.rsqrt %65 : vector<1x512xf32>
    %67 = arith.mulf %63, %66 : vector<1x512xf32>
    %c0_30 = arith.constant 0 : index
    %c1920 = arith.constant 1920 : index
    %68 = vector.load %arg6[%c0_30, %c1920] : memref<1x5760xf32, #tpu.memory_space<vmem>>, vector<1x512xf32>
    %69 = arith.mulf %58, %67 : vector<1x512xf32>
    %70 = arith.subf %68, %69 : vector<1x512xf32>
    %71 = vector.broadcast %67 : vector<1x512xf32> to vector<8x512xf32>
    %72 = arith.mulf %51, %71 : vector<8x512xf32>
    %73 = vector.broadcast %70 : vector<1x512xf32> to vector<8x512xf32>
    %74 = arith.addf %72, %73 : vector<8x512xf32>
    %cst_31 = arith.constant 0.000000e+00 : f32
    %75 = vector.broadcast %cst_31 : f32 to vector<8x512xf32>
    %76 = arith.cmpf ogt, %74, %75 : vector<8x512xf32>
    %cst_32 = arith.constant 2.000000e-01 : f32
    %77 = vector.broadcast %cst_32 : f32 to vector<8x512xf32>
    %78 = arith.mulf %77, %74 : vector<8x512xf32>
    %79 = arith.select %76, %74, %78 : vector<8x512xi1>, vector<8x512xf32>
    %80 = arith.truncf %79 : vector<8x512xf32> to vector<8x512xbf16>
    %c0_33 = arith.constant 0 : index
    %c0_34 = arith.constant 0 : index
    %81 = vector.load %arg4[%c0_33, %c0_34] : memref<512x1024xbf16, #tpu.memory_space<vmem>>, vector<512x1024xbf16>
    %cst_35 = arith.constant dense<0.000000e+00> : vector<8x1024xf32>
    %82 = tpu.matmul %80, %81, %cst_35 {dimension_numbers = #tpu.dot_dimension_numbers<[1], [0], [0], [1], [0, 0, 1, 1], [], []>} : vector<8x512xbf16>, vector<512x1024xbf16>, vector<8x1024xf32> -> vector<8x1024xf32>
    %c0_36 = arith.constant 0 : index
    %c2432 = arith.constant 2432 : index
    %83 = vector.load %arg6[%c0_36, %c2432] : memref<1x5760xf32, #tpu.memory_space<vmem>>, vector<1x1024xf32>
    %84 = vector.broadcast %83 : vector<1x1024xf32> to vector<8x1024xf32>
    %85 = arith.addf %82, %84 : vector<8x1024xf32>
    %cst_37 = arith.constant dense<0.000000e+00> : vector<1024xf32>
    %86 = vector.multi_reduction <add>, %85, %cst_37 [0] : vector<8x1024xf32> to vector<1024xf32>
    %87 = vector.shape_cast %86 : vector<1024xf32> to vector<1x1024xf32>
    %88 = arith.mulf %85, %85 : vector<8x1024xf32>
    %cst_38 = arith.constant dense<0.000000e+00> : vector<1024xf32>
    %89 = vector.multi_reduction <add>, %88, %cst_38 [0] : vector<8x1024xf32> to vector<1024xf32>
    %90 = vector.shape_cast %89 : vector<1024xf32> to vector<1x1024xf32>
    %cst_39 = arith.constant 1.250000e-01 : f32
    %91 = vector.broadcast %cst_39 : f32 to vector<1x1024xf32>
    %92 = arith.mulf %87, %91 : vector<1x1024xf32>
    %cst_40 = arith.constant 1.250000e-01 : f32
    %93 = vector.broadcast %cst_40 : f32 to vector<1x1024xf32>
    %94 = arith.mulf %90, %93 : vector<1x1024xf32>
    %95 = arith.mulf %92, %92 : vector<1x1024xf32>
    %96 = arith.subf %94, %95 : vector<1x1024xf32>
    %c0_41 = arith.constant 0 : index
    %c3456 = arith.constant 3456 : index
    %97 = vector.load %arg6[%c0_41, %c3456] : memref<1x5760xf32, #tpu.memory_space<vmem>>, vector<1x1024xf32>
    %cst_42 = arith.constant 8.000000e-01 : f32
    %98 = vector.broadcast %cst_42 : f32 to vector<1x1024xf32>
    %99 = arith.addf %96, %98 : vector<1x1024xf32>
    %100 = math.rsqrt %99 : vector<1x1024xf32>
    %101 = arith.mulf %97, %100 : vector<1x1024xf32>
    %c0_43 = arith.constant 0 : index
    %c4480 = arith.constant 4480 : index
    %102 = vector.load %arg6[%c0_43, %c4480] : memref<1x5760xf32, #tpu.memory_space<vmem>>, vector<1x1024xf32>
    %103 = arith.mulf %92, %101 : vector<1x1024xf32>
    %104 = arith.subf %102, %103 : vector<1x1024xf32>
    %105 = vector.broadcast %101 : vector<1x1024xf32> to vector<8x1024xf32>
    %106 = arith.mulf %85, %105 : vector<8x1024xf32>
    %107 = vector.broadcast %104 : vector<1x1024xf32> to vector<8x1024xf32>
    %108 = arith.addf %106, %107 : vector<8x1024xf32>
    %cst_44 = arith.constant 0.000000e+00 : f32
    %109 = vector.broadcast %cst_44 : f32 to vector<8x1024xf32>
    %110 = arith.cmpf ogt, %108, %109 : vector<8x1024xf32>
    %cst_45 = arith.constant 2.000000e-01 : f32
    %111 = vector.broadcast %cst_45 : f32 to vector<8x1024xf32>
    %112 = arith.mulf %111, %108 : vector<8x1024xf32>
    %113 = arith.select %110, %108, %112 : vector<8x1024xi1>, vector<8x1024xf32>
    %114 = arith.truncf %113 : vector<8x1024xf32> to vector<8x1024xbf16>
    %c0_46 = arith.constant 0 : index
    %c0_47 = arith.constant 0 : index
    %115 = vector.load %arg5[%c0_46, %c0_47] : memref<1024x256xbf16, #tpu.memory_space<vmem>>, vector<1024x256xbf16>
    %cst_48 = arith.constant dense<0.000000e+00> : vector<8x256xf32>
    %116 = tpu.matmul %114, %115, %cst_48 {dimension_numbers = #tpu.dot_dimension_numbers<[1], [0], [0], [1], [0, 0, 1, 1], [], []>} : vector<8x1024xbf16>, vector<1024x256xbf16>, vector<8x256xf32> -> vector<8x256xf32>
    %c0_49 = arith.constant 0 : index
    %c5504 = arith.constant 5504 : index
    %117 = vector.load %arg6[%c0_49, %c5504] : memref<1x5760xf32, #tpu.memory_space<vmem>>, vector<1x256xf32>
    %118 = vector.broadcast %117 : vector<1x256xf32> to vector<8x256xf32>
    %119 = arith.addf %116, %118 : vector<8x256xf32>
    %120 = math.tanh %119 : vector<8x256xf32>
    %c0_50 = arith.constant 0 : index
    %c0_51 = arith.constant 0 : index
    %121 = vector.load %arg7[%c0_50, %c0_51] : memref<8x256xf32, #tpu.memory_space<vmem>>, vector<8x256xf32>
    tpu.vector_store %arg7[%c0_50, %c0_51], %120 {strides = array<i32>} : memref<8x256xf32, #tpu.memory_space<vmem>>, vector<8x256xf32>,
    return
  }
}

</mosaic_0001>

<llo_original>
// kernel: tpu_custom_call.1
$region0: #{tpu_custom_call.1}
  #allocation0 [shape = 'u32[]', space=smem, size = 0x4, offset = 0x4, fixed_abs, tag = 'smem constant byte address 0x4 - core index']
  #allocation1 [shape = 'u32[144,128]{1,0:T(1,128)}', space=vmem, size = 0x12000, scoped, tag = 'internal scratch']
  %s0 = inlined_call_operand.hbm [shape: f32[8,32], index: 0, kind: input, shape index: {}]
  %s1 = inlined_call_operand.hbm [shape: bf16[32,128], index: 1, kind: input, shape index: {}]
  %s2 = inlined_call_operand.hbm [shape: bf16[128,256], index: 2, kind: input, shape index: {}]
  %s3 = inlined_call_operand.hbm [shape: bf16[256,512], index: 3, kind: input, shape index: {}]
  %s4 = inlined_call_operand.hbm [shape: bf16[512,1024], index: 4, kind: input, shape index: {}]
  %s5 = inlined_call_operand.hbm [shape: bf16[1024,256], index: 5, kind: input, shape index: {}]
  %s6 = inlined_call_operand.hbm [shape: f32[1,5760], index: 6, kind: input, shape index: {}]
  %s7 = inlined_call_operand.hbm [shape: f32[8,256], index: 7, kind: output, shape index: {}]
  %s8 = sld [smem:[#allocation0]]
  $region66: #{tpu_custom_call.1} parent=0
    _
  %s10 = ssub.s32 1, %s8
  %s11 = scalar_select 0, %s10, %s8
  $region1: #{tpu_custom_call.1} parent=0
    #allocation2 [shape = 'u8[4096]{0}', space=vmem, size = 0x1000, scoped, tag = 'input window, operand 0, single buffered']
    #allocation3 [shape = 's32[1]{0}', space=sflag, size = 0x4, scoped, tag = 'scoped memory for tpu_custom_call.1']
    #allocation4 [shape = 's32[1]{0}', space=sflag, size = 0x4, scoped, tag = 'scoped memory for tpu_custom_call.1']
    #allocation5 [shape = 'u8[8192]{0}', space=vmem, size = 0x2000, scoped, tag = 'input window, operand 1, single buffered']
    #allocation6 [shape = 's32[1]{0}', space=sflag, size = 0x4, scoped, tag = 'scoped memory for tpu_custom_call.1']
    #allocation7 [shape = 'u8[65536]{0}', space=vmem, size = 0x10000, scoped, tag = 'input window, operand 2, single buffered']
    #allocation8 [shape = 'u8[262144]{0}', space=vmem, size = 0x40000, scoped, tag = 'input window, operand 3, single buffered']
    #allocation9 [shape = 's32[1]{0}', space=sflag, size = 0x4, scoped, tag = 'scoped memory for tpu_custom_call.1']
    #allocation10 [shape = 'u8[1048576]{0}', space=vmem, size = 0x100000, scoped, tag = 'input window, operand 4, single buffered']
    #allocation11 [shape = 'u8[524288]{0}', space=vmem, size = 0x80000, scoped, tag = 'input window, operand 5, single buffered']
    #allocation12 [shape = 's32[1]{0}', space=sflag, size = 0x4, scoped, tag = 'scoped memory for tpu_custom_call.1']
    #allocation13 [shape = 'u8[23040]{0}', space=vmem, size = 0x5c00, scoped, tag = 'input window, operand 6, single buffered']
    #allocation14 [shape = 'u8[8192]{0}', space=vmem, size = 0x2000, scoped, tag = 'output window, operand 0, single buffered']
    %12 = vsyncpa [#allocation3], 0
    %13 = vsyncpa [#allocation6], 0
    %14 = vsyncpa [#allocation9], 0
    %15 = vsyncpa [#allocation12], 0
    %16 = vsyncpa [#allocation4], 0
    // Predicated region
    $region2: #{tpu_custom_call.1} parent=1 // pred_check
      _
    $region3: #{tpu_custom_call.1} parent=1 // pred_check_branch
      %18 = sbr.rel (0) target = $region5
    $region4: #{tpu_custom_call.1} parent=1 // pred_region
      %s20 = ssub.s32 128, 128
      %21 = vsyncadd [#allocation3], %s20
      %s23 = sshll.u32 [#allocation2], 4
      %s24 = int_to_ptr.vmem [resolvable:$true] %s23
      %26 = dma.hbm_to_vmem [thread:$0]  %s0, 128, %s24, [#allocation3]
    $region5: #{tpu_custom_call.1} parent=1 // pred_fallthru
      _
    // Predicated region
    $region6: #{tpu_custom_call.1} parent=1 // pred_check
      _
    $region7: #{tpu_custom_call.1} parent=1 // pred_check_branch
      %28 = sbr.rel (0) target = $region9
    $region8: #{tpu_custom_call.1} parent=1 // pred_region
      %s30 = ssub.s32 256, 256
      %31 = vsyncadd [#allocation6], %s30
      %s32 = sshll.u32 [#allocation5], 4
      %s33 = int_to_ptr.vmem [resolvable:$true] %s32
      %38 = dma.hbm_to_vmem [thread:$0]  %s1, 256, %s33, [#allocation6], 64, 64, 4
    $region9: #{tpu_custom_call.1} parent=1 // pred_fallthru
      _
    // Predicated region
    $region10: #{tpu_custom_call.1} parent=1 // pred_check
      _
    $region11: #{tpu_custom_call.1} parent=1 // pred_check_branch
      %40 = sbr.rel (0) target = $region13
    $region12: #{tpu_custom_call.1} parent=1 // pred_region
      %s42 = ssub.s32 2048, 2048
      %43 = vsyncadd [#allocation6], %s42
      %s44 = sshll.u32 [#allocation7], 4
      %s45 = int_to_ptr.vmem [resolvable:$true] %s44
      %50 = dma.hbm_to_vmem [thread:$0]  %s2, 2048, %s45, [#allocation6], 128, 128, 8
    $region13: #{tpu_custom_call.1} parent=1 // pred_fallthru
      _
    // Predicated region
    $region14: #{tpu_custom_call.1} parent=1 // pred_check
      _
    $region15: #{tpu_custom_call.1} parent=1 // pred_check_branch
      %52 = sbr.rel (0) target = $region17
    $region16: #{tpu_custom_call.1} parent=1 // pred_region
      %s54 = ssub.s32 8192, 8192
      %55 = vsyncadd [#allocation9], %s54
      %s56 = sshll.u32 [#allocation8], 4
      %s57 = int_to_ptr.vmem [resolvable:$true] %s56
      %62 = dma.hbm_to_vmem [thread:$0]  %s3, 8192, %s57, [#allocation9], 256, 256, 16
    $region17: #{tpu_custom_call.1} parent=1 // pred_fallthru
      _
    // Predicated region
    $region18: #{tpu_custom_call.1} parent=1 // pred_check
      _
    $region19: #{tpu_custom_call.1} parent=1 // pred_check_branch
      %64 = sbr.rel (0) target = $region21
    $region20: #{tpu_custom_call.1} parent=1 // pred_region
      %s66 = ssub.s32 32768, 32768
      %67 = vsyncadd [#allocation9], %s66
      %s68 = sshll.u32 [#allocation10], 4
      %s69 = int_to_ptr.vmem [resolvable:$true] %s68
      %74 = dma.hbm_to_vmem [thread:$0]  %s4, 32768, %s69, [#allocation9], 512, 512, 32
    $region21: #{tpu_custom_call.1} parent=1 // pred_fallthru
      _
    // Predicated region
    $region22: #{tpu_custom_call.1} parent=1 // pred_check
      _
    $region23: #{tpu_custom_call.1} parent=1 // pred_check_branch
      %76 = sbr.rel (0) target = $region25
    $region24: #{tpu_custom_call.1} parent=1 // pred_region
      %s78 = ssub.s32 16384, 16384
      %79 = vsyncadd [#allocation12], %s78
      %s80 = sshll.u32 [#allocation11], 4
      %s81 = int_to_ptr.vmem [resolvable:$true] %s80
      %86 = dma.hbm_to_vmem [thread:$0]  %s5, 16384, %s81, [#allocation12], 128, 128, 8
    $region25: #{tpu_custom_call.1} parent=1 // pred_fallthru
      _
    // Predicated region
    $region26: #{tpu_custom_call.1} parent=1 // pred_check
      _
    $region27: #{tpu_custom_call.1} parent=1 // pred_check_branch
      %88 = sbr.rel (0) target = $region29
    $region28: #{tpu_custom_call.1} parent=1 // pred_region
      %s90 = ssub.s32 720, 720
      %91 = vsyncadd [#allocation12], %s90
      %s93 = sshll.u32 [#allocation13], 4
      %s94 = int_to_ptr.vmem [resolvable:$true] %s93
      %96 = dma.hbm_to_vmem [thread:$0]  %s6, 720, %s94, [#allocation12]
    $region29: #{tpu_custom_call.1} parent=1 // pred_fallthru
      _
    // Predicated region
    $region30: #{tpu_custom_call.1} parent=1 // pred_check
      _
    $region31: #{tpu_custom_call.1} parent=1 // pred_check_branch
      %98 = sbr.rel (0) target = $region33
    $region32: #{tpu_custom_call.1} parent=1 // pred_region
      %99 = dma.done [#allocation3], 128
    $region33: #{tpu_custom_call.1} parent=1 // pred_fallthru
      _
    // Predicated region
    $region34: #{tpu_custom_call.1} parent=1 // pred_check
      _
    $region35: #{tpu_custom_call.1} parent=1 // pred_check_branch
      %101 = sbr.rel (0) target = $region37
    $region36: #{tpu_custom_call.1} parent=1 // pred_region
      %102 = dma.done [#allocation6], 256
    $region37: #{tpu_custom_call.1} parent=1 // pred_fallthru
      _
    // Predicated region
    $region38: #{tpu_custom_call.1} parent=1 // pred_check
      _
    $region39: #{tpu_custom_call.1} parent=1 // pred_check_branch
      %104 = sbr.rel (0) target = $region41
    $region40: #{tpu_custom_call.1} parent=1 // pred_region
      %105 = dma.done [#allocation6], 2048
    $region41: #{tpu_custom_call.1} parent=1 // pred_fallthru
      _
    // Predicated region
    $region42: #{tpu_custom_call.1} parent=1 // pred_check
      _
    $region43: #{tpu_custom_call.1} parent=1 // pred_check_branch
      %107 = sbr.rel (0) target = $region45
    $region44: #{tpu_custom_call.1} parent=1 // pred_region
      %108 = dma.done [#allocation9], 8192
    $region45: #{tpu_custom_call.1} parent=1 // pred_fallthru
      _
    // Predicated region
    $region46: #{tpu_custom_call.1} parent=1 // pred_check
      _
    $region47: #{tpu_custom_call.1} parent=1 // pred_check_branch
      %110 = sbr.rel (0) target = $region49
    $region48: #{tpu_custom_call.1} parent=1 // pred_region
      %111 = dma.done [#allocation9], 32768
    $region49: #{tpu_custom_call.1} parent=1 // pred_fallthru
      _
    // Predicated region
    $region50: #{tpu_custom_call.1} parent=1 // pred_check
      _
    $region51: #{tpu_custom_call.1} parent=1 // pred_check_branch
      %113 = sbr.rel (0) target = $region53
    $region52: #{tpu_custom_call.1} parent=1 // pred_region
      %114 = dma.done [#allocation12], 16384
    $region53: #{tpu_custom_call.1} parent=1 // pred_fallthru
      _
    // Predicated region
    $region54: #{tpu_custom_call.1} parent=1 // pred_check
      _
    $region55: #{tpu_custom_call.1} parent=1 // pred_check_branch
      %116 = sbr.rel (0) target = $region57
    $region56: #{tpu_custom_call.1} parent=1 // pred_region
      %117 = dma.done [#allocation12], 720
    $region57: #{tpu_custom_call.1} parent=1 // pred_fallthru
      _
    %v119 = vld [vmem:[#allocation2] sm:$0xff]
    %v120 = vpack.c.bf16 %v119, %v119
    %v121 = vld [vmem:[#allocation5] sm:$0xf]
    %v122 = vld [vmem:[#allocation5 + $0x4] sm:$0xf]
    %v123 = vld [vmem:[#allocation5 + $0x8] sm:$0xf]
    %v124 = vld [vmem:[#allocation5 + $0xc] sm:$0xf]
    %v125 = vld [vmem:[#allocation13] sm:$0x1]
    %v127 = vlaneseq
    %v128 = vshrl.u32 %v127, 7
    %v129 = vsub.s32 0, %v128
    %v130 = vrot.slane %v125, %v129
    %v136 = vunpack.c.l.b16 %v121
    %v137 = vunpack.c.l.b16 %v122
    %v138 = vunpack.c.l.b16 %v123
    %v139 = vunpack.c.l.b16 %v124
    %v140 = vpack.c.b16 %v137, %v136
    %v141 = vpack.c.b16 %v139, %v138
    %vm144 = vcmask 261120
    %v146 = vsel %vm144, %v120, 0
    %148 = vmatprep.subr.bf16.mxu0 0
    %149 = vmatpush1.bf16.msra.mxu0 %v140
    %150 = vmatprep.subr.bf16.mxu0 0
    %151 = vmatpush1.bf16.msra.mxu0 %v141
    %152 = vmatprep.subr.bf16.mxu0 0
    %153 = vmatpush1.bf16.msra.mxu0 0
    %154 = vmatprep.subr.bf16.mxu0 0
    %155 = vmatpush1.bf16.msra.mxu0 0
    %156 = vmatprep.subr.bf16.mxu0 0
    %157 = vmatpush1.bf16.msra.mxu0 0
    %158 = vmatprep.subr.bf16.mxu0 0
    %159 = vmatpush1.bf16.msra.mxu0 0
    %160 = vmatprep.subr.bf16.mxu0 0
    %161 = vmatpush1.bf16.msra.mxu0 0
    %162 = vmatprep.subr.bf16.mxu0 0
    %163 = vmatpush1.bf16.msra.mxu0 0
    %164 = vmatprep.subr.bf16.mxu0 0
    %165 = vmatpush1.bf16.msra.mxu0 0
    %166 = vmatprep.subr.bf16.mxu0 0
    %167 = vmatpush1.bf16.msra.mxu0 0
    %168 = vmatprep.subr.bf16.mxu0 0
    %169 = vmatpush1.bf16.msra.mxu0 0
    %170 = vmatprep.subr.bf16.mxu0 0
    %171 = vmatpush1.bf16.msra.mxu0 0
    %172 = vmatprep.subr.bf16.mxu0 0
    %173 = vmatpush1.bf16.msra.mxu0 0
    %174 = vmatprep.subr.bf16.mxu0 0
    %175 = vmatpush1.bf16.msra.mxu0 0
    %176 = vmatprep.subr.bf16.mxu0 0
    %177 = vmatpush1.bf16.msra.mxu0 0
    %178 = vmatprep.subr.bf16.mxu0 0
    %179 = vmatpush1.bf16.msra.mxu0 0
    %180 = vmatprep.mubr.bf16.mxu0 0
    %181 = vmatmul.mubr.bf16.gmra.mrb[0].mxu0 %v146
    %v182 = vpop.f32.mrb[0].mxu0
    %v183 = vadd.f32 %v130, %v182
    %v184 = vpop.f32.mrb[0].mxu0
    %v185 = vpop.f32.mrb[0].mxu0
    %v186 = vpop.f32.mrb[0].mxu0
    %187 = vdwg.mxu0
    %vm188 = vcmp.gt.f32.partialorder %v183, 0.0
    %v189 = vmul.f32 %v183, 0.2
    %v190 = vsel %vm188, %v183, %v189
    %v191 = vpack.c.bf16 %v190, %v190
    %v192 = vld [vmem:[#allocation7] sm:$0xff]
    %v193 = vld [vmem:[#allocation7 + $0x8] sm:$0xff]
    %v194 = vld [vmem:[#allocation7 + $0x10] sm:$0xff]
    %v195 = vld [vmem:[#allocation7 + $0x18] sm:$0xff]
    %v196 = vld [vmem:[#allocation7 + $0x20] sm:$0xff]
    %v197 = vld [vmem:[#allocation7 + $0x28] sm:$0xff]
    %v198 = vld [vmem:[#allocation7 + $0x30] sm:$0xff]
    %v199 = vld [vmem:[#allocation7 + $0x38] sm:$0xff]
    %v200 = vld [vmem:[#allocation7 + $0x40] sm:$0xff]
    %v201 = vld [vmem:[#allocation7 + $0x48] sm:$0xff]
    %v202 = vld [vmem:[#allocation7 + $0x50] sm:$0xff]
    %v203 = vld [vmem:[#allocation7 + $0x58] sm:$0xff]
    %v204 = vld [vmem:[#allocation7 + $0x60] sm:$0xff]
    %v205 = vld [vmem:[#allocation7 + $0x68] sm:$0xff]
    %v206 = vld [vmem:[#allocation7 + $0x70] sm:$0xff]
    %v207 = vld [vmem:[#allocation7 + $0x78] sm:$0xff]
    %v208 = vld [vmem:[#allocation13 + $0x1] sm:$0x3]
    %v210 = vlaneseq
    %v211 = vshrl.u32 %v210, 7
    %v212 = vsub.s32 0, %v211
    %v213 = vrot.slane %v208, %v212
    %v214 = vlaneseq
    %v215 = vshrl.u32 %v214, 7
    %v216 = vsub.s32 1, %v215
    %v217 = vrot.slane %v208, %v216
    %v236 = vunpack.c.l.b16 %v192
    %v237 = vunpack.c.h.b16 %v192
    %v238 = vunpack.c.l.b16 %v193
    %v239 = vunpack.c.h.b16 %v193
    %v240 = vunpack.c.l.b16 %v194
    %v241 = vunpack.c.h.b16 %v194
    %v242 = vunpack.c.l.b16 %v195
    %v243 = vunpack.c.h.b16 %v195
    %v244 = vunpack.c.l.b16 %v196
    %v245 = vunpack.c.h.b16 %v196
    %v246 = vunpack.c.l.b16 %v197
    %v247 = vunpack.c.h.b16 %v197
    %v248 = vunpack.c.l.b16 %v198
    %v249 = vunpack.c.h.b16 %v198
    %v250 = vunpack.c.l.b16 %v199
    %v251 = vunpack.c.h.b16 %v199
    %v252 = vunpack.c.l.b16 %v200
    %v253 = vunpack.c.h.b16 %v200
    %v254 = vunpack.c.l.b16 %v201
    %v255 = vunpack.c.h.b16 %v201
    %v256 = vunpack.c.l.b16 %v202
    %v257 = vunpack.c.h.b16 %v202
    %v258 = vunpack.c.l.b16 %v203
    %v259 = vunpack.c.h.b16 %v203
    %v260 = vunpack.c.l.b16 %v204
    %v261 = vunpack.c.h.b16 %v204
    %v262 = vunpack.c.l.b16 %v205
    %v263 = vunpack.c.h.b16 %v205
    %v264 = vunpack.c.l.b16 %v206
    %v265 = vunpack.c.h.b16 %v206
    %v266 = vunpack.c.l.b16 %v207
    %v267 = vunpack.c.h.b16 %v207
    %v268 = vpack.c.b16 %v238, %v236
    %v269 = vpack.c.b16 %v239, %v237
    %v270 = vpack.c.b16 %v242, %v240
    %v271 = vpack.c.b16 %v243, %v241
    %v272 = vpack.c.b16 %v246, %v244
    %v273 = vpack.c.b16 %v247, %v245
    %v274 = vpack.c.b16 %v250, %v248
    %v275 = vpack.c.b16 %v251, %v249
    %v276 = vpack.c.b16 %v254, %v252
    %v277 = vpack.c.b16 %v255, %v253
    %v278 = vpack.c.b16 %v258, %v256
    %v279 = vpack.c.b16 %v259, %v257
    %v280 = vpack.c.b16 %v262, %v260
    %v281 = vpack.c.b16 %v263, %v261
    %v282 = vpack.c.b16 %v266, %v264
    %v283 = vpack.c.b16 %v267, %v265
    %300 = vmatprep.subr.bf16.mxu0 %v269
    %301 = vmatpush1.bf16.msra.mxu0 %v268
    %302 = vmatprep.subr.bf16.mxu0 %v271
    %303 = vmatpush1.bf16.msra.mxu0 %v270
    %304 = vmatprep.subr.bf16.mxu0 %v273
    %305 = vmatpush1.bf16.msra.mxu0 %v272
    %306 = vmatprep.subr.bf16.mxu0 %v275
    %307 = vmatpush1.bf16.msra.mxu0 %v274
    %308 = vmatprep.subr.bf16.mxu0 %v277
    %309 = vmatpush1.bf16.msra.mxu0 %v276
    %310 = vmatprep.subr.bf16.mxu0 %v279
    %311 = vmatpush1.bf16.msra.mxu0 %v278
    %312 = vmatprep.subr.bf16.mxu0 %v281
    %313 = vmatpush1.bf16.msra.mxu0 %v280
    %314 = vmatprep.subr.bf16.mxu0 %v283
    %315 = vmatpush1.bf16.msra.mxu0 %v282
    %316 = vmatprep.subr.bf16.mxu0 0
    %317 = vmatpush1.bf16.msra.mxu0 0
    %318 = vmatprep.subr.bf16.mxu0 0
    %319 = vmatpush1.bf16.msra.mxu0 0
    %320 = vmatprep.subr.bf16.mxu0 0
    %321 = vmatpush1.bf16.msra.mxu0 0
    %322 = vmatprep.subr.bf16.mxu0 0
    %323 = vmatpush1.bf16.msra.mxu0 0
    %324 = vmatprep.subr.bf16.mxu0 0
    %325 = vmatpush1.bf16.msra.mxu0 0
    %326 = vmatprep.subr.bf16.mxu0 0
    %327 = vmatpush1.bf16.msra.mxu0 0
    %328 = vmatprep.subr.bf16.mxu0 0
    %329 = vmatpush1.bf16.msra.mxu0 0
    %330 = vmatprep.subr.bf16.mxu0 0
    %331 = vmatpush1.bf16.msra.mxu0 0
    %332 = vmatprep.mubr.bf16.mxu0 0
    %333 = vmatmul.mubr.bf16.gmra.mrb[0].mxu0 %v191
    %v334 = vpop.f32.mrb[0].mxu0
    %v335 = vadd.f32 %v213, %v334
    %v336 = vpop.f32.mrb[0].mxu0
    %v337 = vadd.f32 %v217, %v336
    %v338 = vpop.f32.mrb[0].mxu0
    %v339 = vpop.f32.mrb[0].mxu0
    %340 = vdwg.mxu0
    %v341 = vrot.slane %v335, 4
    %v342 = vadd.f32 %v335, %v341
    %v343 = vrot.slane %v342, 2
    %v344 = vadd.f32 %v342, %v343
    %v345 = vrot.slane %v344, 1
    %v346 = vadd.f32 %v344, %v345
    %v347 = vrot.slane %v337, 4
    %v348 = vadd.f32 %v337, %v347
    %v349 = vrot.slane %v348, 2
    %v350 = vadd.f32 %v348, %v349
    %v351 = vrot.slane %v350, 1
    %v352 = vadd.f32 %v350, %v351
    %v353 = vmul.f32 %v335, %v335
    %v354 = vmul.f32 %v337, %v337
    %v355 = vrot.slane %v353, 4
    %v356 = vadd.f32 %v353, %v355
    %v357 = vrot.slane %v356, 2
    %v358 = vadd.f32 %v356, %v357
    %v359 = vrot.slane %v358, 1
    %v360 = vadd.f32 %v358, %v359
    %v361 = vrot.slane %v354, 4
    %v362 = vadd.f32 %v354, %v361
    %v363 = vrot.slane %v362, 2
    %v364 = vadd.f32 %v362, %v363
    %v365 = vrot.slane %v364, 1
    %v366 = vadd.f32 %v364, %v365
    %v367 = vmul.f32 %v346, 0.125
    %v368 = vmul.f32 %v352, 0.125
    %v369 = vmul.f32 %v360, 0.125
    %v370 = vmul.f32 %v366, 0.125
    %v371 = vmul.f32 %v367, %v367
    %v372 = vmul.f32 %v368, %v368
    %v373 = vsub.f32 %v369, %v371
    %v374 = vsub.f32 %v370, %v372
    %v375 = vld [vmem:[#allocation13 + $0x3] sm:$0x3]
    %v376 = vadd.f32 %v373, 0.8
    %v377 = vadd.f32 %v374, 0.8
    %v378 = vrsqrt.pop %v376
    %v379 = vrsqrt.pop %v377
    %v382 = vcombine.low %v378, %v379
    %v384 = vunpack.c.l.s4 1966171168
    %v385 = vunpack.c.0.s8 %v384
    %v386 = vlaneseq
    %v387 = vshrl.u32 %v386, 7
    %v388 = vsub.s32 %v385, %v387
    %v389 = vrot.slane %v382, %v388
    %v391 = vunpack.c.l.s4 1966171168
    %v392 = vunpack.c.0.s8 %v391
    %v393 = vlaneseq
    %v394 = vshrl.u32 %v393, 7
    %v395 = vsub.s32 %v392, %v394
    %v396 = vrot.slane %v389, %v395
    %v398 = vmul.f32 %v375, %v396
    %v399 = vld [vmem:[#allocation13 + $0x5] sm:$0x3]
    %v401 = vlaneseq
    %v402 = vshrl.u32 %v401, 7
    %v403 = vsub.s32 0, %v402
    %v404 = vrot.slane %v398, %v403
    %v405 = vlaneseq
    %v406 = vshrl.u32 %v405, 7
    %v407 = vsub.s32 1, %v406
    %v408 = vrot.slane %v398, %v407
    %v411 = vmul.f32 %v367, %v404
    %v412 = vmul.f32 %v368, %v408
    %v415 = vcombine.low %v411, %v412
    %v417 = vunpack.c.l.s4 1966171168
    %v418 = vunpack.c.0.s8 %v417
    %v419 = vlaneseq
    %v420 = vshrl.u32 %v419, 7
    %v421 = vsub.s32 %v418, %v420
    %v422 = vrot.slane %v415, %v421
    %v424 = vunpack.c.l.s4 1966171168
    %v425 = vunpack.c.0.s8 %v424
    %v426 = vlaneseq
    %v427 = vshrl.u32 %v426, 7
    %v428 = vsub.s32 %v425, %v427
    %v429 = vrot.slane %v422, %v428
    %v431 = vsub.f32 %v399, %v429
    %v432 = vmul.f32 %v335, %v404
    %v433 = vmul.f32 %v337, %v408
    %v435 = vlaneseq
    %v436 = vshrl.u32 %v435, 7
    %v437 = vsub.s32 0, %v436
    %v438 = vrot.slane %v431, %v437
    %v439 = vlaneseq
    %v440 = vshrl.u32 %v439, 7
    %v441 = vsub.s32 1, %v440
    %v442 = vrot.slane %v431, %v441
    %v445 = vadd.f32 %v432, %v438
    %v446 = vadd.f32 %v433, %v442
    %vm447 = vcmp.gt.f32.partialorder %v445, 0.0
    %vm448 = vcmp.gt.f32.partialorder %v446, 0.0
    %v449 = vmul.f32 %v445, 0.2
    %v450 = vmul.f32 %v446, 0.2
    %v451 = vsel %vm447, %v445, %v449
    %v452 = vsel %vm448, %v446, %v450
    %v453 = vpack.c.bf16 %v451, %v451
    %v454 = vpack.c.bf16 %v452, %v452
    %v455 = vld [vmem:[#allocation8] sm:$0xff]
    %v456 = vld [vmem:[#allocation8 + $0x8] sm:$0xff]
    %v457 = vld [vmem:[#allocation8 + $0x10] sm:$0xff]
    %v458 = vld [vmem:[#allocation8 + $0x18] sm:$0xff]
    %v459 = vld [vmem:[#allocation8 + $0x20] sm:$0xff]
    %v460 = vld [vmem:[#allocation8 + $0x28] sm:$0xff]
    %v461 = vld [vmem:[#allocation8 + $0x30] sm:$0xff]
    %v462 = vld [vmem:[#allocation8 + $0x38] sm:$0xff]
    %v463 = vld [vmem:[#allocation8 + $0x40] sm:$0xff]
    %v464 = vld [vmem:[#allocation8 + $0x48] sm:$0xff]
    %v465 = vld [vmem:[#allocation8 + $0x50] sm:$0xff]
    %v466 = vld [vmem:[#allocation8 + $0x58] sm:$0xff]
    %v467 = vld [vmem:[#allocation8 + $0x60] sm:$0xff]
    %v468 = vld [vmem:[#allocation8 + $0x68] sm:$0xff]
    %v469 = vld [vmem:[#allocation8 + $0x70] sm:$0xff]
    %v470 = vld [vmem:[#allocation8 + $0x78] sm:$0xff]
    %v471 = vld [vmem:[#allocation8 + $0x80] sm:$0xff]
    %v472 = vld [vmem:[#allocation8 + $0x88] sm:$0xff]
    %v473 = vld [vmem:[#allocation8 + $0x90] sm:$0xff]
    %v474 = vld [vmem:[#allocation8 + $0x98] sm:$0xff]
    %v475 = vld [vmem:[#allocation8 + $0xa0] sm:$0xff]
    %v476 = vld [vmem:[#allocation8 + $0xa8] sm:$0xff]
    %v477 = vld [vmem:[#allocation8 + $0xb0] sm:$0xff]
    %v478 = vld [vmem:[#allocation8 + $0xb8] sm:$0xff]
    %v479 = vld [vmem:[#allocation8 + $0xc0] sm:$0xff]
    %v480 = vld [vmem:[#allocation8 + $0xc8] sm:$0xff]
    %v481 = vld [vmem:[#allocation8 + $0xd0] sm:$0xff]
    %v482 = vld [vmem:[#allocation8 + $0xd8] sm:$0xff]
    %v483 = vld [vmem:[#allocation8 + $0xe0] sm:$0xff]
    %v484 = vld [vmem:[#allocation8 + $0xe8] sm:$0xff]
    %v485 = vld [vmem:[#allocation8 + $0xf0] sm:$0xff]
    %v486 = vld [vmem:[#allocation8 + $0xf8] sm:$0xff]
    %v487 = vld [vmem:[#allocation8 + $0x100] sm:$0xff]
    %v488 = vld [vmem:[#allocation8 + $0x108] sm:$0xff]
    %v489 = vld [vmem:[#allocation8 + $0x110] sm:$0xff]
    %v490 = vld [vmem:[#allocation8 + $0x118] sm:$0xff]
    %v491 = vld [vmem:[#allocation8 + $0x120] sm:$0xff]
    %v492 = vld [vmem:[#allocation8 + $0x128] sm:$0xff]
    %v493 = vld [vmem:[#allocation8 + $0x130] sm:$0xff]
    %v494 = vld [vmem:[#allocation8 + $0x138] sm:$0xff]
    %v495 = vld [vmem:[#allocation8 + $0x140] sm:$0xff]
    %v496 = vld [vmem:[#allocation8 + $0x148] sm:$0xff]
    %v497 = vld [vmem:[#allocation8 + $0x150] sm:$0xff]
    %v498 = vld [vmem:[#allocation8 + $0x158] sm:$0xff]
    %v499 = vld [vmem:[#allocation8 + $0x160] sm:$0xff]
    %v500 = vld [vmem:[#allocation8 + $0x168] sm:$0xff]
    %v501 = vld [vmem:[#allocation8 + $0x170] sm:$0xff]
    %v502 = vld [vmem:[#allocation8 + $0x178] sm:$0xff]
    %v503 = vld [vmem:[#allocation8 + $0x180] sm:$0xff]
    %v504 = vld [vmem:[#allocation8 + $0x188] sm:$0xff]
    %v505 = vld [vmem:[#allocation8 + $0x190] sm:$0xff]
    %v506 = vld [vmem:[#allocation8 + $0x198] sm:$0xff]
    %v507 = vld [vmem:[#allocation8 + $0x1a0] sm:$0xff]
    %v508 = vld [vmem:[#allocation8 + $0x1a8] sm:$0xff]
    %v509 = vld [vmem:[#allocation8 + $0x1b0] sm:$0xff]
    %v510 = vld [vmem:[#allocation8 + $0x1b8] sm:$0xff]
    %v511 = vld [vmem:[#allocation8 + $0x1c0] sm:$0xff]
    %v512 = vld [vmem:[#allocation8 + $0x1c8] sm:$0xff]
    %v513 = vld [vmem:[#allocation8 + $0x1d0] sm:$0xff]
    %v514 = vld [vmem:[#allocation8 + $0x1d8] sm:$0xff]
    %v515 = vld [vmem:[#allocation8 + $0x1e0] sm:$0xff]
    %v516 = vld [vmem:[#allocation8 + $0x1e8] sm:$0xff]
    %v517 = vld [vmem:[#allocation8 + $0x1f0] sm:$0xff]
    %v518 = vld [vmem:[#allocation8 + $0x1f8] sm:$0xff]
    %v519 = vld [vmem:[#allocation13 + $0x7] sm:$0xf]
    %v521 = vlaneseq
    %v522 = vshrl.u32 %v521, 7
    %v523 = vsub.s32 0, %v522
    %v524 = vrot.slane %v519, %v523
    %v525 = vlaneseq
    %v526 = vshrl.u32 %v525, 7
    %v527 = vsub.s32 1, %v526
    %v528 = vrot.slane %v519, %v527
    %v529 = vlaneseq
    %v530 = vshrl.u32 %v529, 7
    %v531 = vsub.s32 2, %v530
    %v532 = vrot.slane %v519, %v531
    %v533 = vlaneseq
    %v534 = vshrl.u32 %v533, 7
    %v535 = vsub.s32 3, %v534
    %v536 = vrot.slane %v519, %v535
    %v605 = vunpack.c.l.b16 %v455
    %v606 = vunpack.c.h.b16 %v455
    %v607 = vunpack.c.l.b16 %v456
    %v608 = vunpack.c.h.b16 %v456
    %v609 = vunpack.c.l.b16 %v457
    %v610 = vunpack.c.h.b16 %v457
    %v611 = vunpack.c.l.b16 %v458
    %v612 = vunpack.c.h.b16 %v458
    %v613 = vunpack.c.l.b16 %v459
    %v614 = vunpack.c.h.b16 %v459
    %v615 = vunpack.c.l.b16 %v460
    %v616 = vunpack.c.h.b16 %v460
    %v617 = vunpack.c.l.b16 %v461
    %v618 = vunpack.c.h.b16 %v461
    %v619 = vunpack.c.l.b16 %v462
    %v620 = vunpack.c.h.b16 %v462
    %v621 = vunpack.c.l.b16 %v463
    %v622 = vunpack.c.h.b16 %v463
    %v623 = vunpack.c.l.b16 %v464
    %v624 = vunpack.c.h.b16 %v464
    %v625 = vunpack.c.l.b16 %v465
    %v626 = vunpack.c.h.b16 %v465
    %v627 = vunpack.c.l.b16 %v466
    %v628 = vunpack.c.h.b16 %v466
    %v629 = vunpack.c.l.b16 %v467
    %v630 = vunpack.c.h.b16 %v467
    %v631 = vunpack.c.l.b16 %v468
    %v632 = vunpack.c.h.b16 %v468
    %v633 = vunpack.c.l.b16 %v469
    %v634 = vunpack.c.h.b16 %v469
    %v635 = vunpack.c.l.b16 %v470
    %v636 = vunpack.c.h.b16 %v470
    %v637 = vunpack.c.l.b16 %v471
    %v638 = vunpack.c.h.b16 %v471
    %v639 = vunpack.c.l.b16 %v472
    %v640 = vunpack.c.h.b16 %v472
    %v641 = vunpack.c.l.b16 %v473
    %v642 = vunpack.c.h.b16 %v473
    %v643 = vunpack.c.l.b16 %v474
    %v644 = vunpack.c.h.b16 %v474
    %v645 = vunpack.c.l.b16 %v475
    %v646 = vunpack.c.h.b16 %v475
    %v647 = vunpack.c.l.b16 %v476
    %v648 = vunpack.c.h.b16 %v476
    %v649 = vunpack.c.l.b16 %v477
    %v650 = vunpack.c.h.b16 %v477
    %v651 = vunpack.c.l.b16 %v478
    %v652 = vunpack.c.h.b16 %v478
    %v653 = vunpack.c.l.b16 %v479
    %v654 = vunpack.c.h.b16 %v479
    %v655 = vunpack.c.l.b16 %v480
    %v656 = vunpack.c.h.b16 %v480
    %v657 = vunpack.c.l.b16 %v481
    %v658 = vunpack.c.h.b16 %v481
    %v659 = vunpack.c.l.b16 %v482
    %v660 = vunpack.c.h.b16 %v482
    %v661 = vunpack.c.l.b16 %v483
    %v662 = vunpack.c.h.b16 %v483
    %v663 = vunpack.c.l.b16 %v484
    %v664 = vunpack.c.h.b16 %v484
    %v665 = vunpack.c.l.b16 %v485
    %v666 = vunpack.c.h.b16 %v485
    %v667 = vunpack.c.l.b16 %v486
    %v668 = vunpack.c.h.b16 %v486
    %v669 = vunpack.c.l.b16 %v487
    %v670 = vunpack.c.h.b16 %v487
    %v671 = vunpack.c.l.b16 %v488
    %v672 = vunpack.c.h.b16 %v488
    %v673 = vunpack.c.l.b16 %v489
    %v674 = vunpack.c.h.b16 %v489
    %v675 = vunpack.c.l.b16 %v490
    %v676 = vunpack.c.h.b16 %v490
    %v677 = vunpack.c.l.b16 %v491
    %v678 = vunpack.c.h.b16 %v491
    %v679 = vunpack.c.l.b16 %v492
    %v680 = vunpack.c.h.b16 %v492
    %v681 = vunpack.c.l.b16 %v493
    %v682 = vunpack.c.h.b16 %v493
    %v683 = vunpack.c.l.b16 %v494
    %v684 = vunpack.c.h.b16 %v494
    %v685 = vunpack.c.l.b16 %v495
    %v686 = vunpack.c.h.b16 %v495
    %v687 = vunpack.c.l.b16 %v496
    %v688 = vunpack.c.h.b16 %v496
    %v689 = vunpack.c.l.b16 %v497
    %v690 = vunpack.c.h.b16 %v497
    %v691 = vunpack.c.l.b16 %v498
    %v692 = vunpack.c.h.b16 %v498
    %v693 = vunpack.c.l.b16 %v499
    %v694 = vunpack.c.h.b16 %v499
    %v695 = vunpack.c.l.b16 %v500
    %v696 = vunpack.c.h.b16 %v500
    %v697 = vunpack.c.l.b16 %v501
    %v698 = vunpack.c.h.b16 %v501
    %v699 = vunpack.c.l.b16 %v502
    %v700 = vunpack.c.h.b16 %v502
    %v701 = vunpack.c.l.b16 %v503
    %v702 = vunpack.c.h.b16 %v503
    %v703 = vunpack.c.l.b16 %v504
    %v704 = vunpack.c.h.b16 %v504
    %v705 = vunpack.c.l.b16 %v505
    %v706 = vunpack.c.h.b16 %v505
    %v707 = vunpack.c.l.b16 %v506
    %v708 = vunpack.c.h.b16 %v506
    %v709 = vunpack.c.l.b16 %v507
    %v710 = vunpack.c.h.b16 %v507
    %v711 = vunpack.c.l.b16 %v508
    %v712 = vunpack.c.h.b16 %v508
    %v713 = vunpack.c.l.b16 %v509
    %v714 = vunpack.c.h.b16 %v509
    %v715 = vunpack.c.l.b16 %v510
    %v716 = vunpack.c.h.b16 %v510
    %v717 = vunpack.c.l.b16 %v511
    %v718 = vunpack.c.h.b16 %v511
    %v719 = vunpack.c.l.b16 %v512
    %v720 = vunpack.c.h.b16 %v512
    %v721 = vunpack.c.l.b16 %v513
    %v722 = vunpack.c.h.b16 %v513
    %v723 = vunpack.c.l.b16 %v514
    %v724 = vunpack.c.h.b16 %v514
    %v725 = vunpack.c.l.b16 %v515
    %v726 = vunpack.c.h.b16 %v515
    %v727 = vunpack.c.l.b16 %v516
    %v728 = vunpack.c.h.b16 %v516
    %v729 = vunpack.c.l.b16 %v517
    %v730 = vunpack.c.h.b16 %v517
    %v731 = vunpack.c.l.b16 %v518
    %v732 = vunpack.c.h.b16 %v518
    %v733 = vpack.c.b16 %v609, %v605
    %v734 = vpack.c.b16 %v610, %v606
    %v735 = vpack.c.b16 %v611, %v607
    %v736 = vpack.c.b16 %v612, %v608
    %v737 = vpack.c.b16 %v617, %v613
    %v738 = vpack.c.b16 %v618, %v614
    %v739 = vpack.c.b16 %v619, %v615
    %v740 = vpack.c.b16 %v620, %v616
    %v741 = vpack.c.b16 %v625, %v621
    %v742 = vpack.c.b16 %v626, %v622
    %v743 = vpack.c.b16 %v627, %v623
    %v744 = vpack.c.b16 %v628, %v624
    %v745 = vpack.c.b16 %v633, %v629
    %v746 = vpack.c.b16 %v634, %v630
    %v747 = vpack.c.b16 %v635, %v631
    %v748 = vpack.c.b16 %v636, %v632
    %v749 = vpack.c.b16 %v641, %v637
    %v750 = vpack.c.b16 %v642, %v638
    %v751 = vpack.c.b16 %v643, %v639
    %v752 = vpack.c.b16 %v644, %v640
    %v753 = vpack.c.b16 %v649, %v645
    %v754 = vpack.c.b16 %v650, %v646
    %v755 = vpack.c.b16 %v651, %v647
    %v756 = vpack.c.b16 %v652, %v648
    %v757 = vpack.c.b16 %v657, %v653
    %v758 = vpack.c.b16 %v658, %v654
    %v759 = vpack.c.b16 %v659, %v655
    %v760 = vpack.c.b16 %v660, %v656
    %v761 = vpack.c.b16 %v665, %v661
    %v762 = vpack.c.b16 %v666, %v662
    %v763 = vpack.c.b16 %v667, %v663
    %v764 = vpack.c.b16 %v668, %v664
    %v765 = vpack.c.b16 %v673, %v669
    %v766 = vpack.c.b16 %v674, %v670
    %v767 = vpack.c.b16 %v675, %v671
    %v768 = vpack.c.b16 %v676, %v672
    %v769 = vpack.c.b16 %v681, %v677
    %v770 = vpack.c.b16 %v682, %v678
    %v771 = vpack.c.b16 %v683, %v679
    %v772 = vpack.c.b16 %v684, %v680
    %v773 = vpack.c.b16 %v689, %v685
    %v774 = vpack.c.b16 %v690, %v686
    %v775 = vpack.c.b16 %v691, %v687
    %v776 = vpack.c.b16 %v692, %v688
    %v777 = vpack.c.b16 %v697, %v693
    %v778 = vpack.c.b16 %v698, %v694
    %v779 = vpack.c.b16 %v699, %v695
    %v780 = vpack.c.b16 %v700, %v696
    %v781 = vpack.c.b16 %v705, %v701
    %v782 = vpack.c.b16 %v706, %v702
    %v783 = vpack.c.b16 %v707, %v703
    %v784 = vpack.c.b16 %v708, %v704
    %v785 = vpack.c.b16 %v713, %v709
    %v786 = vpack.c.b16 %v714, %v710
    %v787 = vpack.c.b16 %v715, %v711
    %v788 = vpack.c.b16 %v716, %v712
    %v789 = vpack.c.b16 %v721, %v717
    %v790 = vpack.c.b16 %v722, %v718
    %v791 = vpack.c.b16 %v723, %v719
    %v792 = vpack.c.b16 %v724, %v720
    %v793 = vpack.c.b16 %v729, %v725
    %v794 = vpack.c.b16 %v730, %v726
    %v795 = vpack.c.b16 %v731, %v727
    %v796 = vpack.c.b16 %v732, %v728
    %861 = vmatprep.subr.bf16.mxu0 %v734
    %862 = vmatpush1.bf16.msra.mxu0 %v733
    %863 = vmatprep.subr.bf16.mxu0 %v738
    %864 = vmatpush1.bf16.msra.mxu0 %v737
    %865 = vmatprep.subr.bf16.mxu0 %v742
    %866 = vmatpush1.bf16.msra.mxu0 %v741
    %867 = vmatprep.subr.bf16.mxu0 %v746
    %868 = vmatpush1.bf16.msra.mxu0 %v745
    %869 = vmatprep.subr.bf16.mxu0 %v750
    %870 = vmatpush1.bf16.msra.mxu0 %v749
    %871 = vmatprep.subr.bf16.mxu0 %v754
    %872 = vmatpush1.bf16.msra.mxu0 %v753
    %873 = vmatprep.subr.bf16.mxu0 %v758
    %874 = vmatpush1.bf16.msra.mxu0 %v757
    %875 = vmatprep.subr.bf16.mxu0 %v762
    %876 = vmatpush1.bf16.msra.mxu0 %v761
    %877 = vmatprep.subr.bf16.mxu0 %v766
    %878 = vmatpush1.bf16.msra.mxu0 %v765
    %879 = vmatprep.subr.bf16.mxu0 %v770
    %880 = vmatpush1.bf16.msra.mxu0 %v769
    %881 = vmatprep.subr.bf16.mxu0 %v774
    %882 = vmatpush1.bf16.msra.mxu0 %v773
    %883 = vmatprep.subr.bf16.mxu0 %v778
    %884 = vmatpush1.bf16.msra.mxu0 %v777
    %885 = vmatprep.subr.bf16.mxu0 %v782
    %886 = vmatpush1.bf16.msra.mxu0 %v781
    %887 = vmatprep.subr.bf16.mxu0 %v786
    %888 = vmatpush1.bf16.msra.mxu0 %v785
    %889 = vmatprep.subr.bf16.mxu0 %v790
    %890 = vmatpush1.bf16.msra.mxu0 %v789
    %891 = vmatprep.subr.bf16.mxu0 %v794
    %892 = vmatpush1.bf16.msra.mxu0 %v793
    %893 = vmatprep.mubr.bf16.mxu0 %v454
    %894 = vmatmul.mubr.bf16.gmra.mrb[0].mxu0 %v453
    %v895 = vpop.f32.mrb[0].mxu0
    %v896 = vadd.f32 %v524, %v895
    %v897 = vpop.f32.mrb[0].mxu0
    %v898 = vadd.f32 %v528, %v897
    %v899 = vpop.f32.mrb[0].mxu0
    %v900 = vpop.f32.mrb[0].mxu0
    %901 = vdwg.mxu0
    %902 = vmatprep.subr.bf16.mxu0 %v736
    %903 = vmatpush1.bf16.msra.mxu0 %v735
    %904 = vmatprep.subr.bf16.mxu0 %v740
    %905 = vmatpush1.bf16.msra.mxu0 %v739
    %906 = vmatprep.subr.bf16.mxu0 %v744
    %907 = vmatpush1.bf16.msra.mxu0 %v743
    %908 = vmatprep.subr.bf16.mxu0 %v748
    %909 = vmatpush1.bf16.msra.mxu0 %v747
    %910 = vmatprep.subr.bf16.mxu0 %v752
    %911 = vmatpush1.bf16.msra.mxu0 %v751
    %912 = vmatprep.subr.bf16.mxu0 %v756
    %913 = vmatpush1.bf16.msra.mxu0 %v755
    %914 = vmatprep.subr.bf16.mxu0 %v760
    %915 = vmatpush1.bf16.msra.mxu0 %v759
    %916 = vmatprep.subr.bf16.mxu0 %v764
    %917 = vmatpush1.bf16.msra.mxu0 %v763
    %918 = vmatprep.subr.bf16.mxu0 %v768
    %919 = vmatpush1.bf16.msra.mxu0 %v767
    %920 = vmatprep.subr.bf16.mxu0 %v772
    %921 = vmatpush1.bf16.msra.mxu0 %v771
    %922 = vmatprep.subr.bf16.mxu0 %v776
    %923 = vmatpush1.bf16.msra.mxu0 %v775
    %924 = vmatprep.subr.bf16.mxu0 %v780
    %925 = vmatpush1.bf16.msra.mxu0 %v779
    %926 = vmatprep.subr.bf16.mxu0 %v784
    %927 = vmatpush1.bf16.msra.mxu0 %v783
    %928 = vmatprep.subr.bf16.mxu0 %v788
    %929 = vmatpush1.bf16.msra.mxu0 %v787
    %930 = vmatprep.subr.bf16.mxu0 %v792
    %931 = vmatpush1.bf16.msra.mxu0 %v791
    %932 = vmatprep.subr.bf16.mxu0 %v796
    %933 = vmatpush1.bf16.msra.mxu0 %v795
    %934 = vmatprep.mubr.bf16.mxu0 %v454
    %935 = vmatmul.mubr.bf16.gmra.mrb[0].mxu0 %v453
    %v936 = vpop.f32.mrb[0].mxu0
    %v937 = vadd.f32 %v532, %v936
    %v938 = vpop.f32.mrb[0].mxu0
    %v939 = vadd.f32 %v536, %v938
    %v940 = vpop.f32.mrb[0].mxu0
    %v941 = vpop.f32.mrb[0].mxu0
    %942 = vdwg.mxu0
    %v943 = vrot.slane %v896, 4
    %v944 = vadd.f32 %v896, %v943
    %v945 = vrot.slane %v944, 2
    %v946 = vadd.f32 %v944, %v945
    %v947 = vrot.slane %v946, 1
    %v948 = vadd.f32 %v946, %v947
    %v949 = vrot.slane %v898, 4
    %v950 = vadd.f32 %v898, %v949
    %v951 = vrot.slane %v950, 2
    %v952 = vadd.f32 %v950, %v951
    %v953 = vrot.slane %v952, 1
    %v954 = vadd.f32 %v952, %v953
    %v955 = vrot.slane %v937, 4
    %v956 = vadd.f32 %v937, %v955
    %v957 = vrot.slane %v956, 2
    %v958 = vadd.f32 %v956, %v957
    %v959 = vrot.slane %v958, 1
    %v960 = vadd.f32 %v958, %v959
    %v961 = vrot.slane %v939, 4
    %v962 = vadd.f32 %v939, %v961
    %v963 = vrot.slane %v962, 2
    %v964 = vadd.f32 %v962, %v963
    %v965 = vrot.slane %v964, 1
    %v966 = vadd.f32 %v964, %v965
    %v967 = vmul.f32 %v896, %v896
    %v968 = vmul.f32 %v898, %v898
    %v969 = vmul.f32 %v937, %v937
    %v970 = vmul.f32 %v939, %v939
    %v971 = vrot.slane %v967, 4
    %v972 = vadd.f32 %v967, %v971
    %v973 = vrot.slane %v972, 2
    %v974 = vadd.f32 %v972, %v973
    %v975 = vrot.slane %v974, 1
    %v976 = vadd.f32 %v974, %v975
    %v977 = vrot.slane %v968, 4
    %v978 = vadd.f32 %v968, %v977
    %v979 = vrot.slane %v978, 2
    %v980 = vadd.f32 %v978, %v979
    %v981 = vrot.slane %v980, 1
    %v982 = vadd.f32 %v980, %v981
    %v983 = vrot.slane %v969, 4
    %v984 = vadd.f32 %v969, %v983
    %v985 = vrot.slane %v984, 2
    %v986 = vadd.f32 %v984, %v985
    %v987 = vrot.slane %v986, 1
    %v988 = vadd.f32 %v986, %v987
    %v989 = vrot.slane %v970, 4
    %v990 = vadd.f32 %v970, %v989
    %v991 = vrot.slane %v990, 2
    %v992 = vadd.f32 %v990, %v991
    %v993 = vrot.slane %v992, 1
    %v994 = vadd.f32 %v992, %v993
    %v995 = vmul.f32 %v948, 0.125
    %v996 = vmul.f32 %v954, 0.125
    %v997 = vmul.f32 %v960, 0.125
    %v998 = vmul.f32 %v966, 0.125
    %v999 = vmul.f32 %v976, 0.125
    %v1000 = vmul.f32 %v982, 0.125
    %v1001 = vmul.f32 %v988, 0.125
    %v1002 = vmul.f32 %v994, 0.125
    %v1003 = vmul.f32 %v995, %v995
    %v1004 = vmul.f32 %v996, %v996
    %v1005 = vmul.f32 %v997, %v997
    %v1006 = vmul.f32 %v998, %v998
    %v1007 = vsub.f32 %v999, %v1003
    %v1008 = vsub.f32 %v1000, %v1004
    %v1009 = vsub.f32 %v1001, %v1005
    %v1010 = vsub.f32 %v1002, %v1006
    %v1011 = vld [vmem:[#allocation13 + $0xb] sm:$0xf]
    %v1012 = vadd.f32 %v1007, 0.8
    %v1013 = vadd.f32 %v1008, 0.8
    %v1014 = vadd.f32 %v1009, 0.8
    %v1015 = vadd.f32 %v1010, 0.8
    %v1016 = vrsqrt.pop %v1012
    %v1017 = vrsqrt.pop %v1013
    %v1018 = vrsqrt.pop %v1014
    %v1019 = vrsqrt.pop %v1015
    %v1024 = vcombine.low %v1016, %v1017
    %v1025 = vcombine.low %v1018, %v1019
    %v1027 = vunpack.c.l.s4 1966171168
    %v1028 = vunpack.c.0.s8 %v1027
    %v1029 = vlaneseq
    %v1030 = vshrl.u32 %v1029, 7
    %v1031 = vsub.s32 %v1028, %v1030
    %v1032 = vrot.slane %v1024, %v1031
    %v1034 = vunpack.c.l.s4 1966171168
    %v1035 = vunpack.c.0.s8 %v1034
    %v1036 = vlaneseq
    %v1037 = vshrl.u32 %v1036, 7
    %v1038 = vsub.s32 %v1035, %v1037
    %v1039 = vrot.slane %v1025, %v1038
    %v1040 = vcombine.low %v1032, %v1039
    %v1042 = vunpack.c.l.s4 1966171168
    %v1043 = vunpack.c.0.s8 %v1042
    %v1044 = vlaneseq
    %v1045 = vshrl.u32 %v1044, 7
    %v1046 = vsub.s32 %v1043, %v1045
    %v1047 = vrot.slane %v1040, %v1046
    %v1049 = vmul.f32 %v1011, %v1047
    %v1050 = vld [vmem:[#allocation13 + $0xf] sm:$0xf]
    %v1052 = vlaneseq
    %v1053 = vshrl.u32 %v1052, 7
    %v1054 = vsub.s32 0, %v1053
    %v1055 = vrot.slane %v1049, %v1054
    %v1056 = vlaneseq
    %v1057 = vshrl.u32 %v1056, 7
    %v1058 = vsub.s32 1, %v1057
    %v1059 = vrot.slane %v1049, %v1058
    %v1060 = vlaneseq
    %v1061 = vshrl.u32 %v1060, 7
    %v1062 = vsub.s32 2, %v1061
    %v1063 = vrot.slane %v1049, %v1062
    %v1064 = vlaneseq
    %v1065 = vshrl.u32 %v1064, 7
    %v1066 = vsub.s32 3, %v1065
    %v1067 = vrot.slane %v1049, %v1066
    %v1072 = vmul.f32 %v995, %v1055
    %v1073 = vmul.f32 %v996, %v1059
    %v1074 = vmul.f32 %v997, %v1063
    %v1075 = vmul.f32 %v998, %v1067
    %v1080 = vcombine.low %v1072, %v1073
    %v1081 = vcombine.low %v1074, %v1075
    %v1083 = vunpack.c.l.s4 1966171168
    %v1084 = vunpack.c.0.s8 %v1083
    %v1085 = vlaneseq
    %v1086 = vshrl.u32 %v1085, 7
    %v1087 = vsub.s32 %v1084, %v1086
    %v1088 = vrot.slane %v1080, %v1087
    %v1090 = vunpack.c.l.s4 1966171168
    %v1091 = vunpack.c.0.s8 %v1090
    %v1092 = vlaneseq
    %v1093 = vshrl.u32 %v1092, 7
    %v1094 = vsub.s32 %v1091, %v1093
    %v1095 = vrot.slane %v1081, %v1094
    %v1096 = vcombine.low %v1088, %v1095
    %v1098 = vunpack.c.l.s4 1966171168
    %v1099 = vunpack.c.0.s8 %v1098
    %v1100 = vlaneseq
    %v1101 = vshrl.u32 %v1100, 7
    %v1102 = vsub.s32 %v1099, %v1101
    %v1103 = vrot.slane %v1096, %v1102
    %v1105 = vsub.f32 %v1050, %v1103
    %v1106 = vmul.f32 %v896, %v1055
    %v1107 = vmul.f32 %v898, %v1059
    %v1108 = vmul.f32 %v937, %v1063
    %v1109 = vmul.f32 %v939, %v1067
    %v1111 = vlaneseq
    %v1112 = vshrl.u32 %v1111, 7
    %v1113 = vsub.s32 0, %v1112
    %v1114 = vrot.slane %v1105, %v1113
    %v1115 = vlaneseq
    %v1116 = vshrl.u32 %v1115, 7
    %v1117 = vsub.s32 1, %v1116
    %v1118 = vrot.slane %v1105, %v1117
    %v1119 = vlaneseq
    %v1120 = vshrl.u32 %v1119, 7
    %v1121 = vsub.s32 2, %v1120
    %v1122 = vrot.slane %v1105, %v1121
    %v1123 = vlaneseq
    %v1124 = vshrl.u32 %v1123, 7
    %v1125 = vsub.s32 3, %v1124
    %v1126 = vrot.slane %v1105, %v1125
    %v1131 = vadd.f32 %v1106, %v1114
    %v1132 = vadd.f32 %v1107, %v1118
    %v1133 = vadd.f32 %v1108, %v1122
    %v1134 = vadd.f32 %v1109, %v1126
    %vm1135 = vcmp.gt.f32.partialorder %v1131, 0.0
    %vm1136 = vcmp.gt.f32.partialorder %v1132, 0.0
    %vm1137 = vcmp.gt.f32.partialorder %v1133, 0.0
    %vm1138 = vcmp.gt.f32.partialorder %v1134, 0.0
    %v1139 = vmul.f32 %v1131, 0.2
    %v1140 = vmul.f32 %v1132, 0.2
    %v1141 = vmul.f32 %v1133, 0.2
    %v1142 = vmul.f32 %v1134, 0.2
    %v1143 = vsel %vm1135, %v1131, %v1139
    %v1144 = vsel %vm1136, %v1132, %v1140
    %v1145 = vsel %vm1137, %v1133, %v1141
    %v1146 = vsel %vm1138, %v1134, %v1142
    %v1147 = vpack.c.bf16 %v1143, %v1143
    %v1148 = vpack.c.bf16 %v1144, %v1144
    %v1149 = vpack.c.bf16 %v1145, %v1145
    %v1150 = vpack.c.bf16 %v1146, %v1146
    %v1151 = vld [vmem:[#allocation10] sm:$0xff]
    %v1152 = vld [vmem:[#allocation10 + $0x8] sm:$0xff]
    %v1153 = vld [vmem:[#allocation10 + $0x10] sm:$0xff]
    %v1154 = vld [vmem:[#allocation10 + $0x18] sm:$0xff]
    %v1155 = vld [vmem:[#allocation10 + $0x20] sm:$0xff]
    %v1156 = vld [vmem:[#allocation10 + $0x28] sm:$0xff]
    %v1157 = vld [vmem:[#allocation10 + $0x30] sm:$0xff]
    %v1158 = vld [vmem:[#allocation10 + $0x38] sm:$0xff]
    %v1159 = vld [vmem:[#allocation10 + $0x40] sm:$0xff]
    %v1160 = vld [vmem:[#allocation10 + $0x48] sm:$0xff]
    %v1161 = vld [vmem:[#allocation10 + $0x50] sm:$0xff]
    %v1162 = vld [vmem:[#allocation10 + $0x58] sm:$0xff]
    %v1163 = vld [vmem:[#allocation10 + $0x60] sm:$0xff]
    %v1164 = vld [vmem:[#allocation10 + $0x68] sm:$0xff]
    %v1165 = vld [vmem:[#allocation10 + $0x70] sm:$0xff]
    %v1166 = vld [vmem:[#allocation10 + $0x78] sm:$0xff]
    %v1167 = vld [vmem:[#allocation10 + $0x80] sm:$0xff]
    %v1168 = vld [vmem:[#allocation10 + $0x88] sm:$0xff]
    %v1169 = vld [vmem:[#allocation10 + $0x90] sm:$0xff]
    %v1170 = vld [vmem:[#allocation10 + $0x98] sm:$0xff]
    %v1171 = vld [vmem:[#allocation10 + $0xa0] sm:$0xff]
    %v1172 = vld [vmem:[#allocation10 + $0xa8] sm:$0xff]
    %v1173 = vld [vmem:[#allocation10 + $0xb0] sm:$0xff]
    %v1174 = vld [vmem:[#allocation10 + $0xb8] sm:$0xff]
    %v1175 = vld [vmem:[#allocation10 + $0xc0] sm:$0xff]
    %v1176 = vld [vmem:[#allocation10 + $0xc8] sm:$0xff]
    %v1177 = vld [vmem:[#allocation10 + $0xd0] sm:$0xff]
    %v1178 = vld [vmem:[#allocation10 + $0xd8] sm:$0xff]
    %v1179 = vld [vmem:[#allocation10 + $0xe0] sm:$0xff]
    %v1180 = vld [vmem:[#allocation10 + $0xe8] sm:$0xff]
    %v1181 = vld [vmem:[#allocation10 + $0xf0] sm:$0xff]
    %v1182 = vld [vmem:[#allocation10 + $0xf8] sm:$0xff]
    %v1183 = vld [vmem:[#allocation10 + $0x100] sm:$0xff]
    %v1184 = vld [vmem:[#allocation10 + $0x108] sm:$0xff]
    %v1185 = vld [vmem:[#allocation10 + $0x110] sm:$0xff]
    %v1186 = vld [vmem:[#allocation10 + $0x118] sm:$0xff]
    %v1187 = vld [vmem:[#allocation10 + $0x120] sm:$0xff]
    %v1188 = vld [vmem:[#allocation10 + $0x128] sm:$0xff]
    %v1189 = vld [vmem:[#allocation10 + $0x130] sm:$0xff]
    %v1190 = vld [vmem:[#allocation10 + $0x138] sm:$0xff]
    %v1191 = vld [vmem:[#allocation10 + $0x140] sm:$0xff]
    %v1192 = vld [vmem:[#allocation10 + $0x148] sm:$0xff]
    %v1193 = vld [vmem:[#allocation10 + $0x150] sm:$0xff]
    %v1194 = vld [vmem:[#allocation10 + $0x158] sm:$0xff]
    %v1195 = vld [vmem:[#allocation10 + $0x160] sm:$0xff]
    %v1196 = vld [vmem:[#allocation10 + $0x168] sm:$0xff]
    %v1197 = vld [vmem:[#allocation10 + $0x170] sm:$0xff]
    %v1198 = vld [vmem:[#allocation10 + $0x178] sm:$0xff]
    %v1199 = vld [vmem:[#allocation10 + $0x180] sm:$0xff]
    %v1200 = vld [vmem:[#allocation10 + $0x188] sm:$0xff]
    %v1201 = vld [vmem:[#allocation10 + $0x190] sm:$0xff]
    %v1202 = vld [vmem:[#allocation10 + $0x198] sm:$0xff]
    %v1203 = vld [vmem:[#allocation10 + $0x1a0] sm:$0xff]
    %v1204 = vld [vmem:[#allocation10 + $0x1a8] sm:$0xff]
    %v1205 = vld [vmem:[#allocation10 + $0x1b0] sm:$0xff]
    %v1206 = vld [vmem:[#allocation10 + $0x1b8] sm:$0xff]
    %v1207 = vld [vmem:[#allocation10 + $0x1c0] sm:$0xff]
    %v1208 = vld [vmem:[#allocation10 + $0x1c8] sm:$0xff]
    %v1209 = vld [vmem:[#allocation10 + $0x1d0] sm:$0xff]
    %v1210 = vld [vmem:[#allocation10 + $0x1d8] sm:$0xff]
    %v1211 = vld [vmem:[#allocation10 + $0x1e0] sm:$0xff]
    %v1212 = vld [vmem:[#allocation10 + $0x1e8] sm:$0xff]
    %v1213 = vld [vmem:[#allocation10 + $0x1f0] sm:$0xff]
    %v1214 = vld [vmem:[#allocation10 + $0x1f8] sm:$0xff]
    %v1215 = vld [vmem:[#allocation10 + $0x200] sm:$0xff]
    %v1216 = vld [vmem:[#allocation10 + $0x208] sm:$0xff]
    %v1217 = vld [vmem:[#allocation10 + $0x210] sm:$0xff]
    %v1218 = vld [vmem:[#allocation10 + $0x218] sm:$0xff]
    %v1219 = vld [vmem:[#allocation10 + $0x220] sm:$0xff]
    %v1220 = vld [vmem:[#allocation10 + $0x228] sm:$0xff]
    %v1221 = vld [vmem:[#allocation10 + $0x230] sm:$0xff]
    %v1222 = vld [vmem:[#allocation10 + $0x238] sm:$0xff]
    %v1223 = vld [vmem:[#allocation10 + $0x240] sm:$0xff]
    %v1224 = vld [vmem:[#allocation10 + $0x248] sm:$0xff]
    %v1225 = vld [vmem:[#allocation10 + $0x250] sm:$0xff]
    %v1226 = vld [vmem:[#allocation10 + $0x258] sm:$0xff]
    %v1227 = vld [vmem:[#allocation10 + $0x260] sm:$0xff]
    %v1228 = vld [vmem:[#allocation10 + $0x268] sm:$0xff]
    %v1229 = vld [vmem:[#allocation10 + $0x270] sm:$0xff]
    %v1230 = vld [vmem:[#allocation10 + $0x278] sm:$0xff]
    %v1231 = vld [vmem:[#allocation10 + $0x280] sm:$0xff]
    %v1232 = vld [vmem:[#allocation10 + $0x288] sm:$0xff]
    %v1233 = vld [vmem:[#allocation10 + $0x290] sm:$0xff]
    %v1234 = vld [vmem:[#allocation10 + $0x298] sm:$0xff]
    %v1235 = vld [vmem:[#allocation10 + $0x2a0] sm:$0xff]
    %v1236 = vld [vmem:[#allocation10 + $0x2a8] sm:$0xff]
    %v1237 = vld [vmem:[#allocation10 + $0x2b0] sm:$0xff]
    %v1238 = vld [vmem:[#allocation10 + $0x2b8] sm:$0xff]
    %v1239 = vld [vmem:[#allocation10 + $0x2c0] sm:$0xff]
    %v1240 = vld [vmem:[#allocation10 + $0x2c8] sm:$0xff]
    %v1241 = vld [vmem:[#allocation10 + $0x2d0] sm:$0xff]
    %v1242 = vld [vmem:[#allocation10 + $0x2d8] sm:$0xff]
    %v1243 = vld [vmem:[#allocation10 + $0x2e0] sm:$0xff]
    %v1244 = vld [vmem:[#allocation10 + $0x2e8] sm:$0xff]
    %v1245 = vld [vmem:[#allocation10 + $0x2f0] sm:$0xff]
    %v1246 = vld [vmem:[#allocation10 + $0x2f8] sm:$0xff]
    %v1247 = vld [vmem:[#allocation10 + $0x300] sm:$0xff]
    %v1248 = vld [vmem:[#allocation10 + $0x308] sm:$0xff]
    %v1249 = vld [vmem:[#allocation10 + $0x310] sm:$0xff]
    %v1250 = vld [vmem:[#allocation10 + $0x318] sm:$0xff]
    %v1251 = vld [vmem:[#allocation10 + $0x320] sm:$0xff]
    %v1252 = vld [vmem:[#allocation10 + $0x328] sm:$0xff]
    %v1253 = vld [vmem:[#allocation10 + $0x330] sm:$0xff]
    %v1254 = vld [vmem:[#allocation10 + $0x338] sm:$0xff]
    %v1255 = vld [vmem:[#allocation10 + $0x340] sm:$0xff]
    %v1256 = vld [vmem:[#allocation10 + $0x348] sm:$0xff]
    %v1257 = vld [vmem:[#allocation10 + $0x350] sm:$0xff]
    %v1258 = vld [vmem:[#allocation10 + $0x358] sm:$0xff]
    %v1259 = vld [vmem:[#allocation10 + $0x360] sm:$0xff]
    %v1260 = vld [vmem:[#allocation10 + $0x368] sm:$0xff]
    %v1261 = vld [vmem:[#allocation10 + $0x370] sm:$0xff]
    %v1262 = vld [vmem:[#allocation10 + $0x378] sm:$0xff]
    %v1263 = vld [vmem:[#allocation10 + $0x380] sm:$0xff]
    %v1264 = vld [vmem:[#allocation10 + $0x388] sm:$0xff]
    %v1265 = vld [vmem:[#allocation10 + $0x390] sm:$0xff]
    %v1266 = vld [vmem:[#allocation10 + $0x398] sm:$0xff]
    %v1267 = vld [vmem:[#allocation10 + $0x3a0] sm:$0xff]
    %v1268 = vld [vmem:[#allocation10 + $0x3a8] sm:$0xff]
    %v1269 = vld [vmem:[#allocation10 + $0x3b0] sm:$0xff]
    %v1270 = vld [vmem:[#allocation10 + $0x3b8] sm:$0xff]
    %v1271 = vld [vmem:[#allocation10 + $0x3c0] sm:$0xff]
    %v1272 = vld [vmem:[#allocation10 + $0x3c8] sm:$0xff]
    %v1273 = vld [vmem:[#allocation10 + $0x3d0] sm:$0xff]
    %v1274 = vld [vmem:[#allocation10 + $0x3d8] sm:$0xff]
    %v1275 = vld [vmem:[#allocation10 + $0x3e0] sm:$0xff]
    %v1276 = vld [vmem:[#allocation10 + $0x3e8] sm:$0xff]
    %v1277 = vld [vmem:[#allocation10 + $0x3f0] sm:$0xff]
    %v1278 = vld [vmem:[#allocation10 + $0x3f8] sm:$0xff]
    %v1279 = vld [vmem:[#allocation10 + $0x400] sm:$0xff]
    %v1280 = vld [vmem:[#allocation10 + $0x408] sm:$0xff]
    %v1281 = vld [vmem:[#allocation10 + $0x410] sm:$0xff]
    %v1282 = vld [vmem:[#allocation10 + $0x418] sm:$0xff]
    %v1283 = vld [vmem:[#allocation10 + $0x420] sm:$0xff]
    %v1284 = vld [vmem:[#allocation10 + $0x428] sm:$0xff]
    %v1285 = vld [vmem:[#allocation10 + $0x430] sm:$0xff]
    %v1286 = vld [vmem:[#allocation10 + $0x438] sm:$0xff]
    %v1287 = vld [vmem:[#allocation10 + $0x440] sm:$0xff]
    %v1288 = vld [vmem:[#allocation10 + $0x448] sm:$0xff]
    %v1289 = vld [vmem:[#allocation10 + $0x450] sm:$0xff]
    %v1290 = vld [vmem:[#allocation10 + $0x458] sm:$0xff]
    %v1291 = vld [vmem:[#allocation10 + $0x460] sm:$0xff]
    %v1292 = vld [vmem:[#allocation10 + $0x468] sm:$0xff]
    %v1293 = vld [vmem:[#allocation10 + $0x470] sm:$0xff]
    %v1294 = vld [vmem:[#allocation10 + $0x478] sm:$0xff]
    %v1295 = vld [vmem:[#allocation10 + $0x480] sm:$0xff]
    %v1296 = vld [vmem:[#allocation10 + $0x488] sm:$0xff]
    %v1297 = vld [vmem:[#allocation10 + $0x490] sm:$0xff]
    %v1298 = vld [vmem:[#allocation10 + $0x498] sm:$0xff]
    %v1299 = vld [vmem:[#allocation10 + $0x4a0] sm:$0xff]
    %v1300 = vld [vmem:[#allocation10 + $0x4a8] sm:$0xff]
    %v1301 = vld [vmem:[#allocation10 + $0x4b0] sm:$0xff]
    %v1302 = vld [vmem:[#allocation10 + $0x4b8] sm:$0xff]
    %v1303 = vld [vmem:[#allocation10 + $0x4c0] sm:$0xff]
    %v1304 = vld [vmem:[#allocation10 + $0x4c8] sm:$0xff]
    %v1305 = vld [vmem:[#allocation10 + $0x4d0] sm:$0xff]
    %v1306 = vld [vmem:[#allocation10 + $0x4d8] sm:$0xff]
    %v1307 = vld [vmem:[#allocation10 + $0x4e0] sm:$0xff]
    %v1308 = vld [vmem:[#allocation10 + $0x4e8] sm:$0xff]
    %v1309 = vld [vmem:[#allocation10 + $0x4f0] sm:$0xff]
    %v1310 = vld [vmem:[#allocation10 + $0x4f8] sm:$0xff]
    %v1311 = vld [vmem:[#allocation10 + $0x500] sm:$0xff]
    %v1312 = vld [vmem:[#allocation10 + $0x508] sm:$0xff]
    %v1313 = vld [vmem:[#allocation10 + $0x510] sm:$0xff]
    %v1314 = vld [vmem:[#allocation10 + $0x518] sm:$0xff]
    %v1315 = vld [vmem:[#allocation10 + $0x520] sm:$0xff]
    %v1316 = vld [vmem:[#allocation10 + $0x528] sm:$0xff]
    %v1317 = vld [vmem:[#allocation10 + $0x530] sm:$0xff]
    %v1318 = vld [vmem:[#allocation10 + $0x538] sm:$0xff]
    %v1319 = vld [vmem:[#allocation10 + $0x540] sm:$0xff]
    %v1320 = vld [vmem:[#allocation10 + $0x548] sm:$0xff]
    %v1321 = vld [vmem:[#allocation10 + $0x550] sm:$0xff]
    %v1322 = vld [vmem:[#allocation10 + $0x558] sm:$0xff]
    %v1323 = vld [vmem:[#allocation10 + $0x560] sm:$0xff]
    %v1324 = vld [vmem:[#allocation10 + $0x568] sm:$0xff]
    %v1325 = vld [vmem:[#allocation10 + $0x570] sm:$0xff]
    %v1326 = vld [vmem:[#allocation10 + $0x578] sm:$0xff]
    %v1327 = vld [vmem:[#allocation10 + $0x580] sm:$0xff]
    %v1328 = vld [vmem:[#allocation10 + $0x588] sm:$0xff]
    %v1329 = vld [vmem:[#allocation10 + $0x590] sm:$0xff]
    %v1330 = vld [vmem:[#allocation10 + $0x598] sm:$0xff]
    %v1331 = vld [vmem:[#allocation10 + $0x5a0] sm:$0xff]
    %v1332 = vld [vmem:[#allocation10 + $0x5a8] sm:$0xff]
    %v1333 = vld [vmem:[#allocation10 + $0x5b0] sm:$0xff]
    %v1334 = vld [vmem:[#allocation10 + $0x5b8] sm:$0xff]
    %v1335 = vld [vmem:[#allocation10 + $0x5c0] sm:$0xff]
    %v1336 = vld [vmem:[#allocation10 + $0x5c8] sm:$0xff]
    %v1337 = vld [vmem:[#allocation10 + $0x5d0] sm:$0xff]
    %v1338 = vld [vmem:[#allocation10 + $0x5d8] sm:$0xff]
    %v1339 = vld [vmem:[#allocation10 + $0x5e0] sm:$0xff]
    %v1340 = vld [vmem:[#allocation10 + $0x5e8] sm:$0xff]
    %v1341 = vld [vmem:[#allocation10 + $0x5f0] sm:$0xff]
    %v1342 = vld [vmem:[#allocation10 + $0x5f8] sm:$0xff]
    %v1343 = vld [vmem:[#allocation10 + $0x600] sm:$0xff]
    %v1344 = vld [vmem:[#allocation10 + $0x608] sm:$0xff]
    %v1345 = vld [vmem:[#allocation10 + $0x610] sm:$0xff]
    %v1346 = vld [vmem:[#allocation10 + $0x618] sm:$0xff]
    %v1347 = vld [vmem:[#allocation10 + $0x620] sm:$0xff]
    %v1348 = vld [vmem:[#allocation10 + $0x628] sm:$0xff]
    %v1349 = vld [vmem:[#allocation10 + $0x630] sm:$0xff]
    %v1350 = vld [vmem:[#allocation10 + $0x638] sm:$0xff]
    %v1351 = vld [vmem:[#allocation10 + $0x640] sm:$0xff]
    %v1352 = vld [vmem:[#allocation10 + $0x648] sm:$0xff]
    %v1353 = vld [vmem:[#allocation10 + $0x650] sm:$0xff]
    %v1354 = vld [vmem:[#allocation10 + $0x658] sm:$0xff]
    %v1355 = vld [vmem:[#allocation10 + $0x660] sm:$0xff]
    %v1356 = vld [vmem:[#allocation10 + $0x668] sm:$0xff]
    %v1357 = vld [vmem:[#allocation10 + $0x670] sm:$0xff]
    %v1358 = vld [vmem:[#allocation10 + $0x678] sm:$0xff]
    %v1359 = vld [vmem:[#allocation10 + $0x680] sm:$0xff]
    %v1360 = vld [vmem:[#allocation10 + $0x688] sm:$0xff]
    %v1361 = vld [vmem:[#allocation10 + $0x690] sm:$0xff]
    %v1362 = vld [vmem:[#allocation10 + $0x698] sm:$0xff]
    %v1363 = vld [vmem:[#allocation10 + $0x6a0] sm:$0xff]
    %v1364 = vld [vmem:[#allocation10 + $0x6a8] sm:$0xff]
    %v1365 = vld [vmem:[#allocation10 + $0x6b0] sm:$0xff]
    %v1366 = vld [vmem:[#allocation10 + $0x6b8] sm:$0xff]
    %v1367 = vld [vmem:[#allocation10 + $0x6c0] sm:$0xff]
    %v1368 = vld [vmem:[#allocation10 + $0x6c8] sm:$0xff]
    %v1369 = vld [vmem:[#allocation10 + $0x6d0] sm:$0xff]
    %v1370 = vld [vmem:[#allocation10 + $0x6d8] sm:$0xff]
    %v1371 = vld [vmem:[#allocation10 + $0x6e0] sm:$0xff]
    %v1372 = vld [vmem:[#allocation10 + $0x6e8] sm:$0xff]
    %v1373 = vld [vmem:[#allocation10 + $0x6f0] sm:$0xff]
    %v1374 = vld [vmem:[#allocation10 + $0x6f8] sm:$0xff]
    %v1375 = vld [vmem:[#allocation10 + $0x700] sm:$0xff]
    %v1376 = vld [vmem:[#allocation10 + $0x708] sm:$0xff]
    %v1377 = vld [vmem:[#allocation10 + $0x710] sm:$0xff]
    %v1378 = vld [vmem:[#allocation10 + $0x718] sm:$0xff]
    %v1379 = vld [vmem:[#allocation10 + $0x720] sm:$0xff]
    %v1380 = vld [vmem:[#allocation10 + $0x728] sm:$0xff]
    %v1381 = vld [vmem:[#allocation10 + $0x730] sm:$0xff]
    %v1382 = vld [vmem:[#allocation10 + $0x738] sm:$0xff]
    %v1383 = vld [vmem:[#allocation10 + $0x740] sm:$0xff]
    %v1384 = vld [vmem:[#allocation10 + $0x748] sm:$0xff]
    %v1385 = vld [vmem:[#allocation10 + $0x750] sm:$0xff]
    %v1386 = vld [vmem:[#allocation10 + $0x758] sm:$0xff]
    %v1387 = vld [vmem:[#allocation10 + $0x760] sm:$0xff]
    %v1388 = vld [vmem:[#allocation10 + $0x768] sm:$0xff]
    %v1389 = vld [vmem:[#allocation10 + $0x770] sm:$0xff]
    %v1390 = vld [vmem:[#allocation10 + $0x778] sm:$0xff]
    %v1391 = vld [vmem:[#allocation10 + $0x780] sm:$0xff]
    %v1392 = vld [vmem:[#allocation10 + $0x788] sm:$0xff]
    %v1393 = vld [vmem:[#allocation10 + $0x790] sm:$0xff]
    %v1394 = vld [vmem:[#allocation10 + $0x798] sm:$0xff]
    %v1395 = vld [vmem:[#allocation10 + $0x7a0] sm:$0xff]
    %v1396 = vld [vmem:[#allocation10 + $0x7a8] sm:$0xff]
    %v1397 = vld [vmem:[#allocation10 + $0x7b0] sm:$0xff]
    %v1398 = vld [vmem:[#allocation10 + $0x7b8] sm:$0xff]
    %v1399 = vld [vmem:[#allocation10 + $0x7c0] sm:$0xff]
    %v1400 = vld [vmem:[#allocation10 + $0x7c8] sm:$0xff]
    %v1401 = vld [vmem:[#allocation10 + $0x7d0] sm:$0xff]
    %v1402 = vld [vmem:[#allocation10 + $0x7d8] sm:$0xff]
    %v1403 = vld [vmem:[#allocation10 + $0x7e0] sm:$0xff]
    %v1404 = vld [vmem:[#allocation10 + $0x7e8] sm:$0xff]
    %v1405 = vld [vmem:[#allocation10 + $0x7f0] sm:$0xff]
    %v1406 = vld [vmem:[#allocation10 + $0x7f8] sm:$0xff]
    %v1407 = vld [vmem:[#allocation13 + $0x13] sm:$0xff]
    %v1409 = vlaneseq
    %v1410 = vshrl.u32 %v1409, 7
    %v1411 = vsub.s32 0, %v1410
    %v1412 = vrot.slane %v1407, %v1411
    %v1413 = vlaneseq
    %v1414 = vshrl.u32 %v1413, 7
    %v1415 = vsub.s32 1, %v1414
    %v1416 = vrot.slane %v1407, %v1415
    %v1417 = vlaneseq
    %v1418 = vshrl.u32 %v1417, 7
    %v1419 = vsub.s32 2, %v1418
    %v1420 = vrot.slane %v1407, %v1419
    %v1421 = vlaneseq
    %v1422 = vshrl.u32 %v1421, 7
    %v1423 = vsub.s32 3, %v1422
    %v1424 = vrot.slane %v1407, %v1423
    %v1425 = vlaneseq
    %v1426 = vshrl.u32 %v1425, 7
    %v1427 = vsub.s32 4, %v1426
    %v1428 = vrot.slane %v1407, %v1427
    %v1429 = vlaneseq
    %v1430 = vshrl.u32 %v1429, 7
    %v1431 = vsub.s32 5, %v1430
    %v1432 = vrot.slane %v1407, %v1431
    %v1433 = vlaneseq
    %v1434 = vshrl.u32 %v1433, 7
    %v1435 = vsub.s32 6, %v1434
    %v1436 = vrot.slane %v1407, %v1435
    %v1437 = vlaneseq
    %v1438 = vshrl.u32 %v1437, 7
    %v1439 = vsub.s32 7, %v1438
    %v1440 = vrot.slane %v1407, %v1439
    %v1705 = vunpack.c.l.b16 %v1151
    %v1706 = vunpack.c.h.b16 %v1151
    %v1707 = vunpack.c.l.b16 %v1152
    %v1708 = vunpack.c.h.b16 %v1152
    %v1709 = vunpack.c.l.b16 %v1153
    %v1710 = vunpack.c.h.b16 %v1153
    %v1711 = vunpack.c.l.b16 %v1154
    %v1712 = vunpack.c.h.b16 %v1154
    %v1713 = vunpack.c.l.b16 %v1155
    %v1714 = vunpack.c.h.b16 %v1155
    %v1715 = vunpack.c.l.b16 %v1156
    %v1716 = vunpack.c.h.b16 %v1156
    %v1717 = vunpack.c.l.b16 %v1157
    %v1718 = vunpack.c.h.b16 %v1157
    %v1719 = vunpack.c.l.b16 %v1158
    %v1720 = vunpack.c.h.b16 %v1158
    %v1721 = vunpack.c.l.b16 %v1159
    %v1722 = vunpack.c.h.b16 %v1159
    %v1723 = vunpack.c.l.b16 %v1160
    %v1724 = vunpack.c.h.b16 %v1160
    %v1725 = vunpack.c.l.b16 %v1161
    %v1726 = vunpack.c.h.b16 %v1161
    %v1727 = vunpack.c.l.b16 %v1162
    %v1728 = vunpack.c.h.b16 %v1162
    %v1729 = vunpack.c.l.b16 %v1163
    %v1730 = vunpack.c.h.b16 %v1163
    %v1731 = vunpack.c.l.b16 %v1164
    %v1732 = vunpack.c.h.b16 %v1164
    %v1733 = vunpack.c.l.b16 %v1165
    %v1734 = vunpack.c.h.b16 %v1165
    %v1735 = vunpack.c.l.b16 %v1166
    %v1736 = vunpack.c.h.b16 %v1166
    %v1737 = vunpack.c.l.b16 %v1167
    %v1738 = vunpack.c.h.b16 %v1167
    %v1739 = vunpack.c.l.b16 %v1168
    %v1740 = vunpack.c.h.b16 %v1168
    %v1741 = vunpack.c.l.b16 %v1169
    %v1742 = vunpack.c.h.b16 %v1169
    %v1743 = vunpack.c.l.b16 %v1170
    %v1744 = vunpack.c.h.b16 %v1170
    %v1745 = vunpack.c.l.b16 %v1171
    %v1746 = vunpack.c.h.b16 %v1171
    %v1747 = vunpack.c.l.b16 %v1172
    %v1748 = vunpack.c.h.b16 %v1172
    %v1749 = vunpack.c.l.b16 %v1173
    %v1750 = vunpack.c.h.b16 %v1173
    %v1751 = vunpack.c.l.b16 %v1174
    %v1752 = vunpack.c.h.b16 %v1174
    %v1753 = vunpack.c.l.b16 %v1175
    %v1754 = vunpack.c.h.b16 %v1175
    %v1755 = vunpack.c.l.b16 %v1176
    %v1756 = vunpack.c.h.b16 %v1176
    %v1757 = vunpack.c.l.b16 %v1177
    %v1758 = vunpack.c.h.b16 %v1177
    %v1759 = vunpack.c.l.b16 %v1178
    %v1760 = vunpack.c.h.b16 %v1178
    %v1761 = vunpack.c.l.b16 %v1179
    %v1762 = vunpack.c.h.b16 %v1179
    %v1763 = vunpack.c.l.b16 %v1180
    %v1764 = vunpack.c.h.b16 %v1180
    %v1765 = vunpack.c.l.b16 %v1181
    %v1766 = vunpack.c.h.b16 %v1181
    %v1767 = vunpack.c.l.b16 %v1182
    %v1768 = vunpack.c.h.b16 %v1182
    %v1769 = vunpack.c.l.b16 %v1183
    %v1770 = vunpack.c.h.b16 %v1183
    %v1771 = vunpack.c.l.b16 %v1184
    %v1772 = vunpack.c.h.b16 %v1184
    %v1773 = vunpack.c.l.b16 %v1185
    %v1774 = vunpack.c.h.b16 %v1185
    %v1775 = vunpack.c.l.b16 %v1186
    %v1776 = vunpack.c.h.b16 %v1186
    %v1777 = vunpack.c.l.b16 %v1187
    %v1778 = vunpack.c.h.b16 %v1187
    %v1779 = vunpack.c.l.b16 %v1188
    %v1780 = vunpack.c.h.b16 %v1188
    %v1781 = vunpack.c.l.b16 %v1189
    %v1782 = vunpack.c.h.b16 %v1189
    %v1783 = vunpack.c.l.b16 %v1190
    %v1784 = vunpack.c.h.b16 %v1190
    %v1785 = vunpack.c.l.b16 %v1191
    %v1786 = vunpack.c.h.b16 %v1191
    %v1787 = vunpack.c.l.b16 %v1192
    %v1788 = vunpack.c.h.b16 %v1192
    %v1789 = vunpack.c.l.b16 %v1193
    %v1790 = vunpack.c.h.b16 %v1193
    %v1791 = vunpack.c.l.b16 %v1194
    %v1792 = vunpack.c.h.b16 %v1194
    %v1793 = vunpack.c.l.b16 %v1195
    %v1794 = vunpack.c.h.b16 %v1195
    %v1795 = vunpack.c.l.b16 %v1196
    %v1796 = vunpack.c.h.b16 %v1196
    %v1797 = vunpack.c.l.b16 %v1197
    %v1798 = vunpack.c.h.b16 %v1197
    %v1799 = vunpack.c.l.b16 %v1198
    %v1800 = vunpack.c.h.b16 %v1198
    %v1801 = vunpack.c.l.b16 %v1199
    %v1802 = vunpack.c.h.b16 %v1199
    %v1803 = vunpack.c.l.b16 %v1200
    %v1804 = vunpack.c.h.b16 %v1200
    %v1805 = vunpack.c.l.b16 %v1201
    %v1806 = vunpack.c.h.b16 %v1201
    %v1807 = vunpack.c.l.b16 %v1202
    %v1808 = vunpack.c.h.b16 %v1202
    %v1809 = vunpack.c.l.b16 %v1203
    %v1810 = vunpack.c.h.b16 %v1203
    %v1811 = vunpack.c.l.b16 %v1204
    %v1812 = vunpack.c.h.b16 %v1204
    %v1813 = vunpack.c.l.b16 %v1205
    %v1814 = vunpack.c.h.b16 %v1205
    %v1815 = vunpack.c.l.b16 %v1206
    %v1816 = vunpack.c.h.b16 %v1206
    %v1817 = vunpack.c.l.b16 %v1207
    %v1818 = vunpack.c.h.b16 %v1207
    %v1819 = vunpack.c.l.b16 %v1208
    %v1820 = vunpack.c.h.b16 %v1208
    %v1821 = vunpack.c.l.b16 %v1209
    %v1822 = vunpack.c.h.b16 %v1209
    %v1823 = vunpack.c.l.b16 %v1210
    %v1824 = vunpack.c.h.b16 %v1210
    %v1825 = vunpack.c.l.b16 %v1211
    %v1826 = vunpack.c.h.b16 %v1211
    %v1827 = vunpack.c.l.b16 %v1212
    %v1828 = vunpack.c.h.b16 %v1212
    %v1829 = vunpack.c.l.b16 %v1213
    %v1830 = vunpack.c.h.b16 %v1213
    %v1831 = vunpack.c.l.b16 %v1214
    %v1832 = vunpack.c.h.b16 %v1214
    %v1833 = vunpack.c.l.b16 %v1215
    %v1834 = vunpack.c.h.b16 %v1215
    %v1835 = vunpack.c.l.b16 %v1216
    %v1836 = vunpack.c.h.b16 %v1216
    %v1837 = vunpack.c.l.b16 %v1217
    %v1838 = vunpack.c.h.b16 %v1217
    %v1839 = vunpack.c.l.b16 %v1218
    %v1840 = vunpack.c.h.b16 %v1218
    %v1841 = vunpack.c.l.b16 %v1219
    %v1842 = vunpack.c.h.b16 %v1219
    %v1843 = vunpack.c.l.b16 %v1220
    %v1844 = vunpack.c.h.b16 %v1220
    %v1845 = vunpack.c.l.b16 %v1221
    %v1846 = vunpack.c.h.b16 %v1221
    %v1847 = vunpack.c.l.b16 %v1222
    %v1848 = vunpack.c.h.b16 %v1222
    %v1849 = vunpack.c.l.b16 %v1223
    %v1850 = vunpack.c.h.b16 %v1223
    %v1851 = vunpack.c.l.b16 %v1224
    %v1852 = vunpack.c.h.b16 %v1224
    %v1853 = vunpack.c.l.b16 %v1225
    %v1854 = vunpack.c.h.b16 %v1225
    %v1855 = vunpack.c.l.b16 %v1226
    %v1856 = vunpack.c.h.b16 %v1226
    %v1857 = vunpack.c.l.b16 %v1227
    %v1858 = vunpack.c.h.b16 %v1227
    %v1859 = vunpack.c.l.b16 %v1228
    %v1860 = vunpack.c.h.b16 %v1228
    %v1861 = vunpack.c.l.b16 %v1229
    %v1862 = vunpack.c.h.b16 %v1229
    %v1863 = vunpack.c.l.b16 %v1230
    %v1864 = vunpack.c.h.b16 %v1230
    %v1865 = vunpack.c.l.b16 %v1231
    %v1866 = vunpack.c.h.b16 %v1231
    %v1867 = vunpack.c.l.b16 %v1232
    %v1868 = vunpack.c.h.b16 %v1232
    %v1869 = vunpack.c.l.b16 %v1233
    %v1870 = vunpack.c.h.b16 %v1233
    %v1871 = vunpack.c.l.b16 %v1234
    %v1872 = vunpack.c.h.b16 %v1234
    %v1873 = vunpack.c.l.b16 %v1235
    %v1874 = vunpack.c.h.b16 %v1235
    %v1875 = vunpack.c.l.b16 %v1236
    %v1876 = vunpack.c.h.b16 %v1236
    %v1877 = vunpack.c.l.b16 %v1237
    %v1878 = vunpack.c.h.b16 %v1237
    %v1879 = vunpack.c.l.b16 %v1238
    %v1880 = vunpack.c.h.b16 %v1238
    %v1881 = vunpack.c.l.b16 %v1239
    %v1882 = vunpack.c.h.b16 %v1239
    %v1883 = vunpack.c.l.b16 %v1240
    %v1884 = vunpack.c.h.b16 %v1240
    %v1885 = vunpack.c.l.b16 %v1241
    %v1886 = vunpack.c.h.b16 %v1241
    %v1887 = vunpack.c.l.b16 %v1242
    %v1888 = vunpack.c.h.b16 %v1242
    %v1889 = vunpack.c.l.b16 %v1243
    %v1890 = vunpack.c.h.b16 %v1243
    %v1891 = vunpack.c.l.b16 %v1244
    %v1892 = vunpack.c.h.b16 %v1244
    %v1893 = vunpack.c.l.b16 %v1245
    %v1894 = vunpack.c.h.b16 %v1245
    %v1895 = vunpack.c.l.b16 %v1246
    %v1896 = vunpack.c.h.b16 %v1246
    %v1897 = vunpack.c.l.b16 %v1247
    %v1898 = vunpack.c.h.b16 %v1247
    %v1899 = vunpack.c.l.b16 %v1248
    %v1900 = vunpack.c.h.b16 %v1248
    %v1901 = vunpack.c.l.b16 %v1249
    %v1902 = vunpack.c.h.b16 %v1249
    %v1903 = vunpack.c.l.b16 %v1250
    %v1904 = vunpack.c.h.b16 %v1250
    %v1905 = vunpack.c.l.b16 %v1251
    %v1906 = vunpack.c.h.b16 %v1251
    %v1907 = vunpack.c.l.b16 %v1252
    %v1908 = vunpack.c.h.b16 %v1252
    %v1909 = vunpack.c.l.b16 %v1253
    %v1910 = vunpack.c.h.b16 %v1253
    %v1911 = vunpack.c.l.b16 %v1254
    %v1912 = vunpack.c.h.b16 %v1254
    %v1913 = vunpack.c.l.b16 %v1255
    %v1914 = vunpack.c.h.b16 %v1255
    %v1915 = vunpack.c.l.b16 %v1256
    %v1916 = vunpack.c.h.b16 %v1256
    %v1917 = vunpack.c.l.b16 %v1257
    %v1918 = vunpack.c.h.b16 %v1257
    %v1919 = vunpack.c.l.b16 %v1258
    %v1920 = vunpack.c.h.b16 %v1258
    %v1921 = vunpack.c.l.b16 %v1259
    %v1922 = vunpack.c.h.b16 %v1259
    %v1923 = vunpack.c.l.b16 %v1260
    %v1924 = vunpack.c.h.b16 %v1260
    %v1925 = vunpack.c.l.b16 %v1261
    %v1926 = vunpack.c.h.b16 %v1261
    %v1927 = vunpack.c.l.b16 %v1262
    %v1928 = vunpack.c.h.b16 %v1262
    %v1929 = vunpack.c.l.b16 %v1263
    %v1930 = vunpack.c.h.b16 %v1263
    %v1931 = vunpack.c.l.b16 %v1264
    %v1932 = vunpack.c.h.b16 %v1264
    %v1933 = vunpack.c.l.b16 %v1265
    %v1934 = vunpack.c.h.b16 %v1265
    %v1935 = vunpack.c.l.b16 %v1266
    %v1936 = vunpack.c.h.b16 %v1266
    %v1937 = vunpack.c.l.b16 %v1267
    %v1938 = vunpack.c.h.b16 %v1267
    %v1939 = vunpack.c.l.b16 %v1268
    %v1940 = vunpack.c.h.b16 %v1268
    %v1941 = vunpack.c.l.b16 %v1269
    %v1942 = vunpack.c.h.b16 %v1269
    %v1943 = vunpack.c.l.b16 %v1270
    %v1944 = vunpack.c.h.b16 %v1270
    %v1945 = vunpack.c.l.b16 %v1271
    %v1946 = vunpack.c.h.b16 %v1271
    %v1947 = vunpack.c.l.b16 %v1272
    %v1948 = vunpack.c.h.b16 %v1272
    %v1949 = vunpack.c.l.b16 %v1273
    %v1950 = vunpack.c.h.b16 %v1273
    %v1951 = vunpack.c.l.b16 %v1274
    %v1952 = vunpack.c.h.b16 %v1274
    %v1953 = vunpack.c.l.b16 %v1275
    %v1954 = vunpack.c.h.b16 %v1275
    %v1955 = vunpack.c.l.b16 %v1276
    %v1956 = vunpack.c.h.b16 %v1276
    %v1957 = vunpack.c.l.b16 %v1277
    %v1958 = vunpack.c.h.b16 %v1277
    %v1959 = vunpack.c.l.b16 %v1278
    %v1960 = vunpack.c.h.b16 %v1278
    %v1961 = vunpack.c.l.b16 %v1279
    %v1962 = vunpack.c.h.b16 %v1279
    %v1963 = vunpack.c.l.b16 %v1280
    %v1964 = vunpack.c.h.b16 %v1280
    %v1965 = vunpack.c.l.b16 %v1281
    %v1966 = vunpack.c.h.b16 %v1281
    %v1967 = vunpack.c.l.b16 %v1282
    %v1968 = vunpack.c.h.b16 %v1282
    %v1969 = vunpack.c.l.b16 %v1283
    %v1970 = vunpack.c.h.b16 %v1283
    %v1971 = vunpack.c.l.b16 %v1284
    %v1972 = vunpack.c.h.b16 %v1284
    %v1973 = vunpack.c.l.b16 %v1285
    %v1974 = vunpack.c.h.b16 %v1285
    %v1975 = vunpack.c.l.b16 %v1286
    %v1976 = vunpack.c.h.b16 %v1286
    %v1977 = vunpack.c.l.b16 %v1287
    %v1978 = vunpack.c.h.b16 %v1287
    %v1979 = vunpack.c.l.b16 %v1288
    %v1980 = vunpack.c.h.b16 %v1288
    %v1981 = vunpack.c.l.b16 %v1289
    %v1982 = vunpack.c.h.b16 %v1289
    %v1983 = vunpack.c.l.b16 %v1290
    %v1984 = vunpack.c.h.b16 %v1290
    %v1985 = vunpack.c.l.b16 %v1291
    %v1986 = vunpack.c.h.b16 %v1291
    %v1987 = vunpack.c.l.b16 %v1292
    %v1988 = vunpack.c.h.b16 %v1292
    %v1989 = vunpack.c.l.b16 %v1293
    %v1990 = vunpack.c.h.b16 %v1293
    %v1991 = vunpack.c.l.b16 %v1294
    %v1992 = vunpack.c.h.b16 %v1294
    %v1993 = vunpack.c.l.b16 %v1295
    %v1994 = vunpack.c.h.b16 %v1295
    %v1995 = vunpack.c.l.b16 %v1296
    %v1996 = vunpack.c.h.b16 %v1296
    %v1997 = vunpack.c.l.b16 %v1297
    %v1998 = vunpack.c.h.b16 %v1297
    %v1999 = vunpack.c.l.b16 %v1298
    %v2000 = vunpack.c.h.b16 %v1298
    %v2001 = vunpack.c.l.b16 %v1299
    %v2002 = vunpack.c.h.b16 %v1299
    %v2003 = vunpack.c.l.b16 %v1300
    %v2004 = vunpack.c.h.b16 %v1300
    %v2005 = vunpack.c.l.b16 %v1301
    %v2006 = vunpack.c.h.b16 %v1301
    %v2007 = vunpack.c.l.b16 %v1302
    %v2008 = vunpack.c.h.b16 %v1302
    %v2009 = vunpack.c.l.b16 %v1303
    %v2010 = vunpack.c.h.b16 %v1303
    %v2011 = vunpack.c.l.b16 %v1304
    %v2012 = vunpack.c.h.b16 %v1304
    %v2013 = vunpack.c.l.b16 %v1305
    %v2014 = vunpack.c.h.b16 %v1305
    %v2015 = vunpack.c.l.b16 %v1306
    %v2016 = vunpack.c.h.b16 %v1306
    %v2017 = vunpack.c.l.b16 %v1307
    %v2018 = vunpack.c.h.b16 %v1307
    %v2019 = vunpack.c.l.b16 %v1308
    %v2020 = vunpack.c.h.b16 %v1308
    %v2021 = vunpack.c.l.b16 %v1309
    %v2022 = vunpack.c.h.b16 %v1309
    %v2023 = vunpack.c.l.b16 %v1310
    %v2024 = vunpack.c.h.b16 %v1310
    %v2025 = vunpack.c.l.b16 %v1311
    %v2026 = vunpack.c.h.b16 %v1311
    %v2027 = vunpack.c.l.b16 %v1312
    %v2028 = vunpack.c.h.b16 %v1312
    %v2029 = vunpack.c.l.b16 %v1313
    %v2030 = vunpack.c.h.b16 %v1313
    %v2031 = vunpack.c.l.b16 %v1314
    %v2032 = vunpack.c.h.b16 %v1314
    %v2033 = vunpack.c.l.b16 %v1315
    %v2034 = vunpack.c.h.b16 %v1315
    %v2035 = vunpack.c.l.b16 %v1316
    %v2036 = vunpack.c.h.b16 %v1316
    %v2037 = vunpack.c.l.b16 %v1317
    %v2038 = vunpack.c.h.b16 %v1317
    %v2039 = vunpack.c.l.b16 %v1318
    %v2040 = vunpack.c.h.b16 %v1318
    %v2041 = vunpack.c.l.b16 %v1319
    %v2042 = vunpack.c.h.b16 %v1319
    %v2043 = vunpack.c.l.b16 %v1320
    %v2044 = vunpack.c.h.b16 %v1320
    %v2045 = vunpack.c.l.b16 %v1321
    %v2046 = vunpack.c.h.b16 %v1321
    %v2047 = vunpack.c.l.b16 %v1322
    %v2048 = vunpack.c.h.b16 %v1322
    %v2049 = vunpack.c.l.b16 %v1323
    %v2050 = vunpack.c.h.b16 %v1323
    %v2051 = vunpack.c.l.b16 %v1324
    %v2052 = vunpack.c.h.b16 %v1324
    %v2053 = vunpack.c.l.b16 %v1325
    %v2054 = vunpack.c.h.b16 %v1325
    %v2055 = vunpack.c.l.b16 %v1326
    %v2056 = vunpack.c.h.b16 %v1326
    %v2057 = vunpack.c.l.b16 %v1327
    %v2058 = vunpack.c.h.b16 %v1327
    %v2059 = vunpack.c.l.b16 %v1328
    %v2060 = vunpack.c.h.b16 %v1328
    %v2061 = vunpack.c.l.b16 %v1329
    %v2062 = vunpack.c.h.b16 %v1329
    %v2063 = vunpack.c.l.b16 %v1330
    %v2064 = vunpack.c.h.b16 %v1330
    %v2065 = vunpack.c.l.b16 %v1331
    %v2066 = vunpack.c.h.b16 %v1331
    %v2067 = vunpack.c.l.b16 %v1332
    %v2068 = vunpack.c.h.b16 %v1332
    %v2069 = vunpack.c.l.b16 %v1333
    %v2070 = vunpack.c.h.b16 %v1333
    %v2071 = vunpack.c.l.b16 %v1334
    %v2072 = vunpack.c.h.b16 %v1334
    %v2073 = vunpack.c.l.b16 %v1335
    %v2074 = vunpack.c.h.b16 %v1335
    %v2075 = vunpack.c.l.b16 %v1336
    %v2076 = vunpack.c.h.b16 %v1336
    %v2077 = vunpack.c.l.b16 %v1337
    %v2078 = vunpack.c.h.b16 %v1337
    %v2079 = vunpack.c.l.b16 %v1338
    %v2080 = vunpack.c.h.b16 %v1338
    %v2081 = vunpack.c.l.b16 %v1339
    %v2082 = vunpack.c.h.b16 %v1339
    %v2083 = vunpack.c.l.b16 %v1340
    %v2084 = vunpack.c.h.b16 %v1340
    %v2085 = vunpack.c.l.b16 %v1341
    %v2086 = vunpack.c.h.b16 %v1341
    %v2087 = vunpack.c.l.b16 %v1342
    %v2088 = vunpack.c.h.b16 %v1342
    %v2089 = vunpack.c.l.b16 %v1343
    %v2090 = vunpack.c.h.b16 %v1343
    %v2091 = vunpack.c.l.b16 %v1344
    %v2092 = vunpack.c.h.b16 %v1344
    %v2093 = vunpack.c.l.b16 %v1345
    %v2094 = vunpack.c.h.b16 %v1345
    %v2095 = vunpack.c.l.b16 %v1346
    %v2096 = vunpack.c.h.b16 %v1346
    %v2097 = vunpack.c.l.b16 %v1347
    %v2098 = vunpack.c.h.b16 %v1347
    %v2099 = vunpack.c.l.b16 %v1348
    %v2100 = vunpack.c.h.b16 %v1348
    %v2101 = vunpack.c.l.b16 %v1349
    %v2102 = vunpack.c.h.b16 %v1349
    %v2103 = vunpack.c.l.b16 %v1350
    %v2104 = vunpack.c.h.b16 %v1350
    %v2105 = vunpack.c.l.b16 %v1351
    %v2106 = vunpack.c.h.b16 %v1351
    %v2107 = vunpack.c.l.b16 %v1352
    %v2108 = vunpack.c.h.b16 %v1352
    %v2109 = vunpack.c.l.b16 %v1353
    %v2110 = vunpack.c.h.b16 %v1353
    %v2111 = vunpack.c.l.b16 %v1354
    %v2112 = vunpack.c.h.b16 %v1354
    %v2113 = vunpack.c.l.b16 %v1355
    %v2114 = vunpack.c.h.b16 %v1355
    %v2115 = vunpack.c.l.b16 %v1356
    %v2116 = vunpack.c.h.b16 %v1356
    %v2117 = vunpack.c.l.b16 %v1357
    %v2118 = vunpack.c.h.b16 %v1357
    %v2119 = vunpack.c.l.b16 %v1358
    %v2120 = vunpack.c.h.b16 %v1358
    %v2121 = vunpack.c.l.b16 %v1359
    %v2122 = vunpack.c.h.b16 %v1359
    %v2123 = vunpack.c.l.b16 %v1360
    %v2124 = vunpack.c.h.b16 %v1360
    %v2125 = vunpack.c.l.b16 %v1361
    %v2126 = vunpack.c.h.b16 %v1361
    %v2127 = vunpack.c.l.b16 %v1362
    %v2128 = vunpack.c.h.b16 %v1362
    %v2129 = vunpack.c.l.b16 %v1363
    %v2130 = vunpack.c.h.b16 %v1363
    %v2131 = vunpack.c.l.b16 %v1364
    %v2132 = vunpack.c.h.b16 %v1364
    %v2133 = vunpack.c.l.b16 %v1365
    %v2134 = vunpack.c.h.b16 %v1365
    %v2135 = vunpack.c.l.b16 %v1366
    %v2136 = vunpack.c.h.b16 %v1366
    %v2137 = vunpack.c.l.b16 %v1367
    %v2138 = vunpack.c.h.b16 %v1367
    %v2139 = vunpack.c.l.b16 %v1368
    %v2140 = vunpack.c.h.b16 %v1368
    %v2141 = vunpack.c.l.b16 %v1369
    %v2142 = vunpack.c.h.b16 %v1369
    %v2143 = vunpack.c.l.b16 %v1370
    %v2144 = vunpack.c.h.b16 %v1370
    %v2145 = vunpack.c.l.b16 %v1371
    %v2146 = vunpack.c.h.b16 %v1371
    %v2147 = vunpack.c.l.b16 %v1372
    %v2148 = vunpack.c.h.b16 %v1372
    %v2149 = vunpack.c.l.b16 %v1373
    %v2150 = vunpack.c.h.b16 %v1373
    %v2151 = vunpack.c.l.b16 %v1374
    %v2152 = vunpack.c.h.b16 %v1374
    %v2153 = vunpack.c.l.b16 %v1375
    %v2154 = vunpack.c.h.b16 %v1375
    %v2155 = vunpack.c.l.b16 %v1376
    %v2156 = vunpack.c.h.b16 %v1376
    %v2157 = vunpack.c.l.b16 %v1377
    %v2158 = vunpack.c.h.b16 %v1377
    %v2159 = vunpack.c.l.b16 %v1378
    %v2160 = vunpack.c.h.b16 %v1378
    %v2161 = vunpack.c.l.b16 %v1379
    %v2162 = vunpack.c.h.b16 %v1379
    %v2163 = vunpack.c.l.b16 %v1380
    %v2164 = vunpack.c.h.b16 %v1380
    %v2165 = vunpack.c.l.b16 %v1381
    %v2166 = vunpack.c.h.b16 %v1381
    %v2167 = vunpack.c.l.b16 %v1382
    %v2168 = vunpack.c.h.b16 %v1382
    %v2169 = vunpack.c.l.b16 %v1383
    %v2170 = vunpack.c.h.b16 %v1383
    %v2171 = vunpack.c.l.b16 %v1384
    %v2172 = vunpack.c.h.b16 %v1384
    %v2173 = vunpack.c.l.b16 %v1385
    %v2174 = vunpack.c.h.b16 %v1385
    %v2175 = vunpack.c.l.b16 %v1386
    %v2176 = vunpack.c.h.b16 %v1386
    %v2177 = vunpack.c.l.b16 %v1387
    %v2178 = vunpack.c.h.b16 %v1387
    %v2179 = vunpack.c.l.b16 %v1388
    %v2180 = vunpack.c.h.b16 %v1388
    %v2181 = vunpack.c.l.b16 %v1389
    %v2182 = vunpack.c.h.b16 %v1389
    %v2183 = vunpack.c.l.b16 %v1390
    %v2184 = vunpack.c.h.b16 %v1390
    %v2185 = vunpack.c.l.b16 %v1391
    %v2186 = vunpack.c.h.b16 %v1391
    %v2187 = vunpack.c.l.b16 %v1392
    %v2188 = vunpack.c.h.b16 %v1392
    %v2189 = vunpack.c.l.b16 %v1393
    %v2190 = vunpack.c.h.b16 %v1393
    %v2191 = vunpack.c.l.b16 %v1394
    %v2192 = vunpack.c.h.b16 %v1394
    %v2193 = vunpack.c.l.b16 %v1395
    %v2194 = vunpack.c.h.b16 %v1395
    %v2195 = vunpack.c.l.b16 %v1396
    %v2196 = vunpack.c.h.b16 %v1396
    %v2197 = vunpack.c.l.b16 %v1397
    %v2198 = vunpack.c.h.b16 %v1397
    %v2199 = vunpack.c.l.b16 %v1398
    %v2200 = vunpack.c.h.b16 %v1398
    %v2201 = vunpack.c.l.b16 %v1399
    %v2202 = vunpack.c.h.b16 %v1399
    %v2203 = vunpack.c.l.b16 %v1400
    %v2204 = vunpack.c.h.b16 %v1400
    %v2205 = vunpack.c.l.b16 %v1401
    %v2206 = vunpack.c.h.b16 %v1401
    %v2207 = vunpack.c.l.b16 %v1402
    %v2208 = vunpack.c.h.b16 %v1402
    %v2209 = vunpack.c.l.b16 %v1403
    %v2210 = vunpack.c.h.b16 %v1403
    %v2211 = vunpack.c.l.b16 %v1404
    %v2212 = vunpack.c.h.b16 %v1404
    %v2213 = vunpack.c.l.b16 %v1405
    %v2214 = vunpack.c.h.b16 %v1405
    %v2215 = vunpack.c.l.b16 %v1406
    %v2216 = vunpack.c.h.b16 %v1406
    %v2217 = vpack.c.b16 %v1713, %v1705
    %v2218 = vpack.c.b16 %v1714, %v1706
    %v2219 = vpack.c.b16 %v1715, %v1707
    %v2220 = vpack.c.b16 %v1716, %v1708
    %v2221 = vpack.c.b16 %v1717, %v1709
    %v2222 = vpack.c.b16 %v1718, %v1710
    %v2223 = vpack.c.b16 %v1719, %v1711
    %v2224 = vpack.c.b16 %v1720, %v1712
    %v2225 = vpack.c.b16 %v1729, %v1721
    %v2226 = vpack.c.b16 %v1730, %v1722
    %v2227 = vpack.c.b16 %v1731, %v1723
    %v2228 = vpack.c.b16 %v1732, %v1724
    %v2229 = vpack.c.b16 %v1733, %v1725
    %v2230 = vpack.c.b16 %v1734, %v1726
    %v2231 = vpack.c.b16 %v1735, %v1727
    %v2232 = vpack.c.b16 %v1736, %v1728
    %v2233 = vpack.c.b16 %v1745, %v1737
    %v2234 = vpack.c.b16 %v1746, %v1738
    %v2235 = vpack.c.b16 %v1747, %v1739
    %v2236 = vpack.c.b16 %v1748, %v1740
    %v2237 = vpack.c.b16 %v1749, %v1741
    %v2238 = vpack.c.b16 %v1750, %v1742
    %v2239 = vpack.c.b16 %v1751, %v1743
    %v2240 = vpack.c.b16 %v1752, %v1744
    %v2241 = vpack.c.b16 %v1761, %v1753
    %v2242 = vpack.c.b16 %v1762, %v1754
    %v2243 = vpack.c.b16 %v1763, %v1755
    %v2244 = vpack.c.b16 %v1764, %v1756
    %v2245 = vpack.c.b16 %v1765, %v1757
    %v2246 = vpack.c.b16 %v1766, %v1758
    %v2247 = vpack.c.b16 %v1767, %v1759
    %v2248 = vpack.c.b16 %v1768, %v1760
    %v2249 = vpack.c.b16 %v1777, %v1769
    %v2250 = vpack.c.b16 %v1778, %v1770
    %v2251 = vpack.c.b16 %v1779, %v1771
    %v2252 = vpack.c.b16 %v1780, %v1772
    %v2253 = vpack.c.b16 %v1781, %v1773
    %v2254 = vpack.c.b16 %v1782, %v1774
    %v2255 = vpack.c.b16 %v1783, %v1775
    %v2256 = vpack.c.b16 %v1784, %v1776
    %v2257 = vpack.c.b16 %v1793, %v1785
    %v2258 = vpack.c.b16 %v1794, %v1786
    %v2259 = vpack.c.b16 %v1795, %v1787
    %v2260 = vpack.c.b16 %v1796, %v1788
    %v2261 = vpack.c.b16 %v1797, %v1789
    %v2262 = vpack.c.b16 %v1798, %v1790
    %v2263 = vpack.c.b16 %v1799, %v1791
    %v2264 = vpack.c.b16 %v1800, %v1792
    %v2265 = vpack.c.b16 %v1809, %v1801
    %v2266 = vpack.c.b16 %v1810, %v1802
    %v2267 = vpack.c.b16 %v1811, %v1803
    %v2268 = vpack.c.b16 %v1812, %v1804
    %v2269 = vpack.c.b16 %v1813, %v1805
    %v2270 = vpack.c.b16 %v1814, %v1806
    %v2271 = vpack.c.b16 %v1815, %v1807
    %v2272 = vpack.c.b16 %v1816, %v1808
    %v2273 = vpack.c.b16 %v1825, %v1817
    %v2274 = vpack.c.b16 %v1826, %v1818
    %v2275 = vpack.c.b16 %v1827, %v1819
    %v2276 = vpack.c.b16 %v1828, %v1820
    %v2277 = vpack.c.b16 %v1829, %v1821
    %v2278 = vpack.c.b16 %v1830, %v1822
    %v2279 = vpack.c.b16 %v1831, %v1823
    %v2280 = vpack.c.b16 %v1832, %v1824
    %v2281 = vpack.c.b16 %v1841, %v1833
    %v2282 = vpack.c.b16 %v1842, %v1834
    %v2283 = vpack.c.b16 %v1843, %v1835
    %v2284 = vpack.c.b16 %v1844, %v1836
    %v2285 = vpack.c.b16 %v1845, %v1837
    %v2286 = vpack.c.b16 %v1846, %v1838
    %v2287 = vpack.c.b16 %v1847, %v1839
    %v2288 = vpack.c.b16 %v1848, %v1840
    %v2289 = vpack.c.b16 %v1857, %v1849
    %v2290 = vpack.c.b16 %v1858, %v1850
    %v2291 = vpack.c.b16 %v1859, %v1851
    %v2292 = vpack.c.b16 %v1860, %v1852
    %v2293 = vpack.c.b16 %v1861, %v1853
    %v2294 = vpack.c.b16 %v1862, %v1854
    %v2295 = vpack.c.b16 %v1863, %v1855
    %v2296 = vpack.c.b16 %v1864, %v1856
    %v2297 = vpack.c.b16 %v1873, %v1865
    %v2298 = vpack.c.b16 %v1874, %v1866
    %v2299 = vpack.c.b16 %v1875, %v1867
    %v2300 = vpack.c.b16 %v1876, %v1868
    %v2301 = vpack.c.b16 %v1877, %v1869
    %v2302 = vpack.c.b16 %v1878, %v1870
    %v2303 = vpack.c.b16 %v1879, %v1871
    %v2304 = vpack.c.b16 %v1880, %v1872
    %v2305 = vpack.c.b16 %v1889, %v1881
    %v2306 = vpack.c.b16 %v1890, %v1882
    %v2307 = vpack.c.b16 %v1891, %v1883
    %v2308 = vpack.c.b16 %v1892, %v1884
    %v2309 = vpack.c.b16 %v1893, %v1885
    %v2310 = vpack.c.b16 %v1894, %v1886
    %v2311 = vpack.c.b16 %v1895, %v1887
    %v2312 = vpack.c.b16 %v1896, %v1888
    %v2313 = vpack.c.b16 %v1905, %v1897
    %v2314 = vpack.c.b16 %v1906, %v1898
    %v2315 = vpack.c.b16 %v1907, %v1899
    %v2316 = vpack.c.b16 %v1908, %v1900
    %v2317 = vpack.c.b16 %v1909, %v1901
    %v2318 = vpack.c.b16 %v1910, %v1902
    %v2319 = vpack.c.b16 %v1911, %v1903
    %v2320 = vpack.c.b16 %v1912, %v1904
    %v2321 = vpack.c.b16 %v1921, %v1913
    %v2322 = vpack.c.b16 %v1922, %v1914
    %v2323 = vpack.c.b16 %v1923, %v1915
    %v2324 = vpack.c.b16 %v1924, %v1916
    %v2325 = vpack.c.b16 %v1925, %v1917
    %v2326 = vpack.c.b16 %v1926, %v1918
    %v2327 = vpack.c.b16 %v1927, %v1919
    %v2328 = vpack.c.b16 %v1928, %v1920
    %v2329 = vpack.c.b16 %v1937, %v1929
    %v2330 = vpack.c.b16 %v1938, %v1930
    %v2331 = vpack.c.b16 %v1939, %v1931
    %v2332 = vpack.c.b16 %v1940, %v1932
    %v2333 = vpack.c.b16 %v1941, %v1933
    %v2334 = vpack.c.b16 %v1942, %v1934
    %v2335 = vpack.c.b16 %v1943, %v1935
    %v2336 = vpack.c.b16 %v1944, %v1936
    %v2337 = vpack.c.b16 %v1953, %v1945
    %v2338 = vpack.c.b16 %v1954, %v1946
    %v2339 = vpack.c.b16 %v1955, %v1947
    %v2340 = vpack.c.b16 %v1956, %v1948
    %v2341 = vpack.c.b16 %v1957, %v1949
    %v2342 = vpack.c.b16 %v1958, %v1950
    %v2343 = vpack.c.b16 %v1959, %v1951
    %v2344 = vpack.c.b16 %v1960, %v1952
    %v2345 = vpack.c.b16 %v1969, %v1961
    %v2346 = vpack.c.b16 %v1970, %v1962
    %v2347 = vpack.c.b16 %v1971, %v1963
    %v2348 = vpack.c.b16 %v1972, %v1964
    %v2349 = vpack.c.b16 %v1973, %v1965
    %v2350 = vpack.c.b16 %v1974, %v1966
    %v2351 = vpack.c.b16 %v1975, %v1967
    %v2352 = vpack.c.b16 %v1976, %v1968
    %v2353 = vpack.c.b16 %v1985, %v1977
    %v2354 = vpack.c.b16 %v1986, %v1978
    %v2355 = vpack.c.b16 %v1987, %v1979
    %v2356 = vpack.c.b16 %v1988, %v1980
    %v2357 = vpack.c.b16 %v1989, %v1981
    %v2358 = vpack.c.b16 %v1990, %v1982
    %v2359 = vpack.c.b16 %v1991, %v1983
    %v2360 = vpack.c.b16 %v1992, %v1984
    %v2361 = vpack.c.b16 %v2001, %v1993
    %v2362 = vpack.c.b16 %v2002, %v1994
    %v2363 = vpack.c.b16 %v2003, %v1995
    %v2364 = vpack.c.b16 %v2004, %v1996
    %v2365 = vpack.c.b16 %v2005, %v1997
    %v2366 = vpack.c.b16 %v2006, %v1998
    %v2367 = vpack.c.b16 %v2007, %v1999
    %v2368 = vpack.c.b16 %v2008, %v2000
    %v2369 = vpack.c.b16 %v2017, %v2009
    %v2370 = vpack.c.b16 %v2018, %v2010
    %v2371 = vpack.c.b16 %v2019, %v2011
    %v2372 = vpack.c.b16 %v2020, %v2012
    %v2373 = vpack.c.b16 %v2021, %v2013
    %v2374 = vpack.c.b16 %v2022, %v2014
    %v2375 = vpack.c.b16 %v2023, %v2015
    %v2376 = vpack.c.b16 %v2024, %v2016
    %v2377 = vpack.c.b16 %v2033, %v2025
    %v2378 = vpack.c.b16 %v2034, %v2026
    %v2379 = vpack.c.b16 %v2035, %v2027
    %v2380 = vpack.c.b16 %v2036, %v2028
    %v2381 = vpack.c.b16 %v2037, %v2029
    %v2382 = vpack.c.b16 %v2038, %v2030
    %v2383 = vpack.c.b16 %v2039, %v2031
    %v2384 = vpack.c.b16 %v2040, %v2032
    %v2385 = vpack.c.b16 %v2049, %v2041
    %v2386 = vpack.c.b16 %v2050, %v2042
    %v2387 = vpack.c.b16 %v2051, %v2043
    %v2388 = vpack.c.b16 %v2052, %v2044
    %v2389 = vpack.c.b16 %v2053, %v2045
    %v2390 = vpack.c.b16 %v2054, %v2046
    %v2391 = vpack.c.b16 %v2055, %v2047
    %v2392 = vpack.c.b16 %v2056, %v2048
    %v2393 = vpack.c.b16 %v2065, %v2057
    %v2394 = vpack.c.b16 %v2066, %v2058
    %v2395 = vpack.c.b16 %v2067, %v2059
    %v2396 = vpack.c.b16 %v2068, %v2060
    %v2397 = vpack.c.b16 %v2069, %v2061
    %v2398 = vpack.c.b16 %v2070, %v2062
    %v2399 = vpack.c.b16 %v2071, %v2063
    %v2400 = vpack.c.b16 %v2072, %v2064
    %v2401 = vpack.c.b16 %v2081, %v2073
    %v2402 = vpack.c.b16 %v2082, %v2074
    %v2403 = vpack.c.b16 %v2083, %v2075
    %v2404 = vpack.c.b16 %v2084, %v2076
    %v2405 = vpack.c.b16 %v2085, %v2077
    %v2406 = vpack.c.b16 %v2086, %v2078
    %v2407 = vpack.c.b16 %v2087, %v2079
    %v2408 = vpack.c.b16 %v2088, %v2080
    %v2409 = vpack.c.b16 %v2097, %v2089
    %v2410 = vpack.c.b16 %v2098, %v2090
    %v2411 = vpack.c.b16 %v2099, %v2091
    %v2412 = vpack.c.b16 %v2100, %v2092
    %v2413 = vpack.c.b16 %v2101, %v2093
    %v2414 = vpack.c.b16 %v2102, %v2094
    %v2415 = vpack.c.b16 %v2103, %v2095
    %v2416 = vpack.c.b16 %v2104, %v2096
    %v2417 = vpack.c.b16 %v2113, %v2105
    %v2418 = vpack.c.b16 %v2114, %v2106
    %v2419 = vpack.c.b16 %v2115, %v2107
    %v2420 = vpack.c.b16 %v2116, %v2108
    %v2421 = vpack.c.b16 %v2117, %v2109
    %v2422 = vpack.c.b16 %v2118, %v2110
    %v2423 = vpack.c.b16 %v2119, %v2111
    %v2424 = vpack.c.b16 %v2120, %v2112
    %v2425 = vpack.c.b16 %v2129, %v2121
    %v2426 = vpack.c.b16 %v2130, %v2122
    %v2427 = vpack.c.b16 %v2131, %v2123
    %v2428 = vpack.c.b16 %v2132, %v2124
    %v2429 = vpack.c.b16 %v2133, %v2125
    %v2430 = vpack.c.b16 %v2134, %v2126
    %v2431 = vpack.c.b16 %v2135, %v2127
    %v2432 = vpack.c.b16 %v2136, %v2128
    %v2433 = vpack.c.b16 %v2145, %v2137
    %v2434 = vpack.c.b16 %v2146, %v2138
    %v2435 = vpack.c.b16 %v2147, %v2139
    %v2436 = vpack.c.b16 %v2148, %v2140
    %v2437 = vpack.c.b16 %v2149, %v2141
    %v2438 = vpack.c.b16 %v2150, %v2142
    %v2439 = vpack.c.b16 %v2151, %v2143
    %v2440 = vpack.c.b16 %v2152, %v2144
    %v2441 = vpack.c.b16 %v2161, %v2153
    %v2442 = vpack.c.b16 %v2162, %v2154
    %v2443 = vpack.c.b16 %v2163, %v2155
    %v2444 = vpack.c.b16 %v2164, %v2156
    %v2445 = vpack.c.b16 %v2165, %v2157
    %v2446 = vpack.c.b16 %v2166, %v2158
    %v2447 = vpack.c.b16 %v2167, %v2159
    %v2448 = vpack.c.b16 %v2168, %v2160
    %v2449 = vpack.c.b16 %v2177, %v2169
    %v2450 = vpack.c.b16 %v2178, %v2170
    %v2451 = vpack.c.b16 %v2179, %v2171
    %v2452 = vpack.c.b16 %v2180, %v2172
    %v2453 = vpack.c.b16 %v2181, %v2173
    %v2454 = vpack.c.b16 %v2182, %v2174
    %v2455 = vpack.c.b16 %v2183, %v2175
    %v2456 = vpack.c.b16 %v2184, %v2176
    %v2457 = vpack.c.b16 %v2193, %v2185
    %v2458 = vpack.c.b16 %v2194, %v2186
    %v2459 = vpack.c.b16 %v2195, %v2187
    %v2460 = vpack.c.b16 %v2196, %v2188
    %v2461 = vpack.c.b16 %v2197, %v2189
    %v2462 = vpack.c.b16 %v2198, %v2190
    %v2463 = vpack.c.b16 %v2199, %v2191
    %v2464 = vpack.c.b16 %v2200, %v2192
    %v2465 = vpack.c.b16 %v2209, %v2201
    %v2466 = vpack.c.b16 %v2210, %v2202
    %v2467 = vpack.c.b16 %v2211, %v2203
    %v2468 = vpack.c.b16 %v2212, %v2204
    %v2469 = vpack.c.b16 %v2213, %v2205
    %v2470 = vpack.c.b16 %v2214, %v2206
    %v2471 = vpack.c.b16 %v2215, %v2207
    %v2472 = vpack.c.b16 %v2216, %v2208
    %2729 = vmatprep.subr.bf16.mxu0 %v2218
    %2730 = vmatpush1.bf16.msra.mxu0 %v2217
    %2731 = vmatprep.subr.bf16.mxu0 %v2226
    %2732 = vmatpush1.bf16.msra.mxu0 %v2225
    %2733 = vmatprep.subr.bf16.mxu0 %v2234
    %2734 = vmatpush1.bf16.msra.mxu0 %v2233
    %2735 = vmatprep.subr.bf16.mxu0 %v2242
    %2736 = vmatpush1.bf16.msra.mxu0 %v2241
    %2737 = vmatprep.subr.bf16.mxu0 %v2250
    %2738 = vmatpush1.bf16.msra.mxu0 %v2249
    %2739 = vmatprep.subr.bf16.mxu0 %v2258
    %2740 = vmatpush1.bf16.msra.mxu0 %v2257
    %2741 = vmatprep.subr.bf16.mxu0 %v2266
    %2742 = vmatpush1.bf16.msra.mxu0 %v2265
    %2743 = vmatprep.subr.bf16.mxu0 %v2274
    %2744 = vmatpush1.bf16.msra.mxu0 %v2273
    %2745 = vmatprep.subr.bf16.mxu0 %v2282
    %2746 = vmatpush1.bf16.msra.mxu0 %v2281
    %2747 = vmatprep.subr.bf16.mxu0 %v2290
    %2748 = vmatpush1.bf16.msra.mxu0 %v2289
    %2749 = vmatprep.subr.bf16.mxu0 %v2298
    %2750 = vmatpush1.bf16.msra.mxu0 %v2297
    %2751 = vmatprep.subr.bf16.mxu0 %v2306
    %2752 = vmatpush1.bf16.msra.mxu0 %v2305
    %2753 = vmatprep.subr.bf16.mxu0 %v2314
    %2754 = vmatpush1.bf16.msra.mxu0 %v2313
    %2755 = vmatprep.subr.bf16.mxu0 %v2322
    %2756 = vmatpush1.bf16.msra.mxu0 %v2321
    %2757 = vmatprep.subr.bf16.mxu0 %v2330
    %2758 = vmatpush1.bf16.msra.mxu0 %v2329
    %2759 = vmatprep.subr.bf16.mxu0 %v2338
    %2760 = vmatpush1.bf16.msra.mxu0 %v2337
    %2761 = vmatprep.mubr.bf16.mxu0 %v1148
    %2762 = vmatmul.mubr.bf16.gmra.mrb[0].mxu0 %v1147
    %v2763 = vpop.f32.mrb[0].mxu0
    %v2764 = vadd.f32 %v1412, %v2763
    %v2765 = vpop.f32.mrb[0].mxu0
    %v2766 = vadd.f32 %v1416, %v2765
    %v2767 = vpop.f32.mrb[0].mxu0
    %v2768 = vpop.f32.mrb[0].mxu0
    %2769 = vdwg.mxu0
    %2770 = vmatprep.subr.bf16.mxu0 %v2346
    %2771 = vmatpush1.bf16.msra.mxu0 %v2345
    %2772 = vmatprep.subr.bf16.mxu0 %v2354
    %2773 = vmatpush1.bf16.msra.mxu0 %v2353
    %2774 = vmatprep.subr.bf16.mxu0 %v2362
    %2775 = vmatpush1.bf16.msra.mxu0 %v2361
    %2776 = vmatprep.subr.bf16.mxu0 %v2370
    %2777 = vmatpush1.bf16.msra.mxu0 %v2369
    %2778 = vmatprep.subr.bf16.mxu0 %v2378
    %2779 = vmatpush1.bf16.msra.mxu0 %v2377
    %2780 = vmatprep.subr.bf16.mxu0 %v2386
    %2781 = vmatpush1.bf16.msra.mxu0 %v2385
    %2782 = vmatprep.subr.bf16.mxu0 %v2394
    %2783 = vmatpush1.bf16.msra.mxu0 %v2393
    %2784 = vmatprep.subr.bf16.mxu0 %v2402
    %2785 = vmatpush1.bf16.msra.mxu0 %v2401
    %2786 = vmatprep.subr.bf16.mxu0 %v2410
    %2787 = vmatpush1.bf16.msra.mxu0 %v2409
    %2788 = vmatprep.subr.bf16.mxu0 %v2418
    %2789 = vmatpush1.bf16.msra.mxu0 %v2417
    %2790 = vmatprep.subr.bf16.mxu0 %v2426
    %2791 = vmatpush1.bf16.msra.mxu0 %v2425
    %2792 = vmatprep.subr.bf16.mxu0 %v2434
    %2793 = vmatpush1.bf16.msra.mxu0 %v2433
    %2794 = vmatprep.subr.bf16.mxu0 %v2442
    %2795 = vmatpush1.bf16.msra.mxu0 %v2441
    %2796 = vmatprep.subr.bf16.mxu0 %v2450
    %2797 = vmatpush1.bf16.msra.mxu0 %v2449
    %2798 = vmatprep.subr.bf16.mxu0 %v2458
    %2799 = vmatpush1.bf16.msra.mxu0 %v2457
    %2800 = vmatprep.subr.bf16.mxu0 %v2466
    %2801 = vmatpush1.bf16.msra.mxu0 %v2465
    %2802 = vmatprep.mubr.bf16.mxu0 %v1150
    %2803 = vmatmul.mubr.bf16.gmra.mrb[0].mxu0 %v1149
    %v2804 = vpop.f32.mrb[0].mxu0
    %v2805 = vadd.f32 %v2764, %v2804
    %v2806 = vpop.f32.mrb[0].mxu0
    %v2807 = vadd.f32 %v2766, %v2806
    %v2808 = vpop.f32.mrb[0].mxu0
    %v2809 = vpop.f32.mrb[0].mxu0
    %2810 = vdwg.mxu0
    %2811 = vmatprep.subr.bf16.mxu0 %v2220
    %2812 = vmatpush1.bf16.msra.mxu0 %v2219
    %2813 = vmatprep.subr.bf16.mxu0 %v2228
    %2814 = vmatpush1.bf16.msra.mxu0 %v2227
    %2815 = vmatprep.subr.bf16.mxu0 %v2236
    %2816 = vmatpush1.bf16.msra.mxu0 %v2235
    %2817 = vmatprep.subr.bf16.mxu0 %v2244
    %2818 = vmatpush1.bf16.msra.mxu0 %v2243
    %2819 = vmatprep.subr.bf16.mxu0 %v2252
    %2820 = vmatpush1.bf16.msra.mxu0 %v2251
    %2821 = vmatprep.subr.bf16.mxu0 %v2260
    %2822 = vmatpush1.bf16.msra.mxu0 %v2259
    %2823 = vmatprep.subr.bf16.mxu0 %v2268
    %2824 = vmatpush1.bf16.msra.mxu0 %v2267
    %2825 = vmatprep.subr.bf16.mxu0 %v2276
    %2826 = vmatpush1.bf16.msra.mxu0 %v2275
    %2827 = vmatprep.subr.bf16.mxu0 %v2284
    %2828 = vmatpush1.bf16.msra.mxu0 %v2283
    %2829 = vmatprep.subr.bf16.mxu0 %v2292
    %2830 = vmatpush1.bf16.msra.mxu0 %v2291
    %2831 = vmatprep.subr.bf16.mxu0 %v2300
    %2832 = vmatpush1.bf16.msra.mxu0 %v2299
    %2833 = vmatprep.subr.bf16.mxu0 %v2308
    %2834 = vmatpush1.bf16.msra.mxu0 %v2307
    %2835 = vmatprep.subr.bf16.mxu0 %v2316
    %2836 = vmatpush1.bf16.msra.mxu0 %v2315
    %2837 = vmatprep.subr.bf16.mxu0 %v2324
    %2838 = vmatpush1.bf16.msra.mxu0 %v2323
    %2839 = vmatprep.subr.bf16.mxu0 %v2332
    %2840 = vmatpush1.bf16.msra.mxu0 %v2331
    %2841 = vmatprep.subr.bf16.mxu0 %v2340
    %2842 = vmatpush1.bf16.msra.mxu0 %v2339
    %2843 = vmatprep.mubr.bf16.mxu0 %v1148
    %2844 = vmatmul.mubr.bf16.gmra.mrb[0].mxu0 %v1147
    %v2845 = vpop.f32.mrb[0].mxu0
    %v2846 = vadd.f32 %v1420, %v2845
    %v2847 = vpop.f32.mrb[0].mxu0
    %v2848 = vadd.f32 %v1424, %v2847
    %v2849 = vpop.f32.mrb[0].mxu0
    %v2850 = vpop.f32.mrb[0].mxu0
    %2851 = vdwg.mxu0
    %2852 = vmatprep.subr.bf16.mxu0 %v2348
    %2853 = vmatpush1.bf16.msra.mxu0 %v2347
    %2854 = vmatprep.subr.bf16.mxu0 %v2356
    %2855 = vmatpush1.bf16.msra.mxu0 %v2355
    %2856 = vmatprep.subr.bf16.mxu0 %v2364
    %2857 = vmatpush1.bf16.msra.mxu0 %v2363
    %2858 = vmatprep.subr.bf16.mxu0 %v2372
    %2859 = vmatpush1.bf16.msra.mxu0 %v2371
    %2860 = vmatprep.subr.bf16.mxu0 %v2380
    %2861 = vmatpush1.bf16.msra.mxu0 %v2379
    %2862 = vmatprep.subr.bf16.mxu0 %v2388
    %2863 = vmatpush1.bf16.msra.mxu0 %v2387
    %2864 = vmatprep.subr.bf16.mxu0 %v2396
    %2865 = vmatpush1.bf16.msra.mxu0 %v2395
    %2866 = vmatprep.subr.bf16.mxu0 %v2404
    %2867 = vmatpush1.bf16.msra.mxu0 %v2403
    %2868 = vmatprep.subr.bf16.mxu0 %v2412
    %2869 = vmatpush1.bf16.msra.mxu0 %v2411
    %2870 = vmatprep.subr.bf16.mxu0 %v2420
    %2871 = vmatpush1.bf16.msra.mxu0 %v2419
    %2872 = vmatprep.subr.bf16.mxu0 %v2428
    %2873 = vmatpush1.bf16.msra.mxu0 %v2427
    %2874 = vmatprep.subr.bf16.mxu0 %v2436
    %2875 = vmatpush1.bf16.msra.mxu0 %v2435
    %2876 = vmatprep.subr.bf16.mxu0 %v2444
    %2877 = vmatpush1.bf16.msra.mxu0 %v2443
    %2878 = vmatprep.subr.bf16.mxu0 %v2452
    %2879 = vmatpush1.bf16.msra.mxu0 %v2451
    %2880 = vmatprep.subr.bf16.mxu0 %v2460
    %2881 = vmatpush1.bf16.msra.mxu0 %v2459
    %2882 = vmatprep.subr.bf16.mxu0 %v2468
    %2883 = vmatpush1.bf16.msra.mxu0 %v2467
    %2884 = vmatprep.mubr.bf16.mxu0 %v1150
    %2885 = vmatmul.mubr.bf16.gmra.mrb[0].mxu0 %v1149
    %v2886 = vpop.f32.mrb[0].mxu0
    %v2887 = vadd.f32 %v2846, %v2886
    %v2888 = vpop.f32.mrb[0].mxu0
    %v2889 = vadd.f32 %v2848, %v2888
    %v2890 = vpop.f32.mrb[0].mxu0
    %v2891 = vpop.f32.mrb[0].mxu0
    %2892 = vdwg.mxu0
    %2893 = vmatprep.subr.bf16.mxu0 %v2222
    %2894 = vmatpush1.bf16.msra.mxu0 %v2221
    %2895 = vmatprep.subr.bf16.mxu0 %v2230
    %2896 = vmatpush1.bf16.msra.mxu0 %v2229
    %2897 = vmatprep.subr.bf16.mxu0 %v2238
    %2898 = vmatpush1.bf16.msra.mxu0 %v2237
    %2899 = vmatprep.subr.bf16.mxu0 %v2246
    %2900 = vmatpush1.bf16.msra.mxu0 %v2245
    %2901 = vmatprep.subr.bf16.mxu0 %v2254
    %2902 = vmatpush1.bf16.msra.mxu0 %v2253
    %2903 = vmatprep.subr.bf16.mxu0 %v2262
    %2904 = vmatpush1.bf16.msra.mxu0 %v2261
    %2905 = vmatprep.subr.bf16.mxu0 %v2270
    %2906 = vmatpush1.bf16.msra.mxu0 %v2269
    %2907 = vmatprep.subr.bf16.mxu0 %v2278
    %2908 = vmatpush1.bf16.msra.mxu0 %v2277
    %2909 = vmatprep.subr.bf16.mxu0 %v2286
    %2910 = vmatpush1.bf16.msra.mxu0 %v2285
    %2911 = vmatprep.subr.bf16.mxu0 %v2294
    %2912 = vmatpush1.bf16.msra.mxu0 %v2293
    %2913 = vmatprep.subr.bf16.mxu0 %v2302
    %2914 = vmatpush1.bf16.msra.mxu0 %v2301
    %2915 = vmatprep.subr.bf16.mxu0 %v2310
    %2916 = vmatpush1.bf16.msra.mxu0 %v2309
    %2917 = vmatprep.subr.bf16.mxu0 %v2318
    %2918 = vmatpush1.bf16.msra.mxu0 %v2317
    %2919 = vmatprep.subr.bf16.mxu0 %v2326
    %2920 = vmatpush1.bf16.msra.mxu0 %v2325
    %2921 = vmatprep.subr.bf16.mxu0 %v2334
    %2922 = vmatpush1.bf16.msra.mxu0 %v2333
    %2923 = vmatprep.subr.bf16.mxu0 %v2342
    %2924 = vmatpush1.bf16.msra.mxu0 %v2341
    %2925 = vmatprep.mubr.bf16.mxu0 %v1148
    %2926 = vmatmul.mubr.bf16.gmra.mrb[0].mxu0 %v1147
    %v2927 = vpop.f32.mrb[0].mxu0
    %v2928 = vadd.f32 %v1428, %v2927
    %v2929 = vpop.f32.mrb[0].mxu0
    %v2930 = vadd.f32 %v1432, %v2929
    %v2931 = vpop.f32.mrb[0].mxu0
    %v2932 = vpop.f32.mrb[0].mxu0
    %2933 = vdwg.mxu0
    %2934 = vmatprep.subr.bf16.mxu0 %v2350
    %2935 = vmatpush1.bf16.msra.mxu0 %v2349
    %2936 = vmatprep.subr.bf16.mxu0 %v2358
    %2937 = vmatpush1.bf16.msra.mxu0 %v2357
    %2938 = vmatprep.subr.bf16.mxu0 %v2366
    %2939 = vmatpush1.bf16.msra.mxu0 %v2365
    %2940 = vmatprep.subr.bf16.mxu0 %v2374
    %2941 = vmatpush1.bf16.msra.mxu0 %v2373
    %2942 = vmatprep.subr.bf16.mxu0 %v2382
    %2943 = vmatpush1.bf16.msra.mxu0 %v2381
    %2944 = vmatprep.subr.bf16.mxu0 %v2390
    %2945 = vmatpush1.bf16.msra.mxu0 %v2389
    %2946 = vmatprep.subr.bf16.mxu0 %v2398
    %2947 = vmatpush1.bf16.msra.mxu0 %v2397
    %2948 = vmatprep.subr.bf16.mxu0 %v2406
    %2949 = vmatpush1.bf16.msra.mxu0 %v2405
    %2950 = vmatprep.subr.bf16.mxu0 %v2414
    %2951 = vmatpush1.bf16.msra.mxu0 %v2413
    %2952 = vmatprep.subr.bf16.mxu0 %v2422
    %2953 = vmatpush1.bf16.msra.mxu0 %v2421
    %2954 = vmatprep.subr.bf16.mxu0 %v2430
    %2955 = vmatpush1.bf16.msra.mxu0 %v2429
    %2956 = vmatprep.subr.bf16.mxu0 %v2438
    %2957 = vmatpush1.bf16.msra.mxu0 %v2437
    %2958 = vmatprep.subr.bf16.mxu0 %v2446
    %2959 = vmatpush1.bf16.msra.mxu0 %v2445
    %2960 = vmatprep.subr.bf16.mxu0 %v2454
    %2961 = vmatpush1.bf16.msra.mxu0 %v2453
    %2962 = vmatprep.subr.bf16.mxu0 %v2462
    %2963 = vmatpush1.bf16.msra.mxu0 %v2461
    %2964 = vmatprep.subr.bf16.mxu0 %v2470
    %2965 = vmatpush1.bf16.msra.mxu0 %v2469
    %2966 = vmatprep.mubr.bf16.mxu0 %v1150
    %2967 = vmatmul.mubr.bf16.gmra.mrb[0].mxu0 %v1149
    %v2968 = vpop.f32.mrb[0].mxu0
    %v2969 = vadd.f32 %v2928, %v2968
    %v2970 = vpop.f32.mrb[0].mxu0
    %v2971 = vadd.f32 %v2930, %v2970
    %v2972 = vpop.f32.mrb[0].mxu0
    %v2973 = vpop.f32.mrb[0].mxu0
    %2974 = vdwg.mxu0
    %2975 = vmatprep.subr.bf16.mxu0 %v2224
    %2976 = vmatpush1.bf16.msra.mxu0 %v2223
    %2977 = vmatprep.subr.bf16.mxu0 %v2232
    %2978 = vmatpush1.bf16.msra.mxu0 %v2231
    %2979 = vmatprep.subr.bf16.mxu0 %v2240
    %2980 = vmatpush1.bf16.msra.mxu0 %v2239
    %2981 = vmatprep.subr.bf16.mxu0 %v2248
    %2982 = vmatpush1.bf16.msra.mxu0 %v2247
    %2983 = vmatprep.subr.bf16.mxu0 %v2256
    %2984 = vmatpush1.bf16.msra.mxu0 %v2255
    %2985 = vmatprep.subr.bf16.mxu0 %v2264
    %2986 = vmatpush1.bf16.msra.mxu0 %v2263
    %2987 = vmatprep.subr.bf16.mxu0 %v2272
    %2988 = vmatpush1.bf16.msra.mxu0 %v2271
    %2989 = vmatprep.subr.bf16.mxu0 %v2280
    %2990 = vmatpush1.bf16.msra.mxu0 %v2279
    %2991 = vmatprep.subr.bf16.mxu0 %v2288
    %2992 = vmatpush1.bf16.msra.mxu0 %v2287
    %2993 = vmatprep.subr.bf16.mxu0 %v2296
    %2994 = vmatpush1.bf16.msra.mxu0 %v2295
    %2995 = vmatprep.subr.bf16.mxu0 %v2304
    %2996 = vmatpush1.bf16.msra.mxu0 %v2303
    %2997 = vmatprep.subr.bf16.mxu0 %v2312
    %2998 = vmatpush1.bf16.msra.mxu0 %v2311
    %2999 = vmatprep.subr.bf16.mxu0 %v2320
    %3000 = vmatpush1.bf16.msra.mxu0 %v2319
    %3001 = vmatprep.subr.bf16.mxu0 %v2328
    %3002 = vmatpush1.bf16.msra.mxu0 %v2327
    %3003 = vmatprep.subr.bf16.mxu0 %v2336
    %3004 = vmatpush1.bf16.msra.mxu0 %v2335
    %3005 = vmatprep.subr.bf16.mxu0 %v2344
    %3006 = vmatpush1.bf16.msra.mxu0 %v2343
    %3007 = vmatprep.mubr.bf16.mxu0 %v1148
    %3008 = vmatmul.mubr.bf16.gmra.mrb[0].mxu0 %v1147
    %v3009 = vpop.f32.mrb[0].mxu0
    %v3010 = vadd.f32 %v1436, %v3009
    %v3011 = vpop.f32.mrb[0].mxu0
    %v3012 = vadd.f32 %v1440, %v3011
    %v3013 = vpop.f32.mrb[0].mxu0
    %v3014 = vpop.f32.mrb[0].mxu0
    %3015 = vdwg.mxu0
    %3016 = vmatprep.subr.bf16.mxu0 %v2352
    %3017 = vmatpush1.bf16.msra.mxu0 %v2351
    %3018 = vmatprep.subr.bf16.mxu0 %v2360
    %3019 = vmatpush1.bf16.msra.mxu0 %v2359
    %3020 = vmatprep.subr.bf16.mxu0 %v2368
    %3021 = vmatpush1.bf16.msra.mxu0 %v2367
    %3022 = vmatprep.subr.bf16.mxu0 %v2376
    %3023 = vmatpush1.bf16.msra.mxu0 %v2375
    %3024 = vmatprep.subr.bf16.mxu0 %v2384
    %3025 = vmatpush1.bf16.msra.mxu0 %v2383
    %3026 = vmatprep.subr.bf16.mxu0 %v2392
    %3027 = vmatpush1.bf16.msra.mxu0 %v2391
    %3028 = vmatprep.subr.bf16.mxu0 %v2400
    %3029 = vmatpush1.bf16.msra.mxu0 %v2399
    %3030 = vmatprep.subr.bf16.mxu0 %v2408
    %3031 = vmatpush1.bf16.msra.mxu0 %v2407
    %3032 = vmatprep.subr.bf16.mxu0 %v2416
    %3033 = vmatpush1.bf16.msra.mxu0 %v2415
    %3034 = vmatprep.subr.bf16.mxu0 %v2424
    %3035 = vmatpush1.bf16.msra.mxu0 %v2423
    %3036 = vmatprep.subr.bf16.mxu0 %v2432
    %3037 = vmatpush1.bf16.msra.mxu0 %v2431
    %3038 = vmatprep.subr.bf16.mxu0 %v2440
    %3039 = vmatpush1.bf16.msra.mxu0 %v2439
    %3040 = vmatprep.subr.bf16.mxu0 %v2448
    %3041 = vmatpush1.bf16.msra.mxu0 %v2447
    %3042 = vmatprep.subr.bf16.mxu0 %v2456
    %3043 = vmatpush1.bf16.msra.mxu0 %v2455
    %3044 = vmatprep.subr.bf16.mxu0 %v2464
    %3045 = vmatpush1.bf16.msra.mxu0 %v2463
    %3046 = vmatprep.subr.bf16.mxu0 %v2472
    %3047 = vmatpush1.bf16.msra.mxu0 %v2471
    %3048 = vmatprep.mubr.bf16.mxu0 %v1150
    %3049 = vmatmul.mubr.bf16.gmra.mrb[0].mxu0 %v1149
    %v3050 = vpop.f32.mrb[0].mxu0
    %v3051 = vadd.f32 %v3010, %v3050
    %v3052 = vpop.f32.mrb[0].mxu0
    %v3053 = vadd.f32 %v3012, %v3052
    %v3054 = vpop.f32.mrb[0].mxu0
    %v3055 = vpop.f32.mrb[0].mxu0
    %3056 = vdwg.mxu0
    %v3057 = vrot.slane %v2805, 4
    %v3058 = vadd.f32 %v2805, %v3057
    %v3059 = vrot.slane %v3058, 2
    %v3060 = vadd.f32 %v3058, %v3059
    %v3061 = vrot.slane %v3060, 1
    %v3062 = vadd.f32 %v3060, %v3061
    %v3063 = vrot.slane %v2807, 4
    %v3064 = vadd.f32 %v2807, %v3063
    %v3065 = vrot.slane %v3064, 2
    %v3066 = vadd.f32 %v3064, %v3065
    %v3067 = vrot.slane %v3066, 1
    %v3068 = vadd.f32 %v3066, %v3067
    %v3069 = vrot.slane %v2887, 4
    %v3070 = vadd.f32 %v2887, %v3069
    %v3071 = vrot.slane %v3070, 2
    %v3072 = vadd.f32 %v3070, %v3071
    %v3073 = vrot.slane %v3072, 1
    %v3074 = vadd.f32 %v3072, %v3073
    %v3075 = vrot.slane %v2889, 4
    %v3076 = vadd.f32 %v2889, %v3075
    %v3077 = vrot.slane %v3076, 2
    %v3078 = vadd.f32 %v3076, %v3077
    %v3079 = vrot.slane %v3078, 1
    %v3080 = vadd.f32 %v3078, %v3079
    %v3081 = vrot.slane %v2969, 4
    %v3082 = vadd.f32 %v2969, %v3081
    %v3083 = vrot.slane %v3082, 2
    %v3084 = vadd.f32 %v3082, %v3083
    %v3085 = vrot.slane %v3084, 1
    %v3086 = vadd.f32 %v3084, %v3085
    %v3087 = vrot.slane %v2971, 4
    %v3088 = vadd.f32 %v2971, %v3087
    %v3089 = vrot.slane %v3088, 2
    %v3090 = vadd.f32 %v3088, %v3089
    %v3091 = vrot.slane %v3090, 1
    %v3092 = vadd.f32 %v3090, %v3091
    %v3093 = vrot.slane %v3051, 4
    %v3094 = vadd.f32 %v3051, %v3093
    %v3095 = vrot.slane %v3094, 2
    %v3096 = vadd.f32 %v3094, %v3095
    %v3097 = vrot.slane %v3096, 1
    %v3098 = vadd.f32 %v3096, %v3097
    %v3099 = vrot.slane %v3053, 4
    %v3100 = vadd.f32 %v3053, %v3099
    %v3101 = vrot.slane %v3100, 2
    %v3102 = vadd.f32 %v3100, %v3101
    %v3103 = vrot.slane %v3102, 1
    %v3104 = vadd.f32 %v3102, %v3103
    %v3105 = vmul.f32 %v2805, %v2805
    %v3106 = vmul.f32 %v2807, %v2807
    %v3107 = vmul.f32 %v2887, %v2887
    %v3108 = vmul.f32 %v2889, %v2889
    %v3109 = vmul.f32 %v2969, %v2969
    %v3110 = vmul.f32 %v2971, %v2971
    %v3111 = vmul.f32 %v3051, %v3051
    %v3112 = vmul.f32 %v3053, %v3053
    %v3113 = vrot.slane %v3105, 4
    %v3114 = vadd.f32 %v3105, %v3113
    %v3115 = vrot.slane %v3114, 2
    %v3116 = vadd.f32 %v3114, %v3115
    %v3117 = vrot.slane %v3116, 1
    %v3118 = vadd.f32 %v3116, %v3117
    %v3119 = vrot.slane %v3106, 4
    %v3120 = vadd.f32 %v3106, %v3119
    %v3121 = vrot.slane %v3120, 2
    %v3122 = vadd.f32 %v3120, %v3121
    %v3123 = vrot.slane %v3122, 1
    %v3124 = vadd.f32 %v3122, %v3123
    %v3125 = vrot.slane %v3107, 4
    %v3126 = vadd.f32 %v3107, %v3125
    %v3127 = vrot.slane %v3126, 2
    %v3128 = vadd.f32 %v3126, %v3127
    %v3129 = vrot.slane %v3128, 1
    %v3130 = vadd.f32 %v3128, %v3129
    %v3131 = vrot.slane %v3108, 4
    %v3132 = vadd.f32 %v3108, %v3131
    %v3133 = vrot.slane %v3132, 2
    %v3134 = vadd.f32 %v3132, %v3133
    %v3135 = vrot.slane %v3134, 1
    %v3136 = vadd.f32 %v3134, %v3135
    %v3137 = vrot.slane %v3109, 4
    %v3138 = vadd.f32 %v3109, %v3137
    %v3139 = vrot.slane %v3138, 2
    %v3140 = vadd.f32 %v3138, %v3139
    %v3141 = vrot.slane %v3140, 1
    %v3142 = vadd.f32 %v3140, %v3141
    %v3143 = vrot.slane %v3110, 4
    %v3144 = vadd.f32 %v3110, %v3143
    %v3145 = vrot.slane %v3144, 2
    %v3146 = vadd.f32 %v3144, %v3145
    %v3147 = vrot.slane %v3146, 1
    %v3148 = vadd.f32 %v3146, %v3147
    %v3149 = vrot.slane %v3111, 4
    %v3150 = vadd.f32 %v3111, %v3149
    %v3151 = vrot.slane %v3150, 2
    %v3152 = vadd.f32 %v3150, %v3151
    %v3153 = vrot.slane %v3152, 1
    %v3154 = vadd.f32 %v3152, %v3153
    %v3155 = vrot.slane %v3112, 4
    %v3156 = vadd.f32 %v3112, %v3155
    %v3157 = vrot.slane %v3156, 2
    %v3158 = vadd.f32 %v3156, %v3157
    %v3159 = vrot.slane %v3158, 1
    %v3160 = vadd.f32 %v3158, %v3159
    %v3161 = vmul.f32 %v3062, 0.125
    %v3162 = vmul.f32 %v3068, 0.125
    %v3163 = vmul.f32 %v3074, 0.125
    %v3164 = vmul.f32 %v3080, 0.125
    %v3165 = vmul.f32 %v3086, 0.125
    %v3166 = vmul.f32 %v3092, 0.125
    %v3167 = vmul.f32 %v3098, 0.125
    %v3168 = vmul.f32 %v3104, 0.125
    %v3169 = vmul.f32 %v3118, 0.125
    %v3170 = vmul.f32 %v3124, 0.125
    %v3171 = vmul.f32 %v3130, 0.125
    %v3172 = vmul.f32 %v3136, 0.125
    %v3173 = vmul.f32 %v3142, 0.125
    %v3174 = vmul.f32 %v3148, 0.125
    %v3175 = vmul.f32 %v3154, 0.125
    %v3176 = vmul.f32 %v3160, 0.125
    %v3177 = vmul.f32 %v3161, %v3161
    %v3178 = vmul.f32 %v3162, %v3162
    %v3179 = vmul.f32 %v3163, %v3163
    %v3180 = vmul.f32 %v3164, %v3164
    %v3181 = vmul.f32 %v3165, %v3165
    %v3182 = vmul.f32 %v3166, %v3166
    %v3183 = vmul.f32 %v3167, %v3167
    %v3184 = vmul.f32 %v3168, %v3168
    %v3185 = vsub.f32 %v3169, %v3177
    %v3186 = vsub.f32 %v3170, %v3178
    %v3187 = vsub.f32 %v3171, %v3179
    %v3188 = vsub.f32 %v3172, %v3180
    %v3189 = vsub.f32 %v3173, %v3181
    %v3190 = vsub.f32 %v3174, %v3182
    %v3191 = vsub.f32 %v3175, %v3183
    %v3192 = vsub.f32 %v3176, %v3184
    %v3193 = vld [vmem:[#allocation13 + $0x1b] sm:$0xff]
    %v3194 = vadd.f32 %v3185, 0.8
    %v3195 = vadd.f32 %v3186, 0.8
    %v3196 = vadd.f32 %v3187, 0.8
    %v3197 = vadd.f32 %v3188, 0.8
    %v3198 = vadd.f32 %v3189, 0.8
    %v3199 = vadd.f32 %v3190, 0.8
    %v3200 = vadd.f32 %v3191, 0.8
    %v3201 = vadd.f32 %v3192, 0.8
    %v3202 = vrsqrt.pop %v3194
    %v3203 = vrsqrt.pop %v3195
    %v3204 = vrsqrt.pop %v3196
    %v3205 = vrsqrt.pop %v3197
    %v3206 = vrsqrt.pop %v3198
    %v3207 = vrsqrt.pop %v3199
    %v3208 = vrsqrt.pop %v3200
    %v3209 = vrsqrt.pop %v3201
    %v3218 = vcombine.low %v3202, %v3203
    %v3219 = vcombine.low %v3204, %v3205
    %v3220 = vcombine.low %v3206, %v3207
    %v3221 = vcombine.low %v3208, %v3209
    %v3223 = vunpack.c.l.s4 1966171168
    %v3224 = vunpack.c.0.s8 %v3223
    %v3225 = vlaneseq
    %v3226 = vshrl.u32 %v3225, 7
    %v3227 = vsub.s32 %v3224, %v3226
    %v3228 = vrot.slane %v3218, %v3227
    %v3230 = vunpack.c.l.s4 1966171168
    %v3231 = vunpack.c.0.s8 %v3230
    %v3232 = vlaneseq
    %v3233 = vshrl.u32 %v3232, 7
    %v3234 = vsub.s32 %v3231, %v3233
    %v3235 = vrot.slane %v3219, %v3234
    %v3237 = vunpack.c.l.s4 1966171168
    %v3238 = vunpack.c.0.s8 %v3237
    %v3239 = vlaneseq
    %v3240 = vshrl.u32 %v3239, 7
    %v3241 = vsub.s32 %v3238, %v3240
    %v3242 = vrot.slane %v3220, %v3241
    %v3244 = vunpack.c.l.s4 1966171168
    %v3245 = vunpack.c.0.s8 %v3244
    %v3246 = vlaneseq
    %v3247 = vshrl.u32 %v3246, 7
    %v3248 = vsub.s32 %v3245, %v3247
    %v3249 = vrot.slane %v3221, %v3248
    %v3250 = vcombine.low %v3228, %v3235
    %v3251 = vcombine.low %v3242, %v3249
    %v3253 = vunpack.c.l.s4 1966171168
    %v3254 = vunpack.c.0.s8 %v3253
    %v3255 = vlaneseq
    %v3256 = vshrl.u32 %v3255, 7
    %v3257 = vsub.s32 %v3254, %v3256
    %v3258 = vrot.slane %v3250, %v3257
    %v3260 = vunpack.c.l.s4 1966171168
    %v3261 = vunpack.c.0.s8 %v3260
    %v3262 = vlaneseq
    %v3263 = vshrl.u32 %v3262, 7
    %v3264 = vsub.s32 %v3261, %v3263
    %v3265 = vrot.slane %v3251, %v3264
    %v3266 = vcombine.low %v3258, %v3265
    %v3268 = vmul.f32 %v3193, %v3266
    %v3269 = vld [vmem:[#allocation13 + $0x23] sm:$0xff]
    %v3271 = vlaneseq
    %v3272 = vshrl.u32 %v3271, 7
    %v3273 = vsub.s32 0, %v3272
    %v3274 = vrot.slane %v3268, %v3273
    %v3275 = vlaneseq
    %v3276 = vshrl.u32 %v3275, 7
    %v3277 = vsub.s32 1, %v3276
    %v3278 = vrot.slane %v3268, %v3277
    %v3279 = vlaneseq
    %v3280 = vshrl.u32 %v3279, 7
    %v3281 = vsub.s32 2, %v3280
    %v3282 = vrot.slane %v3268, %v3281
    %v3283 = vlaneseq
    %v3284 = vshrl.u32 %v3283, 7
    %v3285 = vsub.s32 3, %v3284
    %v3286 = vrot.slane %v3268, %v3285
    %v3287 = vlaneseq
    %v3288 = vshrl.u32 %v3287, 7
    %v3289 = vsub.s32 4, %v3288
    %v3290 = vrot.slane %v3268, %v3289
    %v3291 = vlaneseq
    %v3292 = vshrl.u32 %v3291, 7
    %v3293 = vsub.s32 5, %v3292
    %v3294 = vrot.slane %v3268, %v3293
    %v3295 = vlaneseq
    %v3296 = vshrl.u32 %v3295, 7
    %v3297 = vsub.s32 6, %v3296
    %v3298 = vrot.slane %v3268, %v3297
    %v3299 = vlaneseq
    %v3300 = vshrl.u32 %v3299, 7
    %v3301 = vsub.s32 7, %v3300
    %v3302 = vrot.slane %v3268, %v3301
    %v3311 = vmul.f32 %v3161, %v3274
    %v3312 = vmul.f32 %v3162, %v3278
    %v3313 = vmul.f32 %v3163, %v3282
    %v3314 = vmul.f32 %v3164, %v3286
    %v3315 = vmul.f32 %v3165, %v3290
    %v3316 = vmul.f32 %v3166, %v3294
    %v3317 = vmul.f32 %v3167, %v3298
    %v3318 = vmul.f32 %v3168, %v3302
    %v3327 = vcombine.low %v3311, %v3312
    %v3328 = vcombine.low %v3313, %v3314
    %v3329 = vcombine.low %v3315, %v3316
    %v3330 = vcombine.low %v3317, %v3318
    %v3332 = vunpack.c.l.s4 1966171168
    %v3333 = vunpack.c.0.s8 %v3332
    %v3334 = vlaneseq
    %v3335 = vshrl.u32 %v3334, 7
    %v3336 = vsub.s32 %v3333, %v3335
    %v3337 = vrot.slane %v3327, %v3336
    %v3339 = vunpack.c.l.s4 1966171168
    %v3340 = vunpack.c.0.s8 %v3339
    %v3341 = vlaneseq
    %v3342 = vshrl.u32 %v3341, 7
    %v3343 = vsub.s32 %v3340, %v3342
    %v3344 = vrot.slane %v3328, %v3343
    %v3346 = vunpack.c.l.s4 1966171168
    %v3347 = vunpack.c.0.s8 %v3346
    %v3348 = vlaneseq
    %v3349 = vshrl.u32 %v3348, 7
    %v3350 = vsub.s32 %v3347, %v3349
    %v3351 = vrot.slane %v3329, %v3350
    %v3353 = vunpack.c.l.s4 1966171168
    %v3354 = vunpack.c.0.s8 %v3353
    %v3355 = vlaneseq
    %v3356 = vshrl.u32 %v3355, 7
    %v3357 = vsub.s32 %v3354, %v3356
    %v3358 = vrot.slane %v3330, %v3357
    %v3359 = vcombine.low %v3337, %v3344
    %v3360 = vcombine.low %v3351, %v3358
    %v3362 = vunpack.c.l.s4 1966171168
    %v3363 = vunpack.c.0.s8 %v3362
    %v3364 = vlaneseq
    %v3365 = vshrl.u32 %v3364, 7
    %v3366 = vsub.s32 %v3363, %v3365
    %v3367 = vrot.slane %v3359, %v3366
    %v3369 = vunpack.c.l.s4 1966171168
    %v3370 = vunpack.c.0.s8 %v3369
    %v3371 = vlaneseq
    %v3372 = vshrl.u32 %v3371, 7
    %v3373 = vsub.s32 %v3370, %v3372
    %v3374 = vrot.slane %v3360, %v3373
    %v3375 = vcombine.low %v3367, %v3374
    %v3377 = vsub.f32 %v3269, %v3375
    %v3378 = vmul.f32 %v2805, %v3274
    %v3379 = vmul.f32 %v2807, %v3278
    %v3380 = vmul.f32 %v2887, %v3282
    %v3381 = vmul.f32 %v2889, %v3286
    %v3382 = vmul.f32 %v2969, %v3290
    %v3383 = vmul.f32 %v2971, %v3294
    %v3384 = vmul.f32 %v3051, %v3298
    %v3385 = vmul.f32 %v3053, %v3302
    %v3387 = vlaneseq
    %v3388 = vshrl.u32 %v3387, 7
    %v3389 = vsub.s32 0, %v3388
    %v3390 = vrot.slane %v3377, %v3389
    %v3391 = vlaneseq
    %v3392 = vshrl.u32 %v3391, 7
    %v3393 = vsub.s32 1, %v3392
    %v3394 = vrot.slane %v3377, %v3393
    %v3395 = vlaneseq
    %v3396 = vshrl.u32 %v3395, 7
    %v3397 = vsub.s32 2, %v3396
    %v3398 = vrot.slane %v3377, %v3397
    %v3399 = vlaneseq
    %v3400 = vshrl.u32 %v3399, 7
    %v3401 = vsub.s32 3, %v3400
    %v3402 = vrot.slane %v3377, %v3401
    %v3403 = vlaneseq
    %v3404 = vshrl.u32 %v3403, 7
    %v3405 = vsub.s32 4, %v3404
    %v3406 = vrot.slane %v3377, %v3405
    %v3407 = vlaneseq
    %v3408 = vshrl.u32 %v3407, 7
    %v3409 = vsub.s32 5, %v3408
    %v3410 = vrot.slane %v3377, %v3409
    %v3411 = vlaneseq
    %v3412 = vshrl.u32 %v3411, 7
    %v3413 = vsub.s32 6, %v3412
    %v3414 = vrot.slane %v3377, %v3413
    %v3415 = vlaneseq
    %v3416 = vshrl.u32 %v3415, 7
    %v3417 = vsub.s32 7, %v3416
    %v3418 = vrot.slane %v3377, %v3417
    %v3427 = vadd.f32 %v3378, %v3390
    %v3428 = vadd.f32 %v3379, %v3394
    %v3429 = vadd.f32 %v3380, %v3398
    %v3430 = vadd.f32 %v3381, %v3402
    %v3431 = vadd.f32 %v3382, %v3406
    %v3432 = vadd.f32 %v3383, %v3410
    %v3433 = vadd.f32 %v3384, %v3414
    %v3434 = vadd.f32 %v3385, %v3418
    %vm3435 = vcmp.gt.f32.partialorder %v3427, 0.0
    %vm3436 = vcmp.gt.f32.partialorder %v3428, 0.0
    %vm3437 = vcmp.gt.f32.partialorder %v3429, 0.0
    %vm3438 = vcmp.gt.f32.partialorder %v3430, 0.0
    %vm3439 = vcmp.gt.f32.partialorder %v3431, 0.0
    %vm3440 = vcmp.gt.f32.partialorder %v3432, 0.0
    %vm3441 = vcmp.gt.f32.partialorder %v3433, 0.0
    %vm3442 = vcmp.gt.f32.partialorder %v3434, 0.0
    %v3443 = vmul.f32 %v3427, 0.2
    %v3444 = vmul.f32 %v3428, 0.2
    %v3445 = vmul.f32 %v3429, 0.2
    %v3446 = vmul.f32 %v3430, 0.2
    %v3447 = vmul.f32 %v3431, 0.2
    %v3448 = vmul.f32 %v3432, 0.2
    %v3449 = vmul.f32 %v3433, 0.2
    %v3450 = vmul.f32 %v3434, 0.2
    %v3451 = vsel %vm3435, %v3427, %v3443
    %v3452 = vsel %vm3436, %v3428, %v3444
    %v3453 = vsel %vm3437, %v3429, %v3445
    %v3454 = vsel %vm3438, %v3430, %v3446
    %v3455 = vsel %vm3439, %v3431, %v3447
    %v3456 = vsel %vm3440, %v3432, %v3448
    %v3457 = vsel %vm3441, %v3433, %v3449
    %v3458 = vsel %vm3442, %v3434, %v3450
    %v3459 = vpack.c.bf16 %v3451, %v3451
    %v3460 = vpack.c.bf16 %v3452, %v3452
    %v3461 = vpack.c.bf16 %v3453, %v3453
    %v3462 = vpack.c.bf16 %v3454, %v3454
    %v3463 = vpack.c.bf16 %v3455, %v3455
    %v3464 = vpack.c.bf16 %v3456, %v3456
    %v3465 = vpack.c.bf16 %v3457, %v3457
    %v3466 = vpack.c.bf16 %v3458, %v3458
    %v3467 = vld [vmem:[#allocation11] sm:$0xff]
    %v3468 = vld [vmem:[#allocation11 + $0x8] sm:$0xff]
    %v3469 = vld [vmem:[#allocation11 + $0x10] sm:$0xff]
    %v3470 = vld [vmem:[#allocation11 + $0x18] sm:$0xff]
    %v3471 = vld [vmem:[#allocation11 + $0x20] sm:$0xff]
    %v3472 = vld [vmem:[#allocation11 + $0x28] sm:$0xff]
    %v3473 = vld [vmem:[#allocation11 + $0x30] sm:$0xff]
    %v3474 = vld [vmem:[#allocation11 + $0x38] sm:$0xff]
    %v3475 = vld [vmem:[#allocation11 + $0x40] sm:$0xff]
    %v3476 = vld [vmem:[#allocation11 + $0x48] sm:$0xff]
    %v3477 = vld [vmem:[#allocation11 + $0x50] sm:$0xff]
    %v3478 = vld [vmem:[#allocation11 + $0x58] sm:$0xff]
    %v3479 = vld [vmem:[#allocation11 + $0x60] sm:$0xff]
    %v3480 = vld [vmem:[#allocation11 + $0x68] sm:$0xff]
    %v3481 = vld [vmem:[#allocation11 + $0x70] sm:$0xff]
    %v3482 = vld [vmem:[#allocation11 + $0x78] sm:$0xff]
    %v3483 = vld [vmem:[#allocation11 + $0x80] sm:$0xff]
    %v3484 = vld [vmem:[#allocation11 + $0x88] sm:$0xff]
    %v3485 = vld [vmem:[#allocation11 + $0x90] sm:$0xff]
    %v3486 = vld [vmem:[#allocation11 + $0x98] sm:$0xff]
    %v3487 = vld [vmem:[#allocation11 + $0xa0] sm:$0xff]
    %v3488 = vld [vmem:[#allocation11 + $0xa8] sm:$0xff]
    %v3489 = vld [vmem:[#allocation11 + $0xb0] sm:$0xff]
    %v3490 = vld [vmem:[#allocation11 + $0xb8] sm:$0xff]
    %v3491 = vld [vmem:[#allocation11 + $0xc0] sm:$0xff]
    %v3492 = vld [vmem:[#allocation11 + $0xc8] sm:$0xff]
    %v3493 = vld [vmem:[#allocation11 + $0xd0] sm:$0xff]
    %v3494 = vld [vmem:[#allocation11 + $0xd8] sm:$0xff]
    %v3495 = vld [vmem:[#allocation11 + $0xe0] sm:$0xff]
    %v3496 = vld [vmem:[#allocation11 + $0xe8] sm:$0xff]
    %v3497 = vld [vmem:[#allocation11 + $0xf0] sm:$0xff]
    %v3498 = vld [vmem:[#allocation11 + $0xf8] sm:$0xff]
    %v3499 = vld [vmem:[#allocation11 + $0x100] sm:$0xff]
    %v3500 = vld [vmem:[#allocation11 + $0x108] sm:$0xff]
    %v3501 = vld [vmem:[#allocation11 + $0x110] sm:$0xff]
    %v3502 = vld [vmem:[#allocation11 + $0x118] sm:$0xff]
    %v3503 = vld [vmem:[#allocation11 + $0x120] sm:$0xff]
    %v3504 = vld [vmem:[#allocation11 + $0x128] sm:$0xff]
    %v3505 = vld [vmem:[#allocation11 + $0x130] sm:$0xff]
    %v3506 = vld [vmem:[#allocation11 + $0x138] sm:$0xff]
    %v3507 = vld [vmem:[#allocation11 + $0x140] sm:$0xff]
    %v3508 = vld [vmem:[#allocation11 + $0x148] sm:$0xff]
    %v3509 = vld [vmem:[#allocation11 + $0x150] sm:$0xff]
    %v3510 = vld [vmem:[#allocation11 + $0x158] sm:$0xff]
    %v3511 = vld [vmem:[#allocation11 + $0x160] sm:$0xff]
    %v3512 = vld [vmem:[#allocation11 + $0x168] sm:$0xff]
    %v3513 = vld [vmem:[#allocation11 + $0x170] sm:$0xff]
    %v3514 = vld [vmem:[#allocation11 + $0x178] sm:$0xff]
    %v3515 = vld [vmem:[#allocation11 + $0x180] sm:$0xff]
    %v3516 = vld [vmem:[#allocation11 + $0x188] sm:$0xff]
    %v3517 = vld [vmem:[#allocation11 + $0x190] sm:$0xff]
    %v3518 = vld [vmem:[#allocation11 + $0x198] sm:$0xff]
    %v3519 = vld [vmem:[#allocation11 + $0x1a0] sm:$0xff]
    %v3520 = vld [vmem:[#allocation11 + $0x1a8] sm:$0xff]
    %v3521 = vld [vmem:[#allocation11 + $0x1b0] sm:$0xff]
    %v3522 = vld [vmem:[#allocation11 + $0x1b8] sm:$0xff]
    %v3523 = vld [vmem:[#allocation11 + $0x1c0] sm:$0xff]
    %v3524 = vld [vmem:[#allocation11 + $0x1c8] sm:$0xff]
    %v3525 = vld [vmem:[#allocation11 + $0x1d0] sm:$0xff]
    %v3526 = vld [vmem:[#allocation11 + $0x1d8] sm:$0xff]
    %v3527 = vld [vmem:[#allocation11 + $0x1e0] sm:$0xff]
    %v3528 = vld [vmem:[#allocation11 + $0x1e8] sm:$0xff]
    %v3529 = vld [vmem:[#allocation11 + $0x1f0] sm:$0xff]
    %v3530 = vld [vmem:[#allocation11 + $0x1f8] sm:$0xff]
    %v3531 = vld [vmem:[#allocation11 + $0x200] sm:$0xff]
    %v3532 = vld [vmem:[#allocation11 + $0x208] sm:$0xff]
    %v3533 = vld [vmem:[#allocation11 + $0x210] sm:$0xff]
    %v3534 = vld [vmem:[#allocation11 + $0x218] sm:$0xff]
    %v3535 = vld [vmem:[#allocation11 + $0x220] sm:$0xff]
    %v3536 = vld [vmem:[#allocation11 + $0x228] sm:$0xff]
    %v3537 = vld [vmem:[#allocation11 + $0x230] sm:$0xff]
    %v3538 = vld [vmem:[#allocation11 + $0x238] sm:$0xff]
    %v3539 = vld [vmem:[#allocation11 + $0x240] sm:$0xff]
    %v3540 = vld [vmem:[#allocation11 + $0x248] sm:$0xff]
    %v3541 = vld [vmem:[#allocation11 + $0x250] sm:$0xff]
    %v3542 = vld [vmem:[#allocation11 + $0x258] sm:$0xff]
    %v3543 = vld [vmem:[#allocation11 + $0x260] sm:$0xff]
    %v3544 = vld [vmem:[#allocation11 + $0x268] sm:$0xff]
    %v3545 = vld [vmem:[#allocation11 + $0x270] sm:$0xff]
    %v3546 = vld [vmem:[#allocation11 + $0x278] sm:$0xff]
    %v3547 = vld [vmem:[#allocation11 + $0x280] sm:$0xff]
    %v3548 = vld [vmem:[#allocation11 + $0x288] sm:$0xff]
    %v3549 = vld [vmem:[#allocation11 + $0x290] sm:$0xff]
    %v3550 = vld [vmem:[#allocation11 + $0x298] sm:$0xff]
    %v3551 = vld [vmem:[#allocation11 + $0x2a0] sm:$0xff]
    %v3552 = vld [vmem:[#allocation11 + $0x2a8] sm:$0xff]
    %v3553 = vld [vmem:[#allocation11 + $0x2b0] sm:$0xff]
    %v3554 = vld [vmem:[#allocation11 + $0x2b8] sm:$0xff]
    %v3555 = vld [vmem:[#allocation11 + $0x2c0] sm:$0xff]
    %v3556 = vld [vmem:[#allocation11 + $0x2c8] sm:$0xff]
    %v3557 = vld [vmem:[#allocation11 + $0x2d0] sm:$0xff]
    %v3558 = vld [vmem:[#allocation11 + $0x2d8] sm:$0xff]
    %v3559 = vld [vmem:[#allocation11 + $0x2e0] sm:$0xff]
    %v3560 = vld [vmem:[#allocation11 + $0x2e8] sm:$0xff]
    %v3561 = vld [vmem:[#allocation11 + $0x2f0] sm:$0xff]
    %v3562 = vld [vmem:[#allocation11 + $0x2f8] sm:$0xff]
    %v3563 = vld [vmem:[#allocation11 + $0x300] sm:$0xff]
    %v3564 = vld [vmem:[#allocation11 + $0x308] sm:$0xff]
    %v3565 = vld [vmem:[#allocation11 + $0x310] sm:$0xff]
    %v3566 = vld [vmem:[#allocation11 + $0x318] sm:$0xff]
    %v3567 = vld [vmem:[#allocation11 + $0x320] sm:$0xff]
    %v3568 = vld [vmem:[#allocation11 + $0x328] sm:$0xff]
    %v3569 = vld [vmem:[#allocation11 + $0x330] sm:$0xff]
    %v3570 = vld [vmem:[#allocation11 + $0x338] sm:$0xff]
    %v3571 = vld [vmem:[#allocation11 + $0x340] sm:$0xff]
    %v3572 = vld [vmem:[#allocation11 + $0x348] sm:$0xff]
    %v3573 = vld [vmem:[#allocation11 + $0x350] sm:$0xff]
    %v3574 = vld [vmem:[#allocation11 + $0x358] sm:$0xff]
    %v3575 = vld [vmem:[#allocation11 + $0x360] sm:$0xff]
    %v3576 = vld [vmem:[#allocation11 + $0x368] sm:$0xff]
    %v3577 = vld [vmem:[#allocation11 + $0x370] sm:$0xff]
    %v3578 = vld [vmem:[#allocation11 + $0x378] sm:$0xff]
    %v3579 = vld [vmem:[#allocation11 + $0x380] sm:$0xff]
    %v3580 = vld [vmem:[#allocation11 + $0x388] sm:$0xff]
    %v3581 = vld [vmem:[#allocation11 + $0x390] sm:$0xff]
    %v3582 = vld [vmem:[#allocation11 + $0x398] sm:$0xff]
    %v3583 = vld [vmem:[#allocation11 + $0x3a0] sm:$0xff]
    %v3584 = vld [vmem:[#allocation11 + $0x3a8] sm:$0xff]
    %v3585 = vld [vmem:[#allocation11 + $0x3b0] sm:$0xff]
    %v3586 = vld [vmem:[#allocation11 + $0x3b8] sm:$0xff]
    %v3587 = vld [vmem:[#allocation11 + $0x3c0] sm:$0xff]
    %v3588 = vld [vmem:[#allocation11 + $0x3c8] sm:$0xff]
    %v3589 = vld [vmem:[#allocation11 + $0x3d0] sm:$0xff]
    %v3590 = vld [vmem:[#allocation11 + $0x3d8] sm:$0xff]
    %v3591 = vld [vmem:[#allocation11 + $0x3e0] sm:$0xff]
    %v3592 = vld [vmem:[#allocation11 + $0x3e8] sm:$0xff]
    %v3593 = vld [vmem:[#allocation11 + $0x3f0] sm:$0xff]
    %v3594 = vld [vmem:[#allocation11 + $0x3f8] sm:$0xff]
    %v3595 = vld [vmem:[#allocation13 + $0x2b] sm:$0x3]
    %v3597 = vlaneseq
    %v3598 = vshrl.u32 %v3597, 7
    %v3599 = vsub.s32 0, %v3598
    %v3600 = vrot.slane %v3595, %v3599
    %v3601 = vlaneseq
    %v3602 = vshrl.u32 %v3601, 7
    %v3603 = vsub.s32 1, %v3602
    %v3604 = vrot.slane %v3595, %v3603
    %v3735 = vunpack.c.l.b16 %v3467
    %v3736 = vunpack.c.h.b16 %v3467
    %v3737 = vunpack.c.l.b16 %v3468
    %v3738 = vunpack.c.h.b16 %v3468
    %v3739 = vunpack.c.l.b16 %v3469
    %v3740 = vunpack.c.h.b16 %v3469
    %v3741 = vunpack.c.l.b16 %v3470
    %v3742 = vunpack.c.h.b16 %v3470
    %v3743 = vunpack.c.l.b16 %v3471
    %v3744 = vunpack.c.h.b16 %v3471
    %v3745 = vunpack.c.l.b16 %v3472
    %v3746 = vunpack.c.h.b16 %v3472
    %v3747 = vunpack.c.l.b16 %v3473
    %v3748 = vunpack.c.h.b16 %v3473
    %v3749 = vunpack.c.l.b16 %v3474
    %v3750 = vunpack.c.h.b16 %v3474
    %v3751 = vunpack.c.l.b16 %v3475
    %v3752 = vunpack.c.h.b16 %v3475
    %v3753 = vunpack.c.l.b16 %v3476
    %v3754 = vunpack.c.h.b16 %v3476
    %v3755 = vunpack.c.l.b16 %v3477
    %v3756 = vunpack.c.h.b16 %v3477
    %v3757 = vunpack.c.l.b16 %v3478
    %v3758 = vunpack.c.h.b16 %v3478
    %v3759 = vunpack.c.l.b16 %v3479
    %v3760 = vunpack.c.h.b16 %v3479
    %v3761 = vunpack.c.l.b16 %v3480
    %v3762 = vunpack.c.h.b16 %v3480
    %v3763 = vunpack.c.l.b16 %v3481
    %v3764 = vunpack.c.h.b16 %v3481
    %v3765 = vunpack.c.l.b16 %v3482
    %v3766 = vunpack.c.h.b16 %v3482
    %v3767 = vunpack.c.l.b16 %v3483
    %v3768 = vunpack.c.h.b16 %v3483
    %v3769 = vunpack.c.l.b16 %v3484
    %v3770 = vunpack.c.h.b16 %v3484
    %v3771 = vunpack.c.l.b16 %v3485
    %v3772 = vunpack.c.h.b16 %v3485
    %v3773 = vunpack.c.l.b16 %v3486
    %v3774 = vunpack.c.h.b16 %v3486
    %v3775 = vunpack.c.l.b16 %v3487
    %v3776 = vunpack.c.h.b16 %v3487
    %v3777 = vunpack.c.l.b16 %v3488
    %v3778 = vunpack.c.h.b16 %v3488
    %v3779 = vunpack.c.l.b16 %v3489
    %v3780 = vunpack.c.h.b16 %v3489
    %v3781 = vunpack.c.l.b16 %v3490
    %v3782 = vunpack.c.h.b16 %v3490
    %v3783 = vunpack.c.l.b16 %v3491
    %v3784 = vunpack.c.h.b16 %v3491
    %v3785 = vunpack.c.l.b16 %v3492
    %v3786 = vunpack.c.h.b16 %v3492
    %v3787 = vunpack.c.l.b16 %v3493
    %v3788 = vunpack.c.h.b16 %v3493
    %v3789 = vunpack.c.l.b16 %v3494
    %v3790 = vunpack.c.h.b16 %v3494
    %v3791 = vunpack.c.l.b16 %v3495
    %v3792 = vunpack.c.h.b16 %v3495
    %v3793 = vunpack.c.l.b16 %v3496
    %v3794 = vunpack.c.h.b16 %v3496
    %v3795 = vunpack.c.l.b16 %v3497
    %v3796 = vunpack.c.h.b16 %v3497
    %v3797 = vunpack.c.l.b16 %v3498
    %v3798 = vunpack.c.h.b16 %v3498
    %v3799 = vunpack.c.l.b16 %v3499
    %v3800 = vunpack.c.h.b16 %v3499
    %v3801 = vunpack.c.l.b16 %v3500
    %v3802 = vunpack.c.h.b16 %v3500
    %v3803 = vunpack.c.l.b16 %v3501
    %v3804 = vunpack.c.h.b16 %v3501
    %v3805 = vunpack.c.l.b16 %v3502
    %v3806 = vunpack.c.h.b16 %v3502
    %v3807 = vunpack.c.l.b16 %v3503
    %v3808 = vunpack.c.h.b16 %v3503
    %v3809 = vunpack.c.l.b16 %v3504
    %v3810 = vunpack.c.h.b16 %v3504
    %v3811 = vunpack.c.l.b16 %v3505
    %v3812 = vunpack.c.h.b16 %v3505
    %v3813 = vunpack.c.l.b16 %v3506
    %v3814 = vunpack.c.h.b16 %v3506
    %v3815 = vunpack.c.l.b16 %v3507
    %v3816 = vunpack.c.h.b16 %v3507
    %v3817 = vunpack.c.l.b16 %v3508
    %v3818 = vunpack.c.h.b16 %v3508
    %v3819 = vunpack.c.l.b16 %v3509
    %v3820 = vunpack.c.h.b16 %v3509
    %v3821 = vunpack.c.l.b16 %v3510
    %v3822 = vunpack.c.h.b16 %v3510
    %v3823 = vunpack.c.l.b16 %v3511
    %v3824 = vunpack.c.h.b16 %v3511
    %v3825 = vunpack.c.l.b16 %v3512
    %v3826 = vunpack.c.h.b16 %v3512
    %v3827 = vunpack.c.l.b16 %v3513
    %v3828 = vunpack.c.h.b16 %v3513
    %v3829 = vunpack.c.l.b16 %v3514
    %v3830 = vunpack.c.h.b16 %v3514
    %v3831 = vunpack.c.l.b16 %v3515
    %v3832 = vunpack.c.h.b16 %v3515
    %v3833 = vunpack.c.l.b16 %v3516
    %v3834 = vunpack.c.h.b16 %v3516
    %v3835 = vunpack.c.l.b16 %v3517
    %v3836 = vunpack.c.h.b16 %v3517
    %v3837 = vunpack.c.l.b16 %v3518
    %v3838 = vunpack.c.h.b16 %v3518
    %v3839 = vunpack.c.l.b16 %v3519
    %v3840 = vunpack.c.h.b16 %v3519
    %v3841 = vunpack.c.l.b16 %v3520
    %v3842 = vunpack.c.h.b16 %v3520
    %v3843 = vunpack.c.l.b16 %v3521
    %v3844 = vunpack.c.h.b16 %v3521
    %v3845 = vunpack.c.l.b16 %v3522
    %v3846 = vunpack.c.h.b16 %v3522
    %v3847 = vunpack.c.l.b16 %v3523
    %v3848 = vunpack.c.h.b16 %v3523
    %v3849 = vunpack.c.l.b16 %v3524
    %v3850 = vunpack.c.h.b16 %v3524
    %v3851 = vunpack.c.l.b16 %v3525
    %v3852 = vunpack.c.h.b16 %v3525
    %v3853 = vunpack.c.l.b16 %v3526
    %v3854 = vunpack.c.h.b16 %v3526
    %v3855 = vunpack.c.l.b16 %v3527
    %v3856 = vunpack.c.h.b16 %v3527
    %v3857 = vunpack.c.l.b16 %v3528
    %v3858 = vunpack.c.h.b16 %v3528
    %v3859 = vunpack.c.l.b16 %v3529
    %v3860 = vunpack.c.h.b16 %v3529
    %v3861 = vunpack.c.l.b16 %v3530
    %v3862 = vunpack.c.h.b16 %v3530
    %v3863 = vunpack.c.l.b16 %v3531
    %v3864 = vunpack.c.h.b16 %v3531
    %v3865 = vunpack.c.l.b16 %v3532
    %v3866 = vunpack.c.h.b16 %v3532
    %v3867 = vunpack.c.l.b16 %v3533
    %v3868 = vunpack.c.h.b16 %v3533
    %v3869 = vunpack.c.l.b16 %v3534
    %v3870 = vunpack.c.h.b16 %v3534
    %v3871 = vunpack.c.l.b16 %v3535
    %v3872 = vunpack.c.h.b16 %v3535
    %v3873 = vunpack.c.l.b16 %v3536
    %v3874 = vunpack.c.h.b16 %v3536
    %v3875 = vunpack.c.l.b16 %v3537
    %v3876 = vunpack.c.h.b16 %v3537
    %v3877 = vunpack.c.l.b16 %v3538
    %v3878 = vunpack.c.h.b16 %v3538
    %v3879 = vunpack.c.l.b16 %v3539
    %v3880 = vunpack.c.h.b16 %v3539
    %v3881 = vunpack.c.l.b16 %v3540
    %v3882 = vunpack.c.h.b16 %v3540
    %v3883 = vunpack.c.l.b16 %v3541
    %v3884 = vunpack.c.h.b16 %v3541
    %v3885 = vunpack.c.l.b16 %v3542
    %v3886 = vunpack.c.h.b16 %v3542
    %v3887 = vunpack.c.l.b16 %v3543
    %v3888 = vunpack.c.h.b16 %v3543
    %v3889 = vunpack.c.l.b16 %v3544
    %v3890 = vunpack.c.h.b16 %v3544
    %v3891 = vunpack.c.l.b16 %v3545
    %v3892 = vunpack.c.h.b16 %v3545
    %v3893 = vunpack.c.l.b16 %v3546
    %v3894 = vunpack.c.h.b16 %v3546
    %v3895 = vunpack.c.l.b16 %v3547
    %v3896 = vunpack.c.h.b16 %v3547
    %v3897 = vunpack.c.l.b16 %v3548
    %v3898 = vunpack.c.h.b16 %v3548
    %v3899 = vunpack.c.l.b16 %v3549
    %v3900 = vunpack.c.h.b16 %v3549
    %v3901 = vunpack.c.l.b16 %v3550
    %v3902 = vunpack.c.h.b16 %v3550
    %v3903 = vunpack.c.l.b16 %v3551
    %v3904 = vunpack.c.h.b16 %v3551
    %v3905 = vunpack.c.l.b16 %v3552
    %v3906 = vunpack.c.h.b16 %v3552
    %v3907 = vunpack.c.l.b16 %v3553
    %v3908 = vunpack.c.h.b16 %v3553
    %v3909 = vunpack.c.l.b16 %v3554
    %v3910 = vunpack.c.h.b16 %v3554
    %v3911 = vunpack.c.l.b16 %v3555
    %v3912 = vunpack.c.h.b16 %v3555
    %v3913 = vunpack.c.l.b16 %v3556
    %v3914 = vunpack.c.h.b16 %v3556
    %v3915 = vunpack.c.l.b16 %v3557
    %v3916 = vunpack.c.h.b16 %v3557
    %v3917 = vunpack.c.l.b16 %v3558
    %v3918 = vunpack.c.h.b16 %v3558
    %v3919 = vunpack.c.l.b16 %v3559
    %v3920 = vunpack.c.h.b16 %v3559
    %v3921 = vunpack.c.l.b16 %v3560
    %v3922 = vunpack.c.h.b16 %v3560
    %v3923 = vunpack.c.l.b16 %v3561
    %v3924 = vunpack.c.h.b16 %v3561
    %v3925 = vunpack.c.l.b16 %v3562
    %v3926 = vunpack.c.h.b16 %v3562
    %v3927 = vunpack.c.l.b16 %v3563
    %v3928 = vunpack.c.h.b16 %v3563
    %v3929 = vunpack.c.l.b16 %v3564
    %v3930 = vunpack.c.h.b16 %v3564
    %v3931 = vunpack.c.l.b16 %v3565
    %v3932 = vunpack.c.h.b16 %v3565
    %v3933 = vunpack.c.l.b16 %v3566
    %v3934 = vunpack.c.h.b16 %v3566
    %v3935 = vunpack.c.l.b16 %v3567
    %v3936 = vunpack.c.h.b16 %v3567
    %v3937 = vunpack.c.l.b16 %v3568
    %v3938 = vunpack.c.h.b16 %v3568
    %v3939 = vunpack.c.l.b16 %v3569
    %v3940 = vunpack.c.h.b16 %v3569
    %v3941 = vunpack.c.l.b16 %v3570
    %v3942 = vunpack.c.h.b16 %v3570
    %v3943 = vunpack.c.l.b16 %v3571
    %v3944 = vunpack.c.h.b16 %v3571
    %v3945 = vunpack.c.l.b16 %v3572
    %v3946 = vunpack.c.h.b16 %v3572
    %v3947 = vunpack.c.l.b16 %v3573
    %v3948 = vunpack.c.h.b16 %v3573
    %v3949 = vunpack.c.l.b16 %v3574
    %v3950 = vunpack.c.h.b16 %v3574
    %v3951 = vunpack.c.l.b16 %v3575
    %v3952 = vunpack.c.h.b16 %v3575
    %v3953 = vunpack.c.l.b16 %v3576
    %v3954 = vunpack.c.h.b16 %v3576
    %v3955 = vunpack.c.l.b16 %v3577
    %v3956 = vunpack.c.h.b16 %v3577
    %v3957 = vunpack.c.l.b16 %v3578
    %v3958 = vunpack.c.h.b16 %v3578
    %v3959 = vunpack.c.l.b16 %v3579
    %v3960 = vunpack.c.h.b16 %v3579
    %v3961 = vunpack.c.l.b16 %v3580
    %v3962 = vunpack.c.h.b16 %v3580
    %v3963 = vunpack.c.l.b16 %v3581
    %v3964 = vunpack.c.h.b16 %v3581
    %v3965 = vunpack.c.l.b16 %v3582
    %v3966 = vunpack.c.h.b16 %v3582
    %v3967 = vunpack.c.l.b16 %v3583
    %v3968 = vunpack.c.h.b16 %v3583
    %v3969 = vunpack.c.l.b16 %v3584
    %v3970 = vunpack.c.h.b16 %v3584
    %v3971 = vunpack.c.l.b16 %v3585
    %v3972 = vunpack.c.h.b16 %v3585
    %v3973 = vunpack.c.l.b16 %v3586
    %v3974 = vunpack.c.h.b16 %v3586
    %v3975 = vunpack.c.l.b16 %v3587
    %v3976 = vunpack.c.h.b16 %v3587
    %v3977 = vunpack.c.l.b16 %v3588
    %v3978 = vunpack.c.h.b16 %v3588
    %v3979 = vunpack.c.l.b16 %v3589
    %v3980 = vunpack.c.h.b16 %v3589
    %v3981 = vunpack.c.l.b16 %v3590
    %v3982 = vunpack.c.h.b16 %v3590
    %v3983 = vunpack.c.l.b16 %v3591
    %v3984 = vunpack.c.h.b16 %v3591
    %v3985 = vunpack.c.l.b16 %v3592
    %v3986 = vunpack.c.h.b16 %v3592
    %v3987 = vunpack.c.l.b16 %v3593
    %v3988 = vunpack.c.h.b16 %v3593
    %v3989 = vunpack.c.l.b16 %v3594
    %v3990 = vunpack.c.h.b16 %v3594
    %v3991 = vpack.c.b16 %v3737, %v3735
    %v3992 = vpack.c.b16 %v3738, %v3736
    %v3993 = vpack.c.b16 %v3741, %v3739
    %v3994 = vpack.c.b16 %v3742, %v3740
    %v3995 = vpack.c.b16 %v3745, %v3743
    %v3996 = vpack.c.b16 %v3746, %v3744
    %v3997 = vpack.c.b16 %v3749, %v3747
    %v3998 = vpack.c.b16 %v3750, %v3748
    %v3999 = vpack.c.b16 %v3753, %v3751
    %v4000 = vpack.c.b16 %v3754, %v3752
    %v4001 = vpack.c.b16 %v3757, %v3755
    %v4002 = vpack.c.b16 %v3758, %v3756
    %v4003 = vpack.c.b16 %v3761, %v3759
    %v4004 = vpack.c.b16 %v3762, %v3760
    %v4005 = vpack.c.b16 %v3765, %v3763
    %v4006 = vpack.c.b16 %v3766, %v3764
    %v4007 = vpack.c.b16 %v3769, %v3767
    %v4008 = vpack.c.b16 %v3770, %v3768
    %v4009 = vpack.c.b16 %v3773, %v3771
    %v4010 = vpack.c.b16 %v3774, %v3772
    %v4011 = vpack.c.b16 %v3777, %v3775
    %v4012 = vpack.c.b16 %v3778, %v3776
    %v4013 = vpack.c.b16 %v3781, %v3779
    %v4014 = vpack.c.b16 %v3782, %v3780
    %v4015 = vpack.c.b16 %v3785, %v3783
    %v4016 = vpack.c.b16 %v3786, %v3784
    %v4017 = vpack.c.b16 %v3789, %v3787
    %v4018 = vpack.c.b16 %v3790, %v3788
    %v4019 = vpack.c.b16 %v3793, %v3791
    %v4020 = vpack.c.b16 %v3794, %v3792
    %v4021 = vpack.c.b16 %v3797, %v3795
    %v4022 = vpack.c.b16 %v3798, %v3796
    %v4023 = vpack.c.b16 %v3801, %v3799
    %v4024 = vpack.c.b16 %v3802, %v3800
    %v4025 = vpack.c.b16 %v3805, %v3803
    %v4026 = vpack.c.b16 %v3806, %v3804
    %v4027 = vpack.c.b16 %v3809, %v3807
    %v4028 = vpack.c.b16 %v3810, %v3808
    %v4029 = vpack.c.b16 %v3813, %v3811
    %v4030 = vpack.c.b16 %v3814, %v3812
    %v4031 = vpack.c.b16 %v3817, %v3815
    %v4032 = vpack.c.b16 %v3818, %v3816
    %v4033 = vpack.c.b16 %v3821, %v3819
    %v4034 = vpack.c.b16 %v3822, %v3820
    %v4035 = vpack.c.b16 %v3825, %v3823
    %v4036 = vpack.c.b16 %v3826, %v3824
    %v4037 = vpack.c.b16 %v3829, %v3827
    %v4038 = vpack.c.b16 %v3830, %v3828
    %v4039 = vpack.c.b16 %v3833, %v3831
    %v4040 = vpack.c.b16 %v3834, %v3832
    %v4041 = vpack.c.b16 %v3837, %v3835
    %v4042 = vpack.c.b16 %v3838, %v3836
    %v4043 = vpack.c.b16 %v3841, %v3839
    %v4044 = vpack.c.b16 %v3842, %v3840
    %v4045 = vpack.c.b16 %v3845, %v3843
    %v4046 = vpack.c.b16 %v3846, %v3844
    %v4047 = vpack.c.b16 %v3849, %v3847
    %v4048 = vpack.c.b16 %v3850, %v3848
    %v4049 = vpack.c.b16 %v3853, %v3851
    %v4050 = vpack.c.b16 %v3854, %v3852
    %v4051 = vpack.c.b16 %v3857, %v3855
    %v4052 = vpack.c.b16 %v3858, %v3856
    %v4053 = vpack.c.b16 %v3861, %v3859
    %v4054 = vpack.c.b16 %v3862, %v3860
    %v4055 = vpack.c.b16 %v3865, %v3863
    %v4056 = vpack.c.b16 %v3866, %v3864
    %v4057 = vpack.c.b16 %v3869, %v3867
    %v4058 = vpack.c.b16 %v3870, %v3868
    %v4059 = vpack.c.b16 %v3873, %v3871
    %v4060 = vpack.c.b16 %v3874, %v3872
    %v4061 = vpack.c.b16 %v3877, %v3875
    %v4062 = vpack.c.b16 %v3878, %v3876
    %v4063 = vpack.c.b16 %v3881, %v3879
    %v4064 = vpack.c.b16 %v3882, %v3880
    %v4065 = vpack.c.b16 %v3885, %v3883
    %v4066 = vpack.c.b16 %v3886, %v3884
    %v4067 = vpack.c.b16 %v3889, %v3887
    %v4068 = vpack.c.b16 %v3890, %v3888
    %v4069 = vpack.c.b16 %v3893, %v3891
    %v4070 = vpack.c.b16 %v3894, %v3892
    %v4071 = vpack.c.b16 %v3897, %v3895
    %v4072 = vpack.c.b16 %v3898, %v3896
    %v4073 = vpack.c.b16 %v3901, %v3899
    %v4074 = vpack.c.b16 %v3902, %v3900
    %v4075 = vpack.c.b16 %v3905, %v3903
    %v4076 = vpack.c.b16 %v3906, %v3904
    %v4077 = vpack.c.b16 %v3909, %v3907
    %v4078 = vpack.c.b16 %v3910, %v3908
    %v4079 = vpack.c.b16 %v3913, %v3911
    %v4080 = vpack.c.b16 %v3914, %v3912
    %v4081 = vpack.c.b16 %v3917, %v3915
    %v4082 = vpack.c.b16 %v3918, %v3916
    %v4083 = vpack.c.b16 %v3921, %v3919
    %v4084 = vpack.c.b16 %v3922, %v3920
    %v4085 = vpack.c.b16 %v3925, %v3923
    %v4086 = vpack.c.b16 %v3926, %v3924
    %v4087 = vpack.c.b16 %v3929, %v3927
    %v4088 = vpack.c.b16 %v3930, %v3928
    %v4089 = vpack.c.b16 %v3933, %v3931
    %v4090 = vpack.c.b16 %v3934, %v3932
    %v4091 = vpack.c.b16 %v3937, %v3935
    %v4092 = vpack.c.b16 %v3938, %v3936
    %v4093 = vpack.c.b16 %v3941, %v3939
    %v4094 = vpack.c.b16 %v3942, %v3940
    %v4095 = vpack.c.b16 %v3945, %v3943
    %v4096 = vpack.c.b16 %v3946, %v3944
    %v4097 = vpack.c.b16 %v3949, %v3947
    %v4098 = vpack.c.b16 %v3950, %v3948
    %v4099 = vpack.c.b16 %v3953, %v3951
    %v4100 = vpack.c.b16 %v3954, %v3952
    %v4101 = vpack.c.b16 %v3957, %v3955
    %v4102 = vpack.c.b16 %v3958, %v3956
    %v4103 = vpack.c.b16 %v3961, %v3959
    %v4104 = vpack.c.b16 %v3962, %v3960
    %v4105 = vpack.c.b16 %v3965, %v3963
    %v4106 = vpack.c.b16 %v3966, %v3964
    %v4107 = vpack.c.b16 %v3969, %v3967
    %v4108 = vpack.c.b16 %v3970, %v3968
    %v4109 = vpack.c.b16 %v3973, %v3971
    %v4110 = vpack.c.b16 %v3974, %v3972
    %v4111 = vpack.c.b16 %v3977, %v3975
    %v4112 = vpack.c.b16 %v3978, %v3976
    %v4113 = vpack.c.b16 %v3981, %v3979
    %v4114 = vpack.c.b16 %v3982, %v3980
    %v4115 = vpack.c.b16 %v3985, %v3983
    %v4116 = vpack.c.b16 %v3986, %v3984
    %v4117 = vpack.c.b16 %v3989, %v3987
    %v4118 = vpack.c.b16 %v3990, %v3988
    %4247 = vmatprep.subr.bf16.mxu0 %v3992
    %4248 = vmatpush1.bf16.msra.mxu0 %v3991
    %4249 = vmatprep.subr.bf16.mxu0 %v3994
    %4250 = vmatpush1.bf16.msra.mxu0 %v3993
    %4251 = vmatprep.subr.bf16.mxu0 %v3996
    %4252 = vmatpush1.bf16.msra.mxu0 %v3995
    %4253 = vmatprep.subr.bf16.mxu0 %v3998
    %4254 = vmatpush1.bf16.msra.mxu0 %v3997
    %4255 = vmatprep.subr.bf16.mxu0 %v4000
    %4256 = vmatpush1.bf16.msra.mxu0 %v3999
    %4257 = vmatprep.subr.bf16.mxu0 %v4002
    %4258 = vmatpush1.bf16.msra.mxu0 %v4001
    %4259 = vmatprep.subr.bf16.mxu0 %v4004
    %4260 = vmatpush1.bf16.msra.mxu0 %v4003
    %4261 = vmatprep.subr.bf16.mxu0 %v4006
    %4262 = vmatpush1.bf16.msra.mxu0 %v4005
    %4263 = vmatprep.subr.bf16.mxu0 %v4008
    %4264 = vmatpush1.bf16.msra.mxu0 %v4007
    %4265 = vmatprep.subr.bf16.mxu0 %v4010
    %4266 = vmatpush1.bf16.msra.mxu0 %v4009
    %4267 = vmatprep.subr.bf16.mxu0 %v4012
    %4268 = vmatpush1.bf16.msra.mxu0 %v4011
    %4269 = vmatprep.subr.bf16.mxu0 %v4014
    %4270 = vmatpush1.bf16.msra.mxu0 %v4013
    %4271 = vmatprep.subr.bf16.mxu0 %v4016
    %4272 = vmatpush1.bf16.msra.mxu0 %v4015
    %4273 = vmatprep.subr.bf16.mxu0 %v4018
    %4274 = vmatpush1.bf16.msra.mxu0 %v4017
    %4275 = vmatprep.subr.bf16.mxu0 %v4020
    %4276 = vmatpush1.bf16.msra.mxu0 %v4019
    %4277 = vmatprep.subr.bf16.mxu0 %v4022
    %4278 = vmatpush1.bf16.msra.mxu0 %v4021
    %4279 = vmatprep.mubr.bf16.mxu0 %v3460
    %4280 = vmatmul.mubr.bf16.gmra.mrb[0].mxu0 %v3459
    %v4281 = vpop.f32.mrb[0].mxu0
    %v4282 = vadd.f32 %v3600, %v4281
    %v4283 = vpop.f32.mrb[0].mxu0
    %v4284 = vadd.f32 %v3604, %v4283
    %v4285 = vpop.f32.mrb[0].mxu0
    %v4286 = vpop.f32.mrb[0].mxu0
    %4287 = vdwg.mxu0
    %4288 = vmatprep.subr.bf16.mxu0 %v4024
    %4289 = vmatpush1.bf16.msra.mxu0 %v4023
    %4290 = vmatprep.subr.bf16.mxu0 %v4026
    %4291 = vmatpush1.bf16.msra.mxu0 %v4025
    %4292 = vmatprep.subr.bf16.mxu0 %v4028
    %4293 = vmatpush1.bf16.msra.mxu0 %v4027
    %4294 = vmatprep.subr.bf16.mxu0 %v4030
    %4295 = vmatpush1.bf16.msra.mxu0 %v4029
    %4296 = vmatprep.subr.bf16.mxu0 %v4032
    %4297 = vmatpush1.bf16.msra.mxu0 %v4031
    %4298 = vmatprep.subr.bf16.mxu0 %v4034
    %4299 = vmatpush1.bf16.msra.mxu0 %v4033
    %4300 = vmatprep.subr.bf16.mxu0 %v4036
    %4301 = vmatpush1.bf16.msra.mxu0 %v4035
    %4302 = vmatprep.subr.bf16.mxu0 %v4038
    %4303 = vmatpush1.bf16.msra.mxu0 %v4037
    %4304 = vmatprep.subr.bf16.mxu0 %v4040
    %4305 = vmatpush1.bf16.msra.mxu0 %v4039
    %4306 = vmatprep.subr.bf16.mxu0 %v4042
    %4307 = vmatpush1.bf16.msra.mxu0 %v4041
    %4308 = vmatprep.subr.bf16.mxu0 %v4044
    %4309 = vmatpush1.bf16.msra.mxu0 %v4043
    %4310 = vmatprep.subr.bf16.mxu0 %v4046
    %4311 = vmatpush1.bf16.msra.mxu0 %v4045
    %4312 = vmatprep.subr.bf16.mxu0 %v4048
    %4313 = vmatpush1.bf16.msra.mxu0 %v4047
    %4314 = vmatprep.subr.bf16.mxu0 %v4050
    %4315 = vmatpush1.bf16.msra.mxu0 %v4049
    %4316 = vmatprep.subr.bf16.mxu0 %v4052
    %4317 = vmatpush1.bf16.msra.mxu0 %v4051
    %4318 = vmatprep.subr.bf16.mxu0 %v4054
    %4319 = vmatpush1.bf16.msra.mxu0 %v4053
    %4320 = vmatprep.mubr.bf16.mxu0 %v3462
    %4321 = vmatmul.mubr.bf16.gmra.mrb[0].mxu0 %v3461
    %v4322 = vpop.f32.mrb[0].mxu0
    %v4323 = vadd.f32 %v4282, %v4322
    %v4324 = vpop.f32.mrb[0].mxu0
    %v4325 = vadd.f32 %v4284, %v4324
    %v4326 = vpop.f32.mrb[0].mxu0
    %v4327 = vpop.f32.mrb[0].mxu0
    %4328 = vdwg.mxu0
    %4329 = vmatprep.subr.bf16.mxu0 %v4056
    %4330 = vmatpush1.bf16.msra.mxu0 %v4055
    %4331 = vmatprep.subr.bf16.mxu0 %v4058
    %4332 = vmatpush1.bf16.msra.mxu0 %v4057
    %4333 = vmatprep.subr.bf16.mxu0 %v4060
    %4334 = vmatpush1.bf16.msra.mxu0 %v4059
    %4335 = vmatprep.subr.bf16.mxu0 %v4062
    %4336 = vmatpush1.bf16.msra.mxu0 %v4061
    %4337 = vmatprep.subr.bf16.mxu0 %v4064
    %4338 = vmatpush1.bf16.msra.mxu0 %v4063
    %4339 = vmatprep.subr.bf16.mxu0 %v4066
    %4340 = vmatpush1.bf16.msra.mxu0 %v4065
    %4341 = vmatprep.subr.bf16.mxu0 %v4068
    %4342 = vmatpush1.bf16.msra.mxu0 %v4067
    %4343 = vmatprep.subr.bf16.mxu0 %v4070
    %4344 = vmatpush1.bf16.msra.mxu0 %v4069
    %4345 = vmatprep.subr.bf16.mxu0 %v4072
    %4346 = vmatpush1.bf16.msra.mxu0 %v4071
    %4347 = vmatprep.subr.bf16.mxu0 %v4074
    %4348 = vmatpush1.bf16.msra.mxu0 %v4073
    %4349 = vmatprep.subr.bf16.mxu0 %v4076
    %4350 = vmatpush1.bf16.msra.mxu0 %v4075
    %4351 = vmatprep.subr.bf16.mxu0 %v4078
    %4352 = vmatpush1.bf16.msra.mxu0 %v4077
    %4353 = vmatprep.subr.bf16.mxu0 %v4080
    %4354 = vmatpush1.bf16.msra.mxu0 %v4079
    %4355 = vmatprep.subr.bf16.mxu0 %v4082
    %4356 = vmatpush1.bf16.msra.mxu0 %v4081
    %4357 = vmatprep.subr.bf16.mxu0 %v4084
    %4358 = vmatpush1.bf16.msra.mxu0 %v4083
    %4359 = vmatprep.subr.bf16.mxu0 %v4086
    %4360 = vmatpush1.bf16.msra.mxu0 %v4085
    %4361 = vmatprep.mubr.bf16.mxu0 %v3464
    %4362 = vmatmul.mubr.bf16.gmra.mrb[0].mxu0 %v3463
    %v4363 = vpop.f32.mrb[0].mxu0
    %v4364 = vadd.f32 %v4323, %v4363
    %v4365 = vpop.f32.mrb[0].mxu0
    %v4366 = vadd.f32 %v4325, %v4365
    %v4367 = vpop.f32.mrb[0].mxu0
    %v4368 = vpop.f32.mrb[0].mxu0
    %4369 = vdwg.mxu0
    %4370 = vmatprep.subr.bf16.mxu0 %v4088
    %4371 = vmatpush1.bf16.msra.mxu0 %v4087
    %4372 = vmatprep.subr.bf16.mxu0 %v4090
    %4373 = vmatpush1.bf16.msra.mxu0 %v4089
    %4374 = vmatprep.subr.bf16.mxu0 %v4092
    %4375 = vmatpush1.bf16.msra.mxu0 %v4091
    %4376 = vmatprep.subr.bf16.mxu0 %v4094
    %4377 = vmatpush1.bf16.msra.mxu0 %v4093
    %4378 = vmatprep.subr.bf16.mxu0 %v4096
    %4379 = vmatpush1.bf16.msra.mxu0 %v4095
    %4380 = vmatprep.subr.bf16.mxu0 %v4098
    %4381 = vmatpush1.bf16.msra.mxu0 %v4097
    %4382 = vmatprep.subr.bf16.mxu0 %v4100
    %4383 = vmatpush1.bf16.msra.mxu0 %v4099
    %4384 = vmatprep.subr.bf16.mxu0 %v4102
    %4385 = vmatpush1.bf16.msra.mxu0 %v4101
    %4386 = vmatprep.subr.bf16.mxu0 %v4104
    %4387 = vmatpush1.bf16.msra.mxu0 %v4103
    %4388 = vmatprep.subr.bf16.mxu0 %v4106
    %4389 = vmatpush1.bf16.msra.mxu0 %v4105
    %4390 = vmatprep.subr.bf16.mxu0 %v4108
    %4391 = vmatpush1.bf16.msra.mxu0 %v4107
    %4392 = vmatprep.subr.bf16.mxu0 %v4110
    %4393 = vmatpush1.bf16.msra.mxu0 %v4109
    %4394 = vmatprep.subr.bf16.mxu0 %v4112
    %4395 = vmatpush1.bf16.msra.mxu0 %v4111
    %4396 = vmatprep.subr.bf16.mxu0 %v4114
    %4397 = vmatpush1.bf16.msra.mxu0 %v4113
    %4398 = vmatprep.subr.bf16.mxu0 %v4116
    %4399 = vmatpush1.bf16.msra.mxu0 %v4115
    %4400 = vmatprep.subr.bf16.mxu0 %v4118
    %4401 = vmatpush1.bf16.msra.mxu0 %v4117
    %4402 = vmatprep.mubr.bf16.mxu0 %v3466
    %4403 = vmatmul.mubr.bf16.gmra.mrb[0].mxu0 %v3465
    %v4404 = vpop.f32.mrb[0].mxu0
    %v4405 = vadd.f32 %v4364, %v4404
    %v4406 = vpop.f32.mrb[0].mxu0
    %v4407 = vadd.f32 %v4366, %v4406
    %v4408 = vpop.f32.mrb[0].mxu0
    %v4409 = vpop.f32.mrb[0].mxu0
    %4410 = vdwg.mxu0
    %v4411 = vtanh.pop %v4405
    %v4412 = vtanh.pop %v4407
    %4413 = vst [vmem:[#allocation14] sm:$0xff] %v4411
    %4414 = vst [vmem:[#allocation14 + $0x8] sm:$0xff] %v4412
    // Predicated region
    $region58: #{tpu_custom_call.1} parent=1 // pred_check
      _
    $region59: #{tpu_custom_call.1} parent=1 // pred_check_branch
      %4416 = sbr.rel (0) target = $region61
    $region60: #{tpu_custom_call.1} parent=1 // pred_region
      %s4418 = ssub.s32 256, 256
      %4419 = vsyncadd [#allocation4], %s4418
      %s4421 = sshll.u32 [#allocation14], 4
      %s4422 = int_to_ptr.vmem [resolvable:$true] %s4421
      %4424 = dma.vmem_to_hbm [thread:$0]  %s4422, 256, %s7, [#allocation4]
    $region61: #{tpu_custom_call.1} parent=1 // pred_fallthru
      _
    // Predicated region
    $region62: #{tpu_custom_call.1} parent=1 // pred_check
      _
    $region63: #{tpu_custom_call.1} parent=1 // pred_check_branch
      %4426 = sbr.rel (0) target = $region65
    $region64: #{tpu_custom_call.1} parent=1 // pred_region
      %4427 = dma.done [#allocation4], 256
    $region65: #{tpu_custom_call.1} parent=1 // pred_fallthru
      _
    %4428 = vsyncpa [#allocation3], 1
    %4429 = vsyncpa [#allocation6], 1
    %4430 = vsyncpa [#allocation9], 1
    %4431 = vsyncpa [#allocation12], 1
    %4432 = vsyncpa [#allocation4], 1

</llo_original>
